<compile_context>
chip_gen: v7x
topology: tpu7x:2x2x1
jax: 0.10.0
libtpu: 0.0.40
codegen_flags: <defaults>
</compile_context>

<pallas_src>
import math
import numpy as np
import jax
import jax.numpy as jnp
from jax.experimental import pallas as pl
from jax.experimental.pallas import tpu as pltpu  # noqa: F401  (TPU backend)

INPUT_DIM = 10
HIDDEN_DIM = 8
N_QUBITS = 4
BATCH = 5
SEQ_LEN = 7
DIM = 2 ** N_QUBITS  # 16
PI = float(np.pi)


# ---------------------------------------------------------------------------
# Host-side (numpy) construction of the input-independent part of the circuit.
# ---------------------------------------------------------------------------
def _ry(t):
    c, s = math.cos(t / 2.0), math.sin(t / 2.0)
    return np.array([[c, -s], [s, c]], dtype=np.complex128)


def _rz(a):
    return np.array([[np.exp(-1j * a / 2.0), 0.0],
                     [0.0, np.exp(1j * a / 2.0)]], dtype=np.complex128)


def _rot(phi, theta, omega):
    # qml.Rot(phi, theta, omega) = RZ(omega) RY(theta) RZ(phi)
    return _rz(omega) @ _ry(theta) @ _rz(phi)


def _kron_list(ops):
    out = ops[0]
    for o in ops[1:]:
        out = np.kron(out, o)
    return out


def _single(gate, wire):
    ops = [np.eye(2, dtype=np.complex128)] * N_QUBITS
    ops[wire] = gate
    return _kron_list(ops)


def _cnot(c, t):
    P0 = np.array([[1, 0], [0, 0]], dtype=np.complex128)
    P1 = np.array([[0, 0], [0, 1]], dtype=np.complex128)
    X = np.array([[0, 1], [1, 0]], dtype=np.complex128)
    I = np.eye(2, dtype=np.complex128)
    ops0 = [I] * N_QUBITS
    ops0[c] = P0
    ops1 = [I] * N_QUBITS
    ops1[c] = P1
    ops1[t] = X
    return _kron_list(ops0) + _kron_list(ops1)


def build_fixed_unitary(entangle_weights, gate_weights):
    """Everything after AngleEmbedding, composed into one 16x16 unitary."""
    gates = []
    # StronglyEntanglingLayers, 1 layer: Rot on each wire, then ring CNOTs
    for i in range(N_QUBITS):
        phi, theta, omega = (float(entangle_weights[0, i, 0]),
                             float(entangle_weights[0, i, 1]),
                             float(entangle_weights[0, i, 2]))
        gates.append(_single(_rot(phi, theta, omega), i))
    for i in range(N_QUBITS):
        gates.append(_cnot(i, (i + 1) % N_QUBITS))
    # per-wire RY(gate_weights[i])
    for i in range(N_QUBITS):
        gates.append(_single(_ry(float(gate_weights[i])), i))
    # final CNOT chain
    gates.append(_cnot(0, 1))
    gates.append(_cnot(1, 2))
    gates.append(_cnot(2, 3))
    U = np.eye(DIM, dtype=np.complex128)
    for G in gates:           # applied in order -> U = G_n ... G_1
        U = G @ U
    return U


def build_quantum_tables(entangle_weights, gate_weights):
    """Fixed unitary (with RX phases folded in) + Pauli-Z sign table."""
    U = build_fixed_unitary(entangle_weights, gate_weights)
    # phase of the RX product state on basis index j: (-i)^popcount(j)
    phase = np.array([(-1j) ** bin(j).count("1") for j in range(DIM)],
                     dtype=np.complex128)
    # phi_row = m_row @ (U @ diag(phase))^T, with m real (magnitudes only)
    UpT = (U * phase[None, :]).T                                  # (16, 16)
    u_cat = np.concatenate([UpT.real, UpT.imag], axis=1).astype(np.float32)  # (16, 32)
    # Z[j, k] = <j| Z_k |j>  (wire 0 = most-significant bit, PennyLane order)
    Z = np.array([[1.0 - 2.0 * ((j >> (N_QUBITS - 1 - k)) & 1)
                   for k in range(N_QUBITS)] for j in range(DIM)],
                 dtype=np.float32)                                # (16, 4)
    return U, u_cat, Z


# ---------------------------------------------------------------------------
# Pallas kernel: ONE invocation runs the whole T-step recurrence.
# ---------------------------------------------------------------------------
def _qlstm_seq_kernel(x2_ref, h0_ref, c0_ref, wx_ref, wh_ref, b_ref,
                      ucat_ref, z_ref, h_out_ref, c_out_ref):
    T, B, _ = h_out_ref.shape

    # ---- hoisted, timestep-invariant work (off the serial h/c chain) ----
    # input projection for every timestep in a single MXU push: (T*B, 4)
    xproj = (jnp.dot(x2_ref[...], wx_ref[...],
                     preferred_element_type=jnp.float32) + b_ref[...])
    # constant per-qubit basis-bit masks, built once and reused every step
    lane = jax.lax.broadcasted_iota(jnp.int32, (1, DIM), 1)
    masks = [((lane >> (N_QUBITS - 1 - i)) & 1).astype(jnp.float32)
             for i in range(N_QUBITS)]                            # 4 x (1, 16)
    wh = wh_ref[...]
    ucat = ucat_ref[...]
    z = z_ref[...]

    # ---- fully-unrolled recurrence; h/c carried as loop values ----
    h = h0_ref[...]                                               # (B, H)
    c = c0_ref[...]
    for t in range(T):
        lin = xproj[t * B:(t + 1) * B, :] + jnp.dot(
            h, wh, preferred_element_type=jnp.float32)            # (B, 4)
        half = (0.5 * PI) * jnp.tanh(lin)                         # half-angles
        cth = jnp.cos(half)
        dth = jnp.sin(half) - cth

        # |amplitude| of the RX product state over the 16 basis states
        # (phase already folded into the unitary): product of FMA-style terms
        m = cth[:, 0:1] + dth[:, 0:1] * masks[0]
        for i in range(1, N_QUBITS):
            m = m * (cth[:, i:i + 1] + dth[:, i:i + 1] * masks[i])  # (B, 16)

        # fixed part of the circuit: one matmul against [Re(U'^T) | Im(U'^T)]
        phi = jnp.dot(m, ucat, preferred_element_type=jnp.float32)   # (B, 32)
        probs = phi[:, :DIM] ** 2 + phi[:, DIM:] ** 2                # (B, 16)
        q = jnp.dot(probs, z, preferred_element_type=jnp.float32)    # (B, 4)

        sig = jax.nn.sigmoid(q)                  # fused i/f/o gates
        g_g = jnp.tanh(q[:, 3:4])
        c = sig[:, 1:2] * c + sig[:, 0:1] * g_g                   # (B, H)
        h = sig[:, 2:3] * jnp.tanh(c)

        h_out_ref[t] = h
        c_out_ref[t] = c


@jax.jit
def qlstm_forward_seq(x_seq, h0, c0, wx, wh, b, u_cat, z):
    """Run the QLSTM cell over a whole sequence inside one pallas_call."""
    T, B, _ = x_seq.shape
    H = h0.shape[1]
    x2 = x_seq.reshape(T * B, INPUT_DIM)          # flattened so x@Wx is 1 matmul
    h_seq, c_seq = pl.pallas_call(
        _qlstm_seq_kernel,
        out_shape=(jax.ShapeDtypeStruct((T, B, H), jnp.float32),
                   jax.ShapeDtypeStruct((T, B, H), jnp.float32)),
    )(x2, h0, c0, wx, wh, b, u_cat, z)
    return h_seq, c_seq


def qlstm_cell(x, h_prev, c_prev, wx, wh, b, u_cat, z):
    """Single-timestep forward, matching QLSTMCell.forward."""
    h_seq, c_seq = qlstm_forward_seq(x[None], h_prev, c_prev,
                                     wx, wh, b, u_cat, z)
    return h_seq[0], c_seq[0]


# ---------------------------------------------------------------------------
# Pure numpy reference (full state-vector simulation) for a sanity check
# ---------------------------------------------------------------------------
def reference_step(x, h, c, W, b, U):
    combined = np.concatenate([x, h], axis=1)
    lin = combined @ W.T + b
    q_in = np.tanh(lin) * np.pi
    B = x.shape[0]
    q_out = np.zeros((B, N_QUBITS))
    for bi in range(B):
        a = q_in[bi]
        state = np.array([1.0 + 0j])
        for i in range(N_QUBITS):
            qs = np.array([np.cos(a[i] / 2), -1j * np.sin(a[i] / 2)])
            state = np.kron(state, qs)
        phi = U @ state
        probs = np.abs(phi) ** 2
        for k in range(N_QUBITS):
            zk = np.array([1 - 2 * ((j >> (N_QUBITS - 1 - k)) & 1)
                           for j in range(DIM)], dtype=np.float64)
            q_out[bi, k] = probs @ zk
    sig = lambda v: 1.0 / (1.0 + np.exp(-v))
    i_g, f_g, o_g = sig(q_out[:, 0:1]), sig(q_out[:, 1:2]), sig(q_out[:, 2:3])
    g_g = np.tanh(q_out[:, 3:4])
    c_next = f_g * c + i_g * g_g
    h_next = o_g * np.tanh(c_next)
    return h_next, c_next


if __name__ == "__main__":
    key = jax.random.PRNGKey(0)
    k_x, k_h, k_c, k_w, k_b, k_ent, k_gate = jax.random.split(key, 7)

    # sequence input (batch=5, seq_len=7, input_dim=10, hidden=8 per the spec)
    x_seq = jax.random.normal(k_x, (SEQ_LEN, BATCH, INPUT_DIM), dtype=jnp.float32)
    h0 = jax.random.normal(k_h, (BATCH, HIDDEN_DIM), dtype=jnp.float32)
    c0 = jax.random.normal(k_c, (BATCH, HIDDEN_DIM), dtype=jnp.float32)

    # deterministic parameter init (synthetic; shapes per nn.Linear / TorchLayer)
    fan_in = INPUT_DIM + HIDDEN_DIM
    bound = 1.0 / math.sqrt(fan_in)
    W = jax.random.uniform(k_w, (N_QUBITS, fan_in), jnp.float32, -bound, bound)
    b = jax.random.uniform(k_b, (N_QUBITS,), jnp.float32, -bound, bound)
    entangle_weights = np.asarray(
        jax.random.uniform(k_ent, (1, N_QUBITS, 3), jnp.float32, 0.0, 2 * math.pi))
    gate_weights = np.asarray(
        jax.random.uniform(k_gate, (N_QUBITS,), jnp.float32, 0.0, 2 * math.pi))

    # pre-compose the fixed part of the circuit (phase folded into U')
    U, u_cat_np, Z_np = build_quantum_tables(entangle_weights, gate_weights)

    W_np = np.asarray(W)
    b_np = np.asarray(b)
    wx = jnp.asarray(W_np[:, :INPUT_DIM].T)                  # (10, 4)
    wh = jnp.asarray(W_np[:, INPUT_DIM:].T)                  # (8, 4)
    b2 = jnp.asarray(b_np.reshape(1, N_QUBITS))              # (1, 4)
    u_cat = jnp.asarray(u_cat_np)                            # (16, 32)
    z_tab = jnp.asarray(Z_np)                                # (16, 4)

    # ---- whole sequence in a single pallas_call (single kernel invocation) ----
    h_seq, c_seq = qlstm_forward_seq(x_seq, h0, c0, wx, wh, b2, u_cat, z_tab)
    jax.block_until_ready((h_seq, c_seq))

    # ---- single-step forward (exact QLSTMCell.forward signature) ----
    h1, c1 = qlstm_cell(x_seq[0], h0, c0, wx, wh, b2, u_cat, z_tab)
    jax.block_until_ready((h1, c1))

    # ---- numpy reference checks ----
    x_np = np.asarray(x_seq)
    h_ref = np.asarray(h0).astype(np.float64)
    c_ref = np.asarray(c0).astype(np.float64)
    for t in range(SEQ_LEN):
        h_ref, c_ref = reference_step(x_np[t], h_ref, c_ref, W_np, b_np, U)
        assert np.allclose(np.asarray(h_seq[t]), h_ref, atol=1e-4), f"h mismatch @t={t}"
        assert np.allclose(np.asarray(c_seq[t]), c_ref, atol=1e-4), f"c mismatch @t={t}"

    h1_ref, c1_ref = reference_step(x_np[0], np.asarray(h0), np.asarray(c0),
                                    W_np, b_np, U)
    assert np.allclose(np.asarray(h1), h1_ref, atol=1e-4), "single-step h mismatch"
    assert np.allclose(np.asarray(c1), c1_ref, atol=1e-4), "single-step c mismatch"

    print("KERNEL_OK")
</pallas_src>

<mosaic_0001>
module attributes {stable_mosaic.version = 11 : i64} {
  func.func @_qlstm_seq_kernel(%arg0: memref<35x10xf32, #tpu.memory_space<vmem>>, %arg1: memref<5x8xf32, #tpu.memory_space<vmem>>, %arg2: memref<5x8xf32, #tpu.memory_space<vmem>>, %arg3: memref<10x4xf32, #tpu.memory_space<vmem>>, %arg4: memref<8x4xf32, #tpu.memory_space<vmem>>, %arg5: memref<1x4xf32, #tpu.memory_space<vmem>>, %arg6: memref<16x32xf32, #tpu.memory_space<vmem>>, %arg7: memref<16x4xf32, #tpu.memory_space<vmem>>, %arg8: memref<7x5x8xf32, #tpu.memory_space<vmem>>, %arg9: memref<7x5x8xf32, #tpu.memory_space<vmem>>) attributes {dimension_semantics = [], scalar_prefetch = 0 : i64, scratch_operands = 0 : i64, tpu.core_type = #tpu.core_type<tc>} {
    %c0 = arith.constant 0 : index
    %c0_0 = arith.constant 0 : index
    %0 = vector.load %arg0[%c0, %c0_0] : memref<35x10xf32, #tpu.memory_space<vmem>>, vector<35x10xf32>
    %c0_1 = arith.constant 0 : index
    %c0_2 = arith.constant 0 : index
    %1 = vector.load %arg3[%c0_1, %c0_2] : memref<10x4xf32, #tpu.memory_space<vmem>>, vector<10x4xf32>
    %cst = arith.constant dense<0.000000e+00> : vector<35x4xf32>
    %2 = tpu.matmul %0, %1, %cst {dimension_numbers = #tpu.dot_dimension_numbers<[1], [0], [0], [1], [0, 0, 1, 1], [], []>} : vector<35x10xf32>, vector<10x4xf32>, vector<35x4xf32> -> vector<35x4xf32>
    %c0_3 = arith.constant 0 : index
    %c0_4 = arith.constant 0 : index
    %3 = vector.load %arg5[%c0_3, %c0_4] : memref<1x4xf32, #tpu.memory_space<vmem>>, vector<1x4xf32>
    %4 = vector.broadcast %3 : vector<1x4xf32> to vector<35x4xf32>
    %5 = arith.addf %2, %4 : vector<35x4xf32>
    %6 = tpu.iota {dimensions = array<i32: 1>} : vector<1x16xi32>
    %c3_i32 = arith.constant 3 : i32
    %7 = vector.broadcast %c3_i32 : i32 to vector<1x16xi32>
    %8 = arith.shrsi %6, %7 : vector<1x16xi32>
    %c1_i32 = arith.constant 1 : i32
    %9 = vector.broadcast %c1_i32 : i32 to vector<1x16xi32>
    %10 = arith.andi %8, %9 : vector<1x16xi32>
    %11 = arith.sitofp %10 : vector<1x16xi32> to vector<1x16xf32>
    %c2_i32 = arith.constant 2 : i32
    %12 = vector.broadcast %c2_i32 : i32 to vector<1x16xi32>
    %13 = arith.shrsi %6, %12 : vector<1x16xi32>
    %c1_i32_5 = arith.constant 1 : i32
    %14 = vector.broadcast %c1_i32_5 : i32 to vector<1x16xi32>
    %15 = arith.andi %13, %14 : vector<1x16xi32>
    %16 = arith.sitofp %15 : vector<1x16xi32> to vector<1x16xf32>
    %c1_i32_6 = arith.constant 1 : i32
    %17 = vector.broadcast %c1_i32_6 : i32 to vector<1x16xi32>
    %18 = arith.shrsi %6, %17 : vector<1x16xi32>
    %c1_i32_7 = arith.constant 1 : i32
    %19 = vector.broadcast %c1_i32_7 : i32 to vector<1x16xi32>
    %20 = arith.andi %18, %19 : vector<1x16xi32>
    %21 = arith.sitofp %20 : vector<1x16xi32> to vector<1x16xf32>
    %c0_i32 = arith.constant 0 : i32
    %22 = vector.broadcast %c0_i32 : i32 to vector<1x16xi32>
    %23 = arith.shrsi %6, %22 : vector<1x16xi32>
    %c1_i32_8 = arith.constant 1 : i32
    %24 = vector.broadcast %c1_i32_8 : i32 to vector<1x16xi32>
    %25 = arith.andi %23, %24 : vector<1x16xi32>
    %26 = arith.sitofp %25 : vector<1x16xi32> to vector<1x16xf32>
    %c0_9 = arith.constant 0 : index
    %c0_10 = arith.constant 0 : index
    %27 = vector.load %arg4[%c0_9, %c0_10] : memref<8x4xf32, #tpu.memory_space<vmem>>, vector<8x4xf32>
    %c0_11 = arith.constant 0 : index
    %c0_12 = arith.constant 0 : index
    %28 = vector.load %arg6[%c0_11, %c0_12] : memref<16x32xf32, #tpu.memory_space<vmem>>, vector<16x32xf32>
    %c0_13 = arith.constant 0 : index
    %c0_14 = arith.constant 0 : index
    %29 = vector.load %arg7[%c0_13, %c0_14] : memref<16x4xf32, #tpu.memory_space<vmem>>, vector<16x4xf32>
    %c0_15 = arith.constant 0 : index
    %c0_16 = arith.constant 0 : index
    %30 = vector.load %arg1[%c0_15, %c0_16] : memref<5x8xf32, #tpu.memory_space<vmem>>, vector<5x8xf32>
    %c0_17 = arith.constant 0 : index
    %c0_18 = arith.constant 0 : index
    %31 = vector.load %arg2[%c0_17, %c0_18] : memref<5x8xf32, #tpu.memory_space<vmem>>, vector<5x8xf32>
    %32 = vector.extract_strided_slice %5 {offsets = [0, 0], sizes = [5, 4], strides = [1, 1]} : vector<35x4xf32> to vector<5x4xf32>
    %cst_19 = arith.constant dense<0.000000e+00> : vector<5x4xf32>
    %33 = tpu.matmul %30, %27, %cst_19 {dimension_numbers = #tpu.dot_dimension_numbers<[1], [0], [0], [1], [0, 0, 1, 1], [], []>} : vector<5x8xf32>, vector<8x4xf32>, vector<5x4xf32> -> vector<5x4xf32>
    %34 = arith.addf %32, %33 : vector<5x4xf32>
    %35 = math.tanh %34 : vector<5x4xf32>
    %cst_20 = arith.constant 1.57079637 : f32
    %36 = vector.broadcast %cst_20 : f32 to vector<5x4xf32>
    %37 = arith.mulf %36, %35 : vector<5x4xf32>
    %38 = math.cos %37 : vector<5x4xf32>
    %39 = math.sin %37 : vector<5x4xf32>
    %40 = arith.subf %39, %38 : vector<5x4xf32>
    %41 = vector.extract_strided_slice %38 {offsets = [0, 0], sizes = [5, 1], strides = [1, 1]} : vector<5x4xf32> to vector<5x1xf32>
    %42 = vector.extract_strided_slice %40 {offsets = [0, 0], sizes = [5, 1], strides = [1, 1]} : vector<5x4xf32> to vector<5x1xf32>
    %43 = vector.broadcast %42 : vector<5x1xf32> to vector<5x16xf32>
    %44 = vector.broadcast %11 : vector<1x16xf32> to vector<5x16xf32>
    %45 = arith.mulf %43, %44 : vector<5x16xf32>
    %46 = vector.broadcast %41 : vector<5x1xf32> to vector<5x16xf32>
    %47 = arith.addf %46, %45 : vector<5x16xf32>
    %48 = vector.extract_strided_slice %38 {offsets = [0, 1], sizes = [5, 1], strides = [1, 1]} : vector<5x4xf32> to vector<5x1xf32>
    %49 = vector.extract_strided_slice %40 {offsets = [0, 1], sizes = [5, 1], strides = [1, 1]} : vector<5x4xf32> to vector<5x1xf32>
    %50 = vector.broadcast %49 : vector<5x1xf32> to vector<5x16xf32>
    %51 = vector.broadcast %16 : vector<1x16xf32> to vector<5x16xf32>
    %52 = arith.mulf %50, %51 : vector<5x16xf32>
    %53 = vector.broadcast %48 : vector<5x1xf32> to vector<5x16xf32>
    %54 = arith.addf %53, %52 : vector<5x16xf32>
    %55 = arith.mulf %47, %54 : vector<5x16xf32>
    %56 = vector.extract_strided_slice %38 {offsets = [0, 2], sizes = [5, 1], strides = [1, 1]} : vector<5x4xf32> to vector<5x1xf32>
    %57 = vector.extract_strided_slice %40 {offsets = [0, 2], sizes = [5, 1], strides = [1, 1]} : vector<5x4xf32> to vector<5x1xf32>
    %58 = vector.broadcast %57 : vector<5x1xf32> to vector<5x16xf32>
    %59 = vector.broadcast %21 : vector<1x16xf32> to vector<5x16xf32>
    %60 = arith.mulf %58, %59 : vector<5x16xf32>
    %61 = vector.broadcast %56 : vector<5x1xf32> to vector<5x16xf32>
    %62 = arith.addf %61, %60 : vector<5x16xf32>
    %63 = arith.mulf %55, %62 : vector<5x16xf32>
    %64 = vector.extract_strided_slice %38 {offsets = [0, 3], sizes = [5, 1], strides = [1, 1]} : vector<5x4xf32> to vector<5x1xf32>
    %65 = vector.extract_strided_slice %40 {offsets = [0, 3], sizes = [5, 1], strides = [1, 1]} : vector<5x4xf32> to vector<5x1xf32>
    %66 = vector.broadcast %65 : vector<5x1xf32> to vector<5x16xf32>
    %67 = vector.broadcast %26 : vector<1x16xf32> to vector<5x16xf32>
    %68 = arith.mulf %66, %67 : vector<5x16xf32>
    %69 = vector.broadcast %64 : vector<5x1xf32> to vector<5x16xf32>
    %70 = arith.addf %69, %68 : vector<5x16xf32>
    %71 = arith.mulf %63, %70 : vector<5x16xf32>
    %cst_21 = arith.constant dense<0.000000e+00> : vector<5x32xf32>
    %72 = tpu.matmul %71, %28, %cst_21 {dimension_numbers = #tpu.dot_dimension_numbers<[1], [0], [0], [1], [0, 0, 1, 1], [], []>} : vector<5x16xf32>, vector<16x32xf32>, vector<5x32xf32> -> vector<5x32xf32>
    %73 = vector.extract_strided_slice %72 {offsets = [0, 0], sizes = [5, 16], strides = [1, 1]} : vector<5x32xf32> to vector<5x16xf32>
    %74 = arith.mulf %73, %73 : vector<5x16xf32>
    %75 = vector.extract_strided_slice %72 {offsets = [0, 16], sizes = [5, 16], strides = [1, 1]} : vector<5x32xf32> to vector<5x16xf32>
    %76 = arith.mulf %75, %75 : vector<5x16xf32>
    %77 = arith.addf %74, %76 : vector<5x16xf32>
    %cst_22 = arith.constant dense<0.000000e+00> : vector<5x4xf32>
    %78 = tpu.matmul %77, %29, %cst_22 {dimension_numbers = #tpu.dot_dimension_numbers<[1], [0], [0], [1], [0, 0, 1, 1], [], []>} : vector<5x16xf32>, vector<16x4xf32>, vector<5x4xf32> -> vector<5x4xf32>
    %79 = arith.negf %78 : vector<5x4xf32>
    %80 = math.exp %79 : vector<5x4xf32>
    %cst_23 = arith.constant 1.000000e+00 : f32
    %81 = vector.broadcast %cst_23 : f32 to vector<5x4xf32>
    %82 = arith.addf %81, %80 : vector<5x4xf32>
    %83 = arith.divf %81, %82 : vector<5x4xf32>
    %84 = vector.extract_strided_slice %78 {offsets = [0, 3], sizes = [5, 1], strides = [1, 1]} : vector<5x4xf32> to vector<5x1xf32>
    %85 = math.tanh %84 : vector<5x1xf32>
    %86 = vector.extract_strided_slice %83 {offsets = [0, 1], sizes = [5, 1], strides = [1, 1]} : vector<5x4xf32> to vector<5x1xf32>
    %87 = vector.broadcast %86 : vector<5x1xf32> to vector<5x8xf32>
    %88 = arith.mulf %87, %31 : vector<5x8xf32>
    %89 = vector.extract_strided_slice %83 {offsets = [0, 0], sizes = [5, 1], strides = [1, 1]} : vector<5x4xf32> to vector<5x1xf32>
    %90 = arith.mulf %89, %85 : vector<5x1xf32>
    %91 = vector.broadcast %90 : vector<5x1xf32> to vector<5x8xf32>
    %92 = arith.addf %88, %91 : vector<5x8xf32>
    %93 = vector.extract_strided_slice %83 {offsets = [0, 2], sizes = [5, 1], strides = [1, 1]} : vector<5x4xf32> to vector<5x1xf32>
    %94 = math.tanh %92 : vector<5x8xf32>
    %95 = vector.broadcast %93 : vector<5x1xf32> to vector<5x8xf32>
    %96 = arith.mulf %95, %94 : vector<5x8xf32>
    %c0_24 = arith.constant 0 : index
    %c0_25 = arith.constant 0 : index
    %c0_26 = arith.constant 0 : index
    %97 = vector.load %arg8[%c0_24, %c0_25, %c0_26] : memref<7x5x8xf32, #tpu.memory_space<vmem>>, vector<1x5x8xf32>
    %98 = vector.shape_cast %97 : vector<1x5x8xf32> to vector<5x8xf32>
    %99 = vector.shape_cast %96 : vector<5x8xf32> to vector<1x5x8xf32>
    tpu.vector_store %arg8[%c0_24, %c0_25, %c0_26], %99 {strides = array<i32>} : memref<7x5x8xf32, #tpu.memory_space<vmem>>, vector<1x5x8xf32>,
    %c0_27 = arith.constant 0 : index
    %c0_28 = arith.constant 0 : index
    %c0_29 = arith.constant 0 : index
    %100 = vector.load %arg9[%c0_27, %c0_28, %c0_29] : memref<7x5x8xf32, #tpu.memory_space<vmem>>, vector<1x5x8xf32>
    %101 = vector.shape_cast %100 : vector<1x5x8xf32> to vector<5x8xf32>
    %102 = vector.shape_cast %92 : vector<5x8xf32> to vector<1x5x8xf32>
    tpu.vector_store %arg9[%c0_27, %c0_28, %c0_29], %102 {strides = array<i32>} : memref<7x5x8xf32, #tpu.memory_space<vmem>>, vector<1x5x8xf32>,
    %103 = vector.extract_strided_slice %5 {offsets = [5, 0], sizes = [5, 4], strides = [1, 1]} : vector<35x4xf32> to vector<5x4xf32>
    %cst_30 = arith.constant dense<0.000000e+00> : vector<5x4xf32>
    %104 = tpu.matmul %96, %27, %cst_30 {dimension_numbers = #tpu.dot_dimension_numbers<[1], [0], [0], [1], [0, 0, 1, 1], [], []>} : vector<5x8xf32>, vector<8x4xf32>, vector<5x4xf32> -> vector<5x4xf32>
    %105 = arith.addf %103, %104 : vector<5x4xf32>
    %106 = math.tanh %105 : vector<5x4xf32>
    %cst_31 = arith.constant 1.57079637 : f32
    %107 = vector.broadcast %cst_31 : f32 to vector<5x4xf32>
    %108 = arith.mulf %107, %106 : vector<5x4xf32>
    %109 = math.cos %108 : vector<5x4xf32>
    %110 = math.sin %108 : vector<5x4xf32>
    %111 = arith.subf %110, %109 : vector<5x4xf32>
    %112 = vector.extract_strided_slice %109 {offsets = [0, 0], sizes = [5, 1], strides = [1, 1]} : vector<5x4xf32> to vector<5x1xf32>
    %113 = vector.extract_strided_slice %111 {offsets = [0, 0], sizes = [5, 1], strides = [1, 1]} : vector<5x4xf32> to vector<5x1xf32>
    %114 = vector.broadcast %113 : vector<5x1xf32> to vector<5x16xf32>
    %115 = vector.broadcast %11 : vector<1x16xf32> to vector<5x16xf32>
    %116 = arith.mulf %114, %115 : vector<5x16xf32>
    %117 = vector.broadcast %112 : vector<5x1xf32> to vector<5x16xf32>
    %118 = arith.addf %117, %116 : vector<5x16xf32>
    %119 = vector.extract_strided_slice %109 {offsets = [0, 1], sizes = [5, 1], strides = [1, 1]} : vector<5x4xf32> to vector<5x1xf32>
    %120 = vector.extract_strided_slice %111 {offsets = [0, 1], sizes = [5, 1], strides = [1, 1]} : vector<5x4xf32> to vector<5x1xf32>
    %121 = vector.broadcast %120 : vector<5x1xf32> to vector<5x16xf32>
    %122 = vector.broadcast %16 : vector<1x16xf32> to vector<5x16xf32>
    %123 = arith.mulf %121, %122 : vector<5x16xf32>
    %124 = vector.broadcast %119 : vector<5x1xf32> to vector<5x16xf32>
    %125 = arith.addf %124, %123 : vector<5x16xf32>
    %126 = arith.mulf %118, %125 : vector<5x16xf32>
    %127 = vector.extract_strided_slice %109 {offsets = [0, 2], sizes = [5, 1], strides = [1, 1]} : vector<5x4xf32> to vector<5x1xf32>
    %128 = vector.extract_strided_slice %111 {offsets = [0, 2], sizes = [5, 1], strides = [1, 1]} : vector<5x4xf32> to vector<5x1xf32>
    %129 = vector.broadcast %128 : vector<5x1xf32> to vector<5x16xf32>
    %130 = vector.broadcast %21 : vector<1x16xf32> to vector<5x16xf32>
    %131 = arith.mulf %129, %130 : vector<5x16xf32>
    %132 = vector.broadcast %127 : vector<5x1xf32> to vector<5x16xf32>
    %133 = arith.addf %132, %131 : vector<5x16xf32>
    %134 = arith.mulf %126, %133 : vector<5x16xf32>
    %135 = vector.extract_strided_slice %109 {offsets = [0, 3], sizes = [5, 1], strides = [1, 1]} : vector<5x4xf32> to vector<5x1xf32>
    %136 = vector.extract_strided_slice %111 {offsets = [0, 3], sizes = [5, 1], strides = [1, 1]} : vector<5x4xf32> to vector<5x1xf32>
    %137 = vector.broadcast %136 : vector<5x1xf32> to vector<5x16xf32>
    %138 = vector.broadcast %26 : vector<1x16xf32> to vector<5x16xf32>
    %139 = arith.mulf %137, %138 : vector<5x16xf32>
    %140 = vector.broadcast %135 : vector<5x1xf32> to vector<5x16xf32>
    %141 = arith.addf %140, %139 : vector<5x16xf32>
    %142 = arith.mulf %134, %141 : vector<5x16xf32>
    %cst_32 = arith.constant dense<0.000000e+00> : vector<5x32xf32>
    %143 = tpu.matmul %142, %28, %cst_32 {dimension_numbers = #tpu.dot_dimension_numbers<[1], [0], [0], [1], [0, 0, 1, 1], [], []>} : vector<5x16xf32>, vector<16x32xf32>, vector<5x32xf32> -> vector<5x32xf32>
    %144 = vector.extract_strided_slice %143 {offsets = [0, 0], sizes = [5, 16], strides = [1, 1]} : vector<5x32xf32> to vector<5x16xf32>
    %145 = arith.mulf %144, %144 : vector<5x16xf32>
    %146 = vector.extract_strided_slice %143 {offsets = [0, 16], sizes = [5, 16], strides = [1, 1]} : vector<5x32xf32> to vector<5x16xf32>
    %147 = arith.mulf %146, %146 : vector<5x16xf32>
    %148 = arith.addf %145, %147 : vector<5x16xf32>
    %cst_33 = arith.constant dense<0.000000e+00> : vector<5x4xf32>
    %149 = tpu.matmul %148, %29, %cst_33 {dimension_numbers = #tpu.dot_dimension_numbers<[1], [0], [0], [1], [0, 0, 1, 1], [], []>} : vector<5x16xf32>, vector<16x4xf32>, vector<5x4xf32> -> vector<5x4xf32>
    %150 = arith.negf %149 : vector<5x4xf32>
    %151 = math.exp %150 : vector<5x4xf32>
    %cst_34 = arith.constant 1.000000e+00 : f32
    %152 = vector.broadcast %cst_34 : f32 to vector<5x4xf32>
    %153 = arith.addf %152, %151 : vector<5x4xf32>
    %154 = arith.divf %152, %153 : vector<5x4xf32>
    %155 = vector.extract_strided_slice %149 {offsets = [0, 3], sizes = [5, 1], strides = [1, 1]} : vector<5x4xf32> to vector<5x1xf32>
    %156 = math.tanh %155 : vector<5x1xf32>
    %157 = vector.extract_strided_slice %154 {offsets = [0, 1], sizes = [5, 1], strides = [1, 1]} : vector<5x4xf32> to vector<5x1xf32>
    %158 = vector.broadcast %157 : vector<5x1xf32> to vector<5x8xf32>
    %159 = arith.mulf %158, %92 : vector<5x8xf32>
    %160 = vector.extract_strided_slice %154 {offsets = [0, 0], sizes = [5, 1], strides = [1, 1]} : vector<5x4xf32> to vector<5x1xf32>
    %161 = arith.mulf %160, %156 : vector<5x1xf32>
    %162 = vector.broadcast %161 : vector<5x1xf32> to vector<5x8xf32>
    %163 = arith.addf %159, %162 : vector<5x8xf32>
    %164 = vector.extract_strided_slice %154 {offsets = [0, 2], sizes = [5, 1], strides = [1, 1]} : vector<5x4xf32> to vector<5x1xf32>
    %165 = math.tanh %163 : vector<5x8xf32>
    %166 = vector.broadcast %164 : vector<5x1xf32> to vector<5x8xf32>
    %167 = arith.mulf %166, %165 : vector<5x8xf32>
    %c1 = arith.constant 1 : index
    %c0_35 = arith.constant 0 : index
    %c0_36 = arith.constant 0 : index
    %168 = vector.load %arg8[%c1, %c0_35, %c0_36] : memref<7x5x8xf32, #tpu.memory_space<vmem>>, vector<1x5x8xf32>
    %169 = vector.shape_cast %168 : vector<1x5x8xf32> to vector<5x8xf32>
    %170 = vector.shape_cast %167 : vector<5x8xf32> to vector<1x5x8xf32>
    tpu.vector_store %arg8[%c1, %c0_35, %c0_36], %170 {strides = array<i32>} : memref<7x5x8xf32, #tpu.memory_space<vmem>>, vector<1x5x8xf32>,
    %c1_37 = arith.constant 1 : index
    %c0_38 = arith.constant 0 : index
    %c0_39 = arith.constant 0 : index
    %171 = vector.load %arg9[%c1_37, %c0_38, %c0_39] : memref<7x5x8xf32, #tpu.memory_space<vmem>>, vector<1x5x8xf32>
    %172 = vector.shape_cast %171 : vector<1x5x8xf32> to vector<5x8xf32>
    %173 = vector.shape_cast %163 : vector<5x8xf32> to vector<1x5x8xf32>
    tpu.vector_store %arg9[%c1_37, %c0_38, %c0_39], %173 {strides = array<i32>} : memref<7x5x8xf32, #tpu.memory_space<vmem>>, vector<1x5x8xf32>,
    %174 = vector.extract_strided_slice %5 {offsets = [10, 0], sizes = [5, 4], strides = [1, 1]} : vector<35x4xf32> to vector<5x4xf32>
    %cst_40 = arith.constant dense<0.000000e+00> : vector<5x4xf32>
    %175 = tpu.matmul %167, %27, %cst_40 {dimension_numbers = #tpu.dot_dimension_numbers<[1], [0], [0], [1], [0, 0, 1, 1], [], []>} : vector<5x8xf32>, vector<8x4xf32>, vector<5x4xf32> -> vector<5x4xf32>
    %176 = arith.addf %174, %175 : vector<5x4xf32>
    %177 = math.tanh %176 : vector<5x4xf32>
    %cst_41 = arith.constant 1.57079637 : f32
    %178 = vector.broadcast %cst_41 : f32 to vector<5x4xf32>
    %179 = arith.mulf %178, %177 : vector<5x4xf32>
    %180 = math.cos %179 : vector<5x4xf32>
    %181 = math.sin %179 : vector<5x4xf32>
    %182 = arith.subf %181, %180 : vector<5x4xf32>
    %183 = vector.extract_strided_slice %180 {offsets = [0, 0], sizes = [5, 1], strides = [1, 1]} : vector<5x4xf32> to vector<5x1xf32>
    %184 = vector.extract_strided_slice %182 {offsets = [0, 0], sizes = [5, 1], strides = [1, 1]} : vector<5x4xf32> to vector<5x1xf32>
    %185 = vector.broadcast %184 : vector<5x1xf32> to vector<5x16xf32>
    %186 = vector.broadcast %11 : vector<1x16xf32> to vector<5x16xf32>
    %187 = arith.mulf %185, %186 : vector<5x16xf32>
    %188 = vector.broadcast %183 : vector<5x1xf32> to vector<5x16xf32>
    %189 = arith.addf %188, %187 : vector<5x16xf32>
    %190 = vector.extract_strided_slice %180 {offsets = [0, 1], sizes = [5, 1], strides = [1, 1]} : vector<5x4xf32> to vector<5x1xf32>
    %191 = vector.extract_strided_slice %182 {offsets = [0, 1], sizes = [5, 1], strides = [1, 1]} : vector<5x4xf32> to vector<5x1xf32>
    %192 = vector.broadcast %191 : vector<5x1xf32> to vector<5x16xf32>
    %193 = vector.broadcast %16 : vector<1x16xf32> to vector<5x16xf32>
    %194 = arith.mulf %192, %193 : vector<5x16xf32>
    %195 = vector.broadcast %190 : vector<5x1xf32> to vector<5x16xf32>
    %196 = arith.addf %195, %194 : vector<5x16xf32>
    %197 = arith.mulf %189, %196 : vector<5x16xf32>
    %198 = vector.extract_strided_slice %180 {offsets = [0, 2], sizes = [5, 1], strides = [1, 1]} : vector<5x4xf32> to vector<5x1xf32>
    %199 = vector.extract_strided_slice %182 {offsets = [0, 2], sizes = [5, 1], strides = [1, 1]} : vector<5x4xf32> to vector<5x1xf32>
    %200 = vector.broadcast %199 : vector<5x1xf32> to vector<5x16xf32>
    %201 = vector.broadcast %21 : vector<1x16xf32> to vector<5x16xf32>
    %202 = arith.mulf %200, %201 : vector<5x16xf32>
    %203 = vector.broadcast %198 : vector<5x1xf32> to vector<5x16xf32>
    %204 = arith.addf %203, %202 : vector<5x16xf32>
    %205 = arith.mulf %197, %204 : vector<5x16xf32>
    %206 = vector.extract_strided_slice %180 {offsets = [0, 3], sizes = [5, 1], strides = [1, 1]} : vector<5x4xf32> to vector<5x1xf32>
    %207 = vector.extract_strided_slice %182 {offsets = [0, 3], sizes = [5, 1], strides = [1, 1]} : vector<5x4xf32> to vector<5x1xf32>
    %208 = vector.broadcast %207 : vector<5x1xf32> to vector<5x16xf32>
    %209 = vector.broadcast %26 : vector<1x16xf32> to vector<5x16xf32>
    %210 = arith.mulf %208, %209 : vector<5x16xf32>
    %211 = vector.broadcast %206 : vector<5x1xf32> to vector<5x16xf32>
    %212 = arith.addf %211, %210 : vector<5x16xf32>
    %213 = arith.mulf %205, %212 : vector<5x16xf32>
    %cst_42 = arith.constant dense<0.000000e+00> : vector<5x32xf32>
    %214 = tpu.matmul %213, %28, %cst_42 {dimension_numbers = #tpu.dot_dimension_numbers<[1], [0], [0], [1], [0, 0, 1, 1], [], []>} : vector<5x16xf32>, vector<16x32xf32>, vector<5x32xf32> -> vector<5x32xf32>
    %215 = vector.extract_strided_slice %214 {offsets = [0, 0], sizes = [5, 16], strides = [1, 1]} : vector<5x32xf32> to vector<5x16xf32>
    %216 = arith.mulf %215, %215 : vector<5x16xf32>
    %217 = vector.extract_strided_slice %214 {offsets = [0, 16], sizes = [5, 16], strides = [1, 1]} : vector<5x32xf32> to vector<5x16xf32>
    %218 = arith.mulf %217, %217 : vector<5x16xf32>
    %219 = arith.addf %216, %218 : vector<5x16xf32>
    %cst_43 = arith.constant dense<0.000000e+00> : vector<5x4xf32>
    %220 = tpu.matmul %219, %29, %cst_43 {dimension_numbers = #tpu.dot_dimension_numbers<[1], [0], [0], [1], [0, 0, 1, 1], [], []>} : vector<5x16xf32>, vector<16x4xf32>, vector<5x4xf32> -> vector<5x4xf32>
    %221 = arith.negf %220 : vector<5x4xf32>
    %222 = math.exp %221 : vector<5x4xf32>
    %cst_44 = arith.constant 1.000000e+00 : f32
    %223 = vector.broadcast %cst_44 : f32 to vector<5x4xf32>
    %224 = arith.addf %223, %222 : vector<5x4xf32>
    %225 = arith.divf %223, %224 : vector<5x4xf32>
    %226 = vector.extract_strided_slice %220 {offsets = [0, 3], sizes = [5, 1], strides = [1, 1]} : vector<5x4xf32> to vector<5x1xf32>
    %227 = math.tanh %226 : vector<5x1xf32>
    %228 = vector.extract_strided_slice %225 {offsets = [0, 1], sizes = [5, 1], strides = [1, 1]} : vector<5x4xf32> to vector<5x1xf32>
    %229 = vector.broadcast %228 : vector<5x1xf32> to vector<5x8xf32>
    %230 = arith.mulf %229, %163 : vector<5x8xf32>
    %231 = vector.extract_strided_slice %225 {offsets = [0, 0], sizes = [5, 1], strides = [1, 1]} : vector<5x4xf32> to vector<5x1xf32>
    %232 = arith.mulf %231, %227 : vector<5x1xf32>
    %233 = vector.broadcast %232 : vector<5x1xf32> to vector<5x8xf32>
    %234 = arith.addf %230, %233 : vector<5x8xf32>
    %235 = vector.extract_strided_slice %225 {offsets = [0, 2], sizes = [5, 1], strides = [1, 1]} : vector<5x4xf32> to vector<5x1xf32>
    %236 = math.tanh %234 : vector<5x8xf32>
    %237 = vector.broadcast %235 : vector<5x1xf32> to vector<5x8xf32>
    %238 = arith.mulf %237, %236 : vector<5x8xf32>
    %c2 = arith.constant 2 : index
    %c0_45 = arith.constant 0 : index
    %c0_46 = arith.constant 0 : index
    %239 = vector.load %arg8[%c2, %c0_45, %c0_46] : memref<7x5x8xf32, #tpu.memory_space<vmem>>, vector<1x5x8xf32>
    %240 = vector.shape_cast %239 : vector<1x5x8xf32> to vector<5x8xf32>
    %241 = vector.shape_cast %238 : vector<5x8xf32> to vector<1x5x8xf32>
    tpu.vector_store %arg8[%c2, %c0_45, %c0_46], %241 {strides = array<i32>} : memref<7x5x8xf32, #tpu.memory_space<vmem>>, vector<1x5x8xf32>,
    %c2_47 = arith.constant 2 : index
    %c0_48 = arith.constant 0 : index
    %c0_49 = arith.constant 0 : index
    %242 = vector.load %arg9[%c2_47, %c0_48, %c0_49] : memref<7x5x8xf32, #tpu.memory_space<vmem>>, vector<1x5x8xf32>
    %243 = vector.shape_cast %242 : vector<1x5x8xf32> to vector<5x8xf32>
    %244 = vector.shape_cast %234 : vector<5x8xf32> to vector<1x5x8xf32>
    tpu.vector_store %arg9[%c2_47, %c0_48, %c0_49], %244 {strides = array<i32>} : memref<7x5x8xf32, #tpu.memory_space<vmem>>, vector<1x5x8xf32>,
    %245 = vector.extract_strided_slice %5 {offsets = [15, 0], sizes = [5, 4], strides = [1, 1]} : vector<35x4xf32> to vector<5x4xf32>
    %cst_50 = arith.constant dense<0.000000e+00> : vector<5x4xf32>
    %246 = tpu.matmul %238, %27, %cst_50 {dimension_numbers = #tpu.dot_dimension_numbers<[1], [0], [0], [1], [0, 0, 1, 1], [], []>} : vector<5x8xf32>, vector<8x4xf32>, vector<5x4xf32> -> vector<5x4xf32>
    %247 = arith.addf %245, %246 : vector<5x4xf32>
    %248 = math.tanh %247 : vector<5x4xf32>
    %cst_51 = arith.constant 1.57079637 : f32
    %249 = vector.broadcast %cst_51 : f32 to vector<5x4xf32>
    %250 = arith.mulf %249, %248 : vector<5x4xf32>
    %251 = math.cos %250 : vector<5x4xf32>
    %252 = math.sin %250 : vector<5x4xf32>
    %253 = arith.subf %252, %251 : vector<5x4xf32>
    %254 = vector.extract_strided_slice %251 {offsets = [0, 0], sizes = [5, 1], strides = [1, 1]} : vector<5x4xf32> to vector<5x1xf32>
    %255 = vector.extract_strided_slice %253 {offsets = [0, 0], sizes = [5, 1], strides = [1, 1]} : vector<5x4xf32> to vector<5x1xf32>
    %256 = vector.broadcast %255 : vector<5x1xf32> to vector<5x16xf32>
    %257 = vector.broadcast %11 : vector<1x16xf32> to vector<5x16xf32>
    %258 = arith.mulf %256, %257 : vector<5x16xf32>
    %259 = vector.broadcast %254 : vector<5x1xf32> to vector<5x16xf32>
    %260 = arith.addf %259, %258 : vector<5x16xf32>
    %261 = vector.extract_strided_slice %251 {offsets = [0, 1], sizes = [5, 1], strides = [1, 1]} : vector<5x4xf32> to vector<5x1xf32>
    %262 = vector.extract_strided_slice %253 {offsets = [0, 1], sizes = [5, 1], strides = [1, 1]} : vector<5x4xf32> to vector<5x1xf32>
    %263 = vector.broadcast %262 : vector<5x1xf32> to vector<5x16xf32>
    %264 = vector.broadcast %16 : vector<1x16xf32> to vector<5x16xf32>
    %265 = arith.mulf %263, %264 : vector<5x16xf32>
    %266 = vector.broadcast %261 : vector<5x1xf32> to vector<5x16xf32>
    %267 = arith.addf %266, %265 : vector<5x16xf32>
    %268 = arith.mulf %260, %267 : vector<5x16xf32>
    %269 = vector.extract_strided_slice %251 {offsets = [0, 2], sizes = [5, 1], strides = [1, 1]} : vector<5x4xf32> to vector<5x1xf32>
    %270 = vector.extract_strided_slice %253 {offsets = [0, 2], sizes = [5, 1], strides = [1, 1]} : vector<5x4xf32> to vector<5x1xf32>
    %271 = vector.broadcast %270 : vector<5x1xf32> to vector<5x16xf32>
    %272 = vector.broadcast %21 : vector<1x16xf32> to vector<5x16xf32>
    %273 = arith.mulf %271, %272 : vector<5x16xf32>
    %274 = vector.broadcast %269 : vector<5x1xf32> to vector<5x16xf32>
    %275 = arith.addf %274, %273 : vector<5x16xf32>
    %276 = arith.mulf %268, %275 : vector<5x16xf32>
    %277 = vector.extract_strided_slice %251 {offsets = [0, 3], sizes = [5, 1], strides = [1, 1]} : vector<5x4xf32> to vector<5x1xf32>
    %278 = vector.extract_strided_slice %253 {offsets = [0, 3], sizes = [5, 1], strides = [1, 1]} : vector<5x4xf32> to vector<5x1xf32>
    %279 = vector.broadcast %278 : vector<5x1xf32> to vector<5x16xf32>
    %280 = vector.broadcast %26 : vector<1x16xf32> to vector<5x16xf32>
    %281 = arith.mulf %279, %280 : vector<5x16xf32>
    %282 = vector.broadcast %277 : vector<5x1xf32> to vector<5x16xf32>
    %283 = arith.addf %282, %281 : vector<5x16xf32>
    %284 = arith.mulf %276, %283 : vector<5x16xf32>
    %cst_52 = arith.constant dense<0.000000e+00> : vector<5x32xf32>
    %285 = tpu.matmul %284, %28, %cst_52 {dimension_numbers = #tpu.dot_dimension_numbers<[1], [0], [0], [1], [0, 0, 1, 1], [], []>} : vector<5x16xf32>, vector<16x32xf32>, vector<5x32xf32> -> vector<5x32xf32>
    %286 = vector.extract_strided_slice %285 {offsets = [0, 0], sizes = [5, 16], strides = [1, 1]} : vector<5x32xf32> to vector<5x16xf32>
    %287 = arith.mulf %286, %286 : vector<5x16xf32>
    %288 = vector.extract_strided_slice %285 {offsets = [0, 16], sizes = [5, 16], strides = [1, 1]} : vector<5x32xf32> to vector<5x16xf32>
    %289 = arith.mulf %288, %288 : vector<5x16xf32>
    %290 = arith.addf %287, %289 : vector<5x16xf32>
    %cst_53 = arith.constant dense<0.000000e+00> : vector<5x4xf32>
    %291 = tpu.matmul %290, %29, %cst_53 {dimension_numbers = #tpu.dot_dimension_numbers<[1], [0], [0], [1], [0, 0, 1, 1], [], []>} : vector<5x16xf32>, vector<16x4xf32>, vector<5x4xf32> -> vector<5x4xf32>
    %292 = arith.negf %291 : vector<5x4xf32>
    %293 = math.exp %292 : vector<5x4xf32>
    %cst_54 = arith.constant 1.000000e+00 : f32
    %294 = vector.broadcast %cst_54 : f32 to vector<5x4xf32>
    %295 = arith.addf %294, %293 : vector<5x4xf32>
    %296 = arith.divf %294, %295 : vector<5x4xf32>
    %297 = vector.extract_strided_slice %291 {offsets = [0, 3], sizes = [5, 1], strides = [1, 1]} : vector<5x4xf32> to vector<5x1xf32>
    %298 = math.tanh %297 : vector<5x1xf32>
    %299 = vector.extract_strided_slice %296 {offsets = [0, 1], sizes = [5, 1], strides = [1, 1]} : vector<5x4xf32> to vector<5x1xf32>
    %300 = vector.broadcast %299 : vector<5x1xf32> to vector<5x8xf32>
    %301 = arith.mulf %300, %234 : vector<5x8xf32>
    %302 = vector.extract_strided_slice %296 {offsets = [0, 0], sizes = [5, 1], strides = [1, 1]} : vector<5x4xf32> to vector<5x1xf32>
    %303 = arith.mulf %302, %298 : vector<5x1xf32>
    %304 = vector.broadcast %303 : vector<5x1xf32> to vector<5x8xf32>
    %305 = arith.addf %301, %304 : vector<5x8xf32>
    %306 = vector.extract_strided_slice %296 {offsets = [0, 2], sizes = [5, 1], strides = [1, 1]} : vector<5x4xf32> to vector<5x1xf32>
    %307 = math.tanh %305 : vector<5x8xf32>
    %308 = vector.broadcast %306 : vector<5x1xf32> to vector<5x8xf32>
    %309 = arith.mulf %308, %307 : vector<5x8xf32>
    %c3 = arith.constant 3 : index
    %c0_55 = arith.constant 0 : index
    %c0_56 = arith.constant 0 : index
    %310 = vector.load %arg8[%c3, %c0_55, %c0_56] : memref<7x5x8xf32, #tpu.memory_space<vmem>>, vector<1x5x8xf32>
    %311 = vector.shape_cast %310 : vector<1x5x8xf32> to vector<5x8xf32>
    %312 = vector.shape_cast %309 : vector<5x8xf32> to vector<1x5x8xf32>
    tpu.vector_store %arg8[%c3, %c0_55, %c0_56], %312 {strides = array<i32>} : memref<7x5x8xf32, #tpu.memory_space<vmem>>, vector<1x5x8xf32>,
    %c3_57 = arith.constant 3 : index
    %c0_58 = arith.constant 0 : index
    %c0_59 = arith.constant 0 : index
    %313 = vector.load %arg9[%c3_57, %c0_58, %c0_59] : memref<7x5x8xf32, #tpu.memory_space<vmem>>, vector<1x5x8xf32>
    %314 = vector.shape_cast %313 : vector<1x5x8xf32> to vector<5x8xf32>
    %315 = vector.shape_cast %305 : vector<5x8xf32> to vector<1x5x8xf32>
    tpu.vector_store %arg9[%c3_57, %c0_58, %c0_59], %315 {strides = array<i32>} : memref<7x5x8xf32, #tpu.memory_space<vmem>>, vector<1x5x8xf32>,
    %316 = vector.extract_strided_slice %5 {offsets = [20, 0], sizes = [5, 4], strides = [1, 1]} : vector<35x4xf32> to vector<5x4xf32>
    %cst_60 = arith.constant dense<0.000000e+00> : vector<5x4xf32>
    %317 = tpu.matmul %309, %27, %cst_60 {dimension_numbers = #tpu.dot_dimension_numbers<[1], [0], [0], [1], [0, 0, 1, 1], [], []>} : vector<5x8xf32>, vector<8x4xf32>, vector<5x4xf32> -> vector<5x4xf32>
    %318 = arith.addf %316, %317 : vector<5x4xf32>
    %319 = math.tanh %318 : vector<5x4xf32>
    %cst_61 = arith.constant 1.57079637 : f32
    %320 = vector.broadcast %cst_61 : f32 to vector<5x4xf32>
    %321 = arith.mulf %320, %319 : vector<5x4xf32>
    %322 = math.cos %321 : vector<5x4xf32>
    %323 = math.sin %321 : vector<5x4xf32>
    %324 = arith.subf %323, %322 : vector<5x4xf32>
    %325 = vector.extract_strided_slice %322 {offsets = [0, 0], sizes = [5, 1], strides = [1, 1]} : vector<5x4xf32> to vector<5x1xf32>
    %326 = vector.extract_strided_slice %324 {offsets = [0, 0], sizes = [5, 1], strides = [1, 1]} : vector<5x4xf32> to vector<5x1xf32>
    %327 = vector.broadcast %326 : vector<5x1xf32> to vector<5x16xf32>
    %328 = vector.broadcast %11 : vector<1x16xf32> to vector<5x16xf32>
    %329 = arith.mulf %327, %328 : vector<5x16xf32>
    %330 = vector.broadcast %325 : vector<5x1xf32> to vector<5x16xf32>
    %331 = arith.addf %330, %329 : vector<5x16xf32>
    %332 = vector.extract_strided_slice %322 {offsets = [0, 1], sizes = [5, 1], strides = [1, 1]} : vector<5x4xf32> to vector<5x1xf32>
    %333 = vector.extract_strided_slice %324 {offsets = [0, 1], sizes = [5, 1], strides = [1, 1]} : vector<5x4xf32> to vector<5x1xf32>
    %334 = vector.broadcast %333 : vector<5x1xf32> to vector<5x16xf32>
    %335 = vector.broadcast %16 : vector<1x16xf32> to vector<5x16xf32>
    %336 = arith.mulf %334, %335 : vector<5x16xf32>
    %337 = vector.broadcast %332 : vector<5x1xf32> to vector<5x16xf32>
    %338 = arith.addf %337, %336 : vector<5x16xf32>
    %339 = arith.mulf %331, %338 : vector<5x16xf32>
    %340 = vector.extract_strided_slice %322 {offsets = [0, 2], sizes = [5, 1], strides = [1, 1]} : vector<5x4xf32> to vector<5x1xf32>
    %341 = vector.extract_strided_slice %324 {offsets = [0, 2], sizes = [5, 1], strides = [1, 1]} : vector<5x4xf32> to vector<5x1xf32>
    %342 = vector.broadcast %341 : vector<5x1xf32> to vector<5x16xf32>
    %343 = vector.broadcast %21 : vector<1x16xf32> to vector<5x16xf32>
    %344 = arith.mulf %342, %343 : vector<5x16xf32>
    %345 = vector.broadcast %340 : vector<5x1xf32> to vector<5x16xf32>
    %346 = arith.addf %345, %344 : vector<5x16xf32>
    %347 = arith.mulf %339, %346 : vector<5x16xf32>
    %348 = vector.extract_strided_slice %322 {offsets = [0, 3], sizes = [5, 1], strides = [1, 1]} : vector<5x4xf32> to vector<5x1xf32>
    %349 = vector.extract_strided_slice %324 {offsets = [0, 3], sizes = [5, 1], strides = [1, 1]} : vector<5x4xf32> to vector<5x1xf32>
    %350 = vector.broadcast %349 : vector<5x1xf32> to vector<5x16xf32>
    %351 = vector.broadcast %26 : vector<1x16xf32> to vector<5x16xf32>
    %352 = arith.mulf %350, %351 : vector<5x16xf32>
    %353 = vector.broadcast %348 : vector<5x1xf32> to vector<5x16xf32>
    %354 = arith.addf %353, %352 : vector<5x16xf32>
    %355 = arith.mulf %347, %354 : vector<5x16xf32>
    %cst_62 = arith.constant dense<0.000000e+00> : vector<5x32xf32>
    %356 = tpu.matmul %355, %28, %cst_62 {dimension_numbers = #tpu.dot_dimension_numbers<[1], [0], [0], [1], [0, 0, 1, 1], [], []>} : vector<5x16xf32>, vector<16x32xf32>, vector<5x32xf32> -> vector<5x32xf32>
    %357 = vector.extract_strided_slice %356 {offsets = [0, 0], sizes = [5, 16], strides = [1, 1]} : vector<5x32xf32> to vector<5x16xf32>
    %358 = arith.mulf %357, %357 : vector<5x16xf32>
    %359 = vector.extract_strided_slice %356 {offsets = [0, 16], sizes = [5, 16], strides = [1, 1]} : vector<5x32xf32> to vector<5x16xf32>
    %360 = arith.mulf %359, %359 : vector<5x16xf32>
    %361 = arith.addf %358, %360 : vector<5x16xf32>
    %cst_63 = arith.constant dense<0.000000e+00> : vector<5x4xf32>
    %362 = tpu.matmul %361, %29, %cst_63 {dimension_numbers = #tpu.dot_dimension_numbers<[1], [0], [0], [1], [0, 0, 1, 1], [], []>} : vector<5x16xf32>, vector<16x4xf32>, vector<5x4xf32> -> vector<5x4xf32>
    %363 = arith.negf %362 : vector<5x4xf32>
    %364 = math.exp %363 : vector<5x4xf32>
    %cst_64 = arith.constant 1.000000e+00 : f32
    %365 = vector.broadcast %cst_64 : f32 to vector<5x4xf32>
    %366 = arith.addf %365, %364 : vector<5x4xf32>
    %367 = arith.divf %365, %366 : vector<5x4xf32>
    %368 = vector.extract_strided_slice %362 {offsets = [0, 3], sizes = [5, 1], strides = [1, 1]} : vector<5x4xf32> to vector<5x1xf32>
    %369 = math.tanh %368 : vector<5x1xf32>
    %370 = vector.extract_strided_slice %367 {offsets = [0, 1], sizes = [5, 1], strides = [1, 1]} : vector<5x4xf32> to vector<5x1xf32>
    %371 = vector.broadcast %370 : vector<5x1xf32> to vector<5x8xf32>
    %372 = arith.mulf %371, %305 : vector<5x8xf32>
    %373 = vector.extract_strided_slice %367 {offsets = [0, 0], sizes = [5, 1], strides = [1, 1]} : vector<5x4xf32> to vector<5x1xf32>
    %374 = arith.mulf %373, %369 : vector<5x1xf32>
    %375 = vector.broadcast %374 : vector<5x1xf32> to vector<5x8xf32>
    %376 = arith.addf %372, %375 : vector<5x8xf32>
    %377 = vector.extract_strided_slice %367 {offsets = [0, 2], sizes = [5, 1], strides = [1, 1]} : vector<5x4xf32> to vector<5x1xf32>
    %378 = math.tanh %376 : vector<5x8xf32>
    %379 = vector.broadcast %377 : vector<5x1xf32> to vector<5x8xf32>
    %380 = arith.mulf %379, %378 : vector<5x8xf32>
    %c4 = arith.constant 4 : index
    %c0_65 = arith.constant 0 : index
    %c0_66 = arith.constant 0 : index
    %381 = vector.load %arg8[%c4, %c0_65, %c0_66] : memref<7x5x8xf32, #tpu.memory_space<vmem>>, vector<1x5x8xf32>
    %382 = vector.shape_cast %381 : vector<1x5x8xf32> to vector<5x8xf32>
    %383 = vector.shape_cast %380 : vector<5x8xf32> to vector<1x5x8xf32>
    tpu.vector_store %arg8[%c4, %c0_65, %c0_66], %383 {strides = array<i32>} : memref<7x5x8xf32, #tpu.memory_space<vmem>>, vector<1x5x8xf32>,
    %c4_67 = arith.constant 4 : index
    %c0_68 = arith.constant 0 : index
    %c0_69 = arith.constant 0 : index
    %384 = vector.load %arg9[%c4_67, %c0_68, %c0_69] : memref<7x5x8xf32, #tpu.memory_space<vmem>>, vector<1x5x8xf32>
    %385 = vector.shape_cast %384 : vector<1x5x8xf32> to vector<5x8xf32>
    %386 = vector.shape_cast %376 : vector<5x8xf32> to vector<1x5x8xf32>
    tpu.vector_store %arg9[%c4_67, %c0_68, %c0_69], %386 {strides = array<i32>} : memref<7x5x8xf32, #tpu.memory_space<vmem>>, vector<1x5x8xf32>,
    %387 = vector.extract_strided_slice %5 {offsets = [25, 0], sizes = [5, 4], strides = [1, 1]} : vector<35x4xf32> to vector<5x4xf32>
    %cst_70 = arith.constant dense<0.000000e+00> : vector<5x4xf32>
    %388 = tpu.matmul %380, %27, %cst_70 {dimension_numbers = #tpu.dot_dimension_numbers<[1], [0], [0], [1], [0, 0, 1, 1], [], []>} : vector<5x8xf32>, vector<8x4xf32>, vector<5x4xf32> -> vector<5x4xf32>
    %389 = arith.addf %387, %388 : vector<5x4xf32>
    %390 = math.tanh %389 : vector<5x4xf32>
    %cst_71 = arith.constant 1.57079637 : f32
    %391 = vector.broadcast %cst_71 : f32 to vector<5x4xf32>
    %392 = arith.mulf %391, %390 : vector<5x4xf32>
    %393 = math.cos %392 : vector<5x4xf32>
    %394 = math.sin %392 : vector<5x4xf32>
    %395 = arith.subf %394, %393 : vector<5x4xf32>
    %396 = vector.extract_strided_slice %393 {offsets = [0, 0], sizes = [5, 1], strides = [1, 1]} : vector<5x4xf32> to vector<5x1xf32>
    %397 = vector.extract_strided_slice %395 {offsets = [0, 0], sizes = [5, 1], strides = [1, 1]} : vector<5x4xf32> to vector<5x1xf32>
    %398 = vector.broadcast %397 : vector<5x1xf32> to vector<5x16xf32>
    %399 = vector.broadcast %11 : vector<1x16xf32> to vector<5x16xf32>
    %400 = arith.mulf %398, %399 : vector<5x16xf32>
    %401 = vector.broadcast %396 : vector<5x1xf32> to vector<5x16xf32>
    %402 = arith.addf %401, %400 : vector<5x16xf32>
    %403 = vector.extract_strided_slice %393 {offsets = [0, 1], sizes = [5, 1], strides = [1, 1]} : vector<5x4xf32> to vector<5x1xf32>
    %404 = vector.extract_strided_slice %395 {offsets = [0, 1], sizes = [5, 1], strides = [1, 1]} : vector<5x4xf32> to vector<5x1xf32>
    %405 = vector.broadcast %404 : vector<5x1xf32> to vector<5x16xf32>
    %406 = vector.broadcast %16 : vector<1x16xf32> to vector<5x16xf32>
    %407 = arith.mulf %405, %406 : vector<5x16xf32>
    %408 = vector.broadcast %403 : vector<5x1xf32> to vector<5x16xf32>
    %409 = arith.addf %408, %407 : vector<5x16xf32>
    %410 = arith.mulf %402, %409 : vector<5x16xf32>
    %411 = vector.extract_strided_slice %393 {offsets = [0, 2], sizes = [5, 1], strides = [1, 1]} : vector<5x4xf32> to vector<5x1xf32>
    %412 = vector.extract_strided_slice %395 {offsets = [0, 2], sizes = [5, 1], strides = [1, 1]} : vector<5x4xf32> to vector<5x1xf32>
    %413 = vector.broadcast %412 : vector<5x1xf32> to vector<5x16xf32>
    %414 = vector.broadcast %21 : vector<1x16xf32> to vector<5x16xf32>
    %415 = arith.mulf %413, %414 : vector<5x16xf32>
    %416 = vector.broadcast %411 : vector<5x1xf32> to vector<5x16xf32>
    %417 = arith.addf %416, %415 : vector<5x16xf32>
    %418 = arith.mulf %410, %417 : vector<5x16xf32>
    %419 = vector.extract_strided_slice %393 {offsets = [0, 3], sizes = [5, 1], strides = [1, 1]} : vector<5x4xf32> to vector<5x1xf32>
    %420 = vector.extract_strided_slice %395 {offsets = [0, 3], sizes = [5, 1], strides = [1, 1]} : vector<5x4xf32> to vector<5x1xf32>
    %421 = vector.broadcast %420 : vector<5x1xf32> to vector<5x16xf32>
    %422 = vector.broadcast %26 : vector<1x16xf32> to vector<5x16xf32>
    %423 = arith.mulf %421, %422 : vector<5x16xf32>
    %424 = vector.broadcast %419 : vector<5x1xf32> to vector<5x16xf32>
    %425 = arith.addf %424, %423 : vector<5x16xf32>
    %426 = arith.mulf %418, %425 : vector<5x16xf32>
    %cst_72 = arith.constant dense<0.000000e+00> : vector<5x32xf32>
    %427 = tpu.matmul %426, %28, %cst_72 {dimension_numbers = #tpu.dot_dimension_numbers<[1], [0], [0], [1], [0, 0, 1, 1], [], []>} : vector<5x16xf32>, vector<16x32xf32>, vector<5x32xf32> -> vector<5x32xf32>
    %428 = vector.extract_strided_slice %427 {offsets = [0, 0], sizes = [5, 16], strides = [1, 1]} : vector<5x32xf32> to vector<5x16xf32>
    %429 = arith.mulf %428, %428 : vector<5x16xf32>
    %430 = vector.extract_strided_slice %427 {offsets = [0, 16], sizes = [5, 16], strides = [1, 1]} : vector<5x32xf32> to vector<5x16xf32>
    %431 = arith.mulf %430, %430 : vector<5x16xf32>
    %432 = arith.addf %429, %431 : vector<5x16xf32>
    %cst_73 = arith.constant dense<0.000000e+00> : vector<5x4xf32>
    %433 = tpu.matmul %432, %29, %cst_73 {dimension_numbers = #tpu.dot_dimension_numbers<[1], [0], [0], [1], [0, 0, 1, 1], [], []>} : vector<5x16xf32>, vector<16x4xf32>, vector<5x4xf32> -> vector<5x4xf32>
    %434 = arith.negf %433 : vector<5x4xf32>
    %435 = math.exp %434 : vector<5x4xf32>
    %cst_74 = arith.constant 1.000000e+00 : f32
    %436 = vector.broadcast %cst_74 : f32 to vector<5x4xf32>
    %437 = arith.addf %436, %435 : vector<5x4xf32>
    %438 = arith.divf %436, %437 : vector<5x4xf32>
    %439 = vector.extract_strided_slice %433 {offsets = [0, 3], sizes = [5, 1], strides = [1, 1]} : vector<5x4xf32> to vector<5x1xf32>
    %440 = math.tanh %439 : vector<5x1xf32>
    %441 = vector.extract_strided_slice %438 {offsets = [0, 1], sizes = [5, 1], strides = [1, 1]} : vector<5x4xf32> to vector<5x1xf32>
    %442 = vector.broadcast %441 : vector<5x1xf32> to vector<5x8xf32>
    %443 = arith.mulf %442, %376 : vector<5x8xf32>
    %444 = vector.extract_strided_slice %438 {offsets = [0, 0], sizes = [5, 1], strides = [1, 1]} : vector<5x4xf32> to vector<5x1xf32>
    %445 = arith.mulf %444, %440 : vector<5x1xf32>
    %446 = vector.broadcast %445 : vector<5x1xf32> to vector<5x8xf32>
    %447 = arith.addf %443, %446 : vector<5x8xf32>
    %448 = vector.extract_strided_slice %438 {offsets = [0, 2], sizes = [5, 1], strides = [1, 1]} : vector<5x4xf32> to vector<5x1xf32>
    %449 = math.tanh %447 : vector<5x8xf32>
    %450 = vector.broadcast %448 : vector<5x1xf32> to vector<5x8xf32>
    %451 = arith.mulf %450, %449 : vector<5x8xf32>
    %c5 = arith.constant 5 : index
    %c0_75 = arith.constant 0 : index
    %c0_76 = arith.constant 0 : index
    %452 = vector.load %arg8[%c5, %c0_75, %c0_76] : memref<7x5x8xf32, #tpu.memory_space<vmem>>, vector<1x5x8xf32>
    %453 = vector.shape_cast %452 : vector<1x5x8xf32> to vector<5x8xf32>
    %454 = vector.shape_cast %451 : vector<5x8xf32> to vector<1x5x8xf32>
    tpu.vector_store %arg8[%c5, %c0_75, %c0_76], %454 {strides = array<i32>} : memref<7x5x8xf32, #tpu.memory_space<vmem>>, vector<1x5x8xf32>,
    %c5_77 = arith.constant 5 : index
    %c0_78 = arith.constant 0 : index
    %c0_79 = arith.constant 0 : index
    %455 = vector.load %arg9[%c5_77, %c0_78, %c0_79] : memref<7x5x8xf32, #tpu.memory_space<vmem>>, vector<1x5x8xf32>
    %456 = vector.shape_cast %455 : vector<1x5x8xf32> to vector<5x8xf32>
    %457 = vector.shape_cast %447 : vector<5x8xf32> to vector<1x5x8xf32>
    tpu.vector_store %arg9[%c5_77, %c0_78, %c0_79], %457 {strides = array<i32>} : memref<7x5x8xf32, #tpu.memory_space<vmem>>, vector<1x5x8xf32>,
    %458 = vector.extract_strided_slice %5 {offsets = [30, 0], sizes = [5, 4], strides = [1, 1]} : vector<35x4xf32> to vector<5x4xf32>
    %cst_80 = arith.constant dense<0.000000e+00> : vector<5x4xf32>
    %459 = tpu.matmul %451, %27, %cst_80 {dimension_numbers = #tpu.dot_dimension_numbers<[1], [0], [0], [1], [0, 0, 1, 1], [], []>} : vector<5x8xf32>, vector<8x4xf32>, vector<5x4xf32> -> vector<5x4xf32>
    %460 = arith.addf %458, %459 : vector<5x4xf32>
    %461 = math.tanh %460 : vector<5x4xf32>
    %cst_81 = arith.constant 1.57079637 : f32
    %462 = vector.broadcast %cst_81 : f32 to vector<5x4xf32>
    %463 = arith.mulf %462, %461 : vector<5x4xf32>
    %464 = math.cos %463 : vector<5x4xf32>
    %465 = math.sin %463 : vector<5x4xf32>
    %466 = arith.subf %465, %464 : vector<5x4xf32>
    %467 = vector.extract_strided_slice %464 {offsets = [0, 0], sizes = [5, 1], strides = [1, 1]} : vector<5x4xf32> to vector<5x1xf32>
    %468 = vector.extract_strided_slice %466 {offsets = [0, 0], sizes = [5, 1], strides = [1, 1]} : vector<5x4xf32> to vector<5x1xf32>
    %469 = vector.broadcast %468 : vector<5x1xf32> to vector<5x16xf32>
    %470 = vector.broadcast %11 : vector<1x16xf32> to vector<5x16xf32>
    %471 = arith.mulf %469, %470 : vector<5x16xf32>
    %472 = vector.broadcast %467 : vector<5x1xf32> to vector<5x16xf32>
    %473 = arith.addf %472, %471 : vector<5x16xf32>
    %474 = vector.extract_strided_slice %464 {offsets = [0, 1], sizes = [5, 1], strides = [1, 1]} : vector<5x4xf32> to vector<5x1xf32>
    %475 = vector.extract_strided_slice %466 {offsets = [0, 1], sizes = [5, 1], strides = [1, 1]} : vector<5x4xf32> to vector<5x1xf32>
    %476 = vector.broadcast %475 : vector<5x1xf32> to vector<5x16xf32>
    %477 = vector.broadcast %16 : vector<1x16xf32> to vector<5x16xf32>
    %478 = arith.mulf %476, %477 : vector<5x16xf32>
    %479 = vector.broadcast %474 : vector<5x1xf32> to vector<5x16xf32>
    %480 = arith.addf %479, %478 : vector<5x16xf32>
    %481 = arith.mulf %473, %480 : vector<5x16xf32>
    %482 = vector.extract_strided_slice %464 {offsets = [0, 2], sizes = [5, 1], strides = [1, 1]} : vector<5x4xf32> to vector<5x1xf32>
    %483 = vector.extract_strided_slice %466 {offsets = [0, 2], sizes = [5, 1], strides = [1, 1]} : vector<5x4xf32> to vector<5x1xf32>
    %484 = vector.broadcast %483 : vector<5x1xf32> to vector<5x16xf32>
    %485 = vector.broadcast %21 : vector<1x16xf32> to vector<5x16xf32>
    %486 = arith.mulf %484, %485 : vector<5x16xf32>
    %487 = vector.broadcast %482 : vector<5x1xf32> to vector<5x16xf32>
    %488 = arith.addf %487, %486 : vector<5x16xf32>
    %489 = arith.mulf %481, %488 : vector<5x16xf32>
    %490 = vector.extract_strided_slice %464 {offsets = [0, 3], sizes = [5, 1], strides = [1, 1]} : vector<5x4xf32> to vector<5x1xf32>
    %491 = vector.extract_strided_slice %466 {offsets = [0, 3], sizes = [5, 1], strides = [1, 1]} : vector<5x4xf32> to vector<5x1xf32>
    %492 = vector.broadcast %491 : vector<5x1xf32> to vector<5x16xf32>
    %493 = vector.broadcast %26 : vector<1x16xf32> to vector<5x16xf32>
    %494 = arith.mulf %492, %493 : vector<5x16xf32>
    %495 = vector.broadcast %490 : vector<5x1xf32> to vector<5x16xf32>
    %496 = arith.addf %495, %494 : vector<5x16xf32>
    %497 = arith.mulf %489, %496 : vector<5x16xf32>
    %cst_82 = arith.constant dense<0.000000e+00> : vector<5x32xf32>
    %498 = tpu.matmul %497, %28, %cst_82 {dimension_numbers = #tpu.dot_dimension_numbers<[1], [0], [0], [1], [0, 0, 1, 1], [], []>} : vector<5x16xf32>, vector<16x32xf32>, vector<5x32xf32> -> vector<5x32xf32>
    %499 = vector.extract_strided_slice %498 {offsets = [0, 0], sizes = [5, 16], strides = [1, 1]} : vector<5x32xf32> to vector<5x16xf32>
    %500 = arith.mulf %499, %499 : vector<5x16xf32>
    %501 = vector.extract_strided_slice %498 {offsets = [0, 16], sizes = [5, 16], strides = [1, 1]} : vector<5x32xf32> to vector<5x16xf32>
    %502 = arith.mulf %501, %501 : vector<5x16xf32>
    %503 = arith.addf %500, %502 : vector<5x16xf32>
    %cst_83 = arith.constant dense<0.000000e+00> : vector<5x4xf32>
    %504 = tpu.matmul %503, %29, %cst_83 {dimension_numbers = #tpu.dot_dimension_numbers<[1], [0], [0], [1], [0, 0, 1, 1], [], []>} : vector<5x16xf32>, vector<16x4xf32>, vector<5x4xf32> -> vector<5x4xf32>
    %505 = arith.negf %504 : vector<5x4xf32>
    %506 = math.exp %505 : vector<5x4xf32>
    %cst_84 = arith.constant 1.000000e+00 : f32
    %507 = vector.broadcast %cst_84 : f32 to vector<5x4xf32>
    %508 = arith.addf %507, %506 : vector<5x4xf32>
    %509 = arith.divf %507, %508 : vector<5x4xf32>
    %510 = vector.extract_strided_slice %504 {offsets = [0, 3], sizes = [5, 1], strides = [1, 1]} : vector<5x4xf32> to vector<5x1xf32>
    %511 = math.tanh %510 : vector<5x1xf32>
    %512 = vector.extract_strided_slice %509 {offsets = [0, 1], sizes = [5, 1], strides = [1, 1]} : vector<5x4xf32> to vector<5x1xf32>
    %513 = vector.broadcast %512 : vector<5x1xf32> to vector<5x8xf32>
    %514 = arith.mulf %513, %447 : vector<5x8xf32>
    %515 = vector.extract_strided_slice %509 {offsets = [0, 0], sizes = [5, 1], strides = [1, 1]} : vector<5x4xf32> to vector<5x1xf32>
    %516 = arith.mulf %515, %511 : vector<5x1xf32>
    %517 = vector.broadcast %516 : vector<5x1xf32> to vector<5x8xf32>
    %518 = arith.addf %514, %517 : vector<5x8xf32>
    %519 = vector.extract_strided_slice %509 {offsets = [0, 2], sizes = [5, 1], strides = [1, 1]} : vector<5x4xf32> to vector<5x1xf32>
    %520 = math.tanh %518 : vector<5x8xf32>
    %521 = vector.broadcast %519 : vector<5x1xf32> to vector<5x8xf32>
    %522 = arith.mulf %521, %520 : vector<5x8xf32>
    %c6 = arith.constant 6 : index
    %c0_85 = arith.constant 0 : index
    %c0_86 = arith.constant 0 : index
    %523 = vector.load %arg8[%c6, %c0_85, %c0_86] : memref<7x5x8xf32, #tpu.memory_space<vmem>>, vector<1x5x8xf32>
    %524 = vector.shape_cast %523 : vector<1x5x8xf32> to vector<5x8xf32>
    %525 = vector.shape_cast %522 : vector<5x8xf32> to vector<1x5x8xf32>
    tpu.vector_store %arg8[%c6, %c0_85, %c0_86], %525 {strides = array<i32>} : memref<7x5x8xf32, #tpu.memory_space<vmem>>, vector<1x5x8xf32>,
    %c6_87 = arith.constant 6 : index
    %c0_88 = arith.constant 0 : index
    %c0_89 = arith.constant 0 : index
    %526 = vector.load %arg9[%c6_87, %c0_88, %c0_89] : memref<7x5x8xf32, #tpu.memory_space<vmem>>, vector<1x5x8xf32>
    %527 = vector.shape_cast %526 : vector<1x5x8xf32> to vector<5x8xf32>
    %528 = vector.shape_cast %518 : vector<5x8xf32> to vector<1x5x8xf32>
    tpu.vector_store %arg9[%c6_87, %c0_88, %c0_89], %528 {strides = array<i32>} : memref<7x5x8xf32, #tpu.memory_space<vmem>>, vector<1x5x8xf32>,
    return
  }
}

</mosaic_0001>

<llo_original>
// kernel: qlstm_forward_seq.1
$region0: #{qlstm_forward_seq.1}
  #allocation0 [shape = 'u32[]', space=smem, size = 0x4, offset = 0x4, fixed_abs, tag = 'smem constant byte address 0x4 - core index']
  #allocation1 [shape = 'u32[144,128]{1,0:T(1,128)}', space=vmem, size = 0x12000, scoped, tag = 'internal scratch']
  %s0 = inlined_call_operand.vmem [shape: f32[35,10], index: 0, kind: input, shape index: {}]
  %s1 = inlined_call_operand.vmem [shape: f32[5,8], index: 1, kind: input, shape index: {}]
  %s2 = inlined_call_operand.vmem [shape: f32[5,8], index: 2, kind: input, shape index: {}]
  %s3 = inlined_call_operand.vmem [shape: f32[10,4], index: 3, kind: input, shape index: {}]
  %s4 = inlined_call_operand.vmem [shape: f32[8,4], index: 4, kind: input, shape index: {}]
  %s5 = inlined_call_operand.vmem [shape: f32[1,4], index: 5, kind: input, shape index: {}]
  %s6 = inlined_call_operand.vmem [shape: f32[16,32], index: 6, kind: input, shape index: {}]
  %s7 = inlined_call_operand.vmem [shape: f32[16,4], index: 7, kind: input, shape index: {}]
  %s8 = inlined_call_operand.vmem [shape: f32[7,5,8], index: 8, kind: output, shape index: {0}]
  %s9 = inlined_call_operand.vmem [shape: f32[7,5,8], index: 9, kind: output, shape index: {1}]
  %10 = xla_tuple %s8, %s9
  %s11 = sld [smem:[#allocation0]]
  $region50: #{qlstm_forward_seq.1} parent=0
    _
  %s13 = ssub.s32 1, %s11
  %s14 = scalar_select 0, %s13, %s11
  // Predicated region
  $region2: #{qlstm_forward_seq.1} parent=0 // pred_check
    _
  $region3: #{qlstm_forward_seq.1} parent=0 // pred_check_branch
    %16 = sbr.rel (0) target = $region5
  $region4: #{qlstm_forward_seq.1} parent=0 // pred_region
    _
  $region5: #{qlstm_forward_seq.1} parent=0 // pred_fallthru
    _
  // Predicated region
  $region6: #{qlstm_forward_seq.1} parent=0 // pred_check
    _
  $region7: #{qlstm_forward_seq.1} parent=0 // pred_check_branch
    %18 = sbr.rel (0) target = $region9
  $region8: #{qlstm_forward_seq.1} parent=0 // pred_region
    _
  $region9: #{qlstm_forward_seq.1} parent=0 // pred_fallthru
    _
  // Predicated region
  $region10: #{qlstm_forward_seq.1} parent=0 // pred_check
    _
  $region11: #{qlstm_forward_seq.1} parent=0 // pred_check_branch
    %20 = sbr.rel (0) target = $region13
  $region12: #{qlstm_forward_seq.1} parent=0 // pred_region
    _
  $region13: #{qlstm_forward_seq.1} parent=0 // pred_fallthru
    _
  // Predicated region
  $region14: #{qlstm_forward_seq.1} parent=0 // pred_check
    _
  $region15: #{qlstm_forward_seq.1} parent=0 // pred_check_branch
    %22 = sbr.rel (0) target = $region17
  $region16: #{qlstm_forward_seq.1} parent=0 // pred_region
    _
  $region17: #{qlstm_forward_seq.1} parent=0 // pred_fallthru
    _
  // Predicated region
  $region18: #{qlstm_forward_seq.1} parent=0 // pred_check
    _
  $region19: #{qlstm_forward_seq.1} parent=0 // pred_check_branch
    %24 = sbr.rel (0) target = $region21
  $region20: #{qlstm_forward_seq.1} parent=0 // pred_region
    _
  $region21: #{qlstm_forward_seq.1} parent=0 // pred_fallthru
    _
  // Predicated region
  $region22: #{qlstm_forward_seq.1} parent=0 // pred_check
    _
  $region23: #{qlstm_forward_seq.1} parent=0 // pred_check_branch
    %26 = sbr.rel (0) target = $region25
  $region24: #{qlstm_forward_seq.1} parent=0 // pred_region
    _
  $region25: #{qlstm_forward_seq.1} parent=0 // pred_fallthru
    _
  // Predicated region
  $region26: #{qlstm_forward_seq.1} parent=0 // pred_check
    _
  $region27: #{qlstm_forward_seq.1} parent=0 // pred_check_branch
    %28 = sbr.rel (0) target = $region29
  $region28: #{qlstm_forward_seq.1} parent=0 // pred_region
    _
  $region29: #{qlstm_forward_seq.1} parent=0 // pred_fallthru
    _
  // Predicated region
  $region30: #{qlstm_forward_seq.1} parent=0 // pred_check
    _
  $region31: #{qlstm_forward_seq.1} parent=0 // pred_check_branch
    %30 = sbr.rel (0) target = $region33
  $region32: #{qlstm_forward_seq.1} parent=0 // pred_region
    _
  $region33: #{qlstm_forward_seq.1} parent=0 // pred_fallthru
    _
  %v31 = vld [vmem:[%s0] sm:$0xff]
  %v32 = vld [vmem:[%s0 + $0x8] sm:$0xff]
  %v33 = vld [vmem:[%s0 + $0x10] sm:$0xff]
  %v34 = vld [vmem:[%s0 + $0x18] sm:$0xff]
  %v35 = vld [vmem:[%s0 + $0x20] sm:$0x7]
  %v36 = vld [vmem:[%s3] sm:$0xff]
  %v37 = vld [vmem:[%s3 + $0x8] sm:$0x3]
  %v38 = vld [vmem:[%s5] sm:$0x1]
  %v40 = vlaneseq
  %v41 = vshrl.u32 %v40, 7
  %v42 = vsub.s32 0, %v41
  %v43 = vrot.slane %v38, %v42
  %vm45 = vcmask 80896
  %v47 = vsel %vm45, %v31, 0
  %v50 = vsel %vm45, %v32, 0
  %v53 = vsel %vm45, %v33, 0
  %v56 = vsel %vm45, %v34, 0
  %v59 = vsel %vm45, %v35, 0
  %vm61 = vcmask 1041408
  %v63 = vsel %vm61, %v37, 0
  %65 = vmatprep.subr.mxu0 0.0
  %66 = vmatpush1.msra.mxu0 %v36
  %67 = vmatprep.subr.mxu0 0.0
  %68 = vmatpush1.msra.mxu0 %v63
  %69 = vmatprep.subr.mxu0 0.0
  %70 = vmatpush1.msra.mxu0 0.0
  %71 = vmatprep.subr.mxu0 0.0
  %72 = vmatpush1.msra.mxu0 0.0
  %73 = vmatprep.subr.mxu0 0.0
  %74 = vmatpush1.msra.mxu0 0.0
  %75 = vmatprep.subr.mxu0 0.0
  %76 = vmatpush1.msra.mxu0 0.0
  %77 = vmatprep.subr.mxu0 0.0
  %78 = vmatpush1.msra.mxu0 0.0
  %79 = vmatprep.subr.mxu0 0.0
  %80 = vmatpush1.msra.mxu0 0.0
  %81 = vmatprep.subr.mxu0 0.0
  %82 = vmatpush1.msra.mxu0 0.0
  %83 = vmatprep.subr.mxu0 0.0
  %84 = vmatpush1.msra.mxu0 0.0
  %85 = vmatprep.subr.mxu0 0.0
  %86 = vmatpush1.msra.mxu0 0.0
  %87 = vmatprep.subr.mxu0 0.0
  %88 = vmatpush1.msra.mxu0 0.0
  %89 = vmatprep.subr.mxu0 0.0
  %90 = vmatpush1.msra.mxu0 0.0
  %91 = vmatprep.subr.mxu0 0.0
  %92 = vmatpush1.msra.mxu0 0.0
  %93 = vmatprep.subr.mxu0 0.0
  %94 = vmatpush1.msra.mxu0 0.0
  %95 = vmatprep.subr.mxu0 0.0
  %96 = vmatpush1.msra.mxu0 0.0
  %97 = vmatprep.subr.mxu0 0.0
  %98 = vmatpush1.msra.mxu0 0.0
  %99 = vmatprep.subr.mxu0 0.0
  %100 = vmatpush1.msra.mxu0 0.0
  %101 = vmatprep.subr.mxu0 0.0
  %102 = vmatpush1.msra.mxu0 0.0
  %103 = vmatprep.subr.mxu0 0.0
  %104 = vmatpush1.msra.mxu0 0.0
  %105 = vmatprep.subr.mxu0 0.0
  %106 = vmatpush1.msra.mxu0 0.0
  %107 = vmatprep.subr.mxu0 0.0
  %108 = vmatpush1.msra.mxu0 0.0
  %109 = vmatprep.subr.mxu0 0.0
  %110 = vmatpush1.msra.mxu0 0.0
  %111 = vmatprep.subr.mxu0 0.0
  %112 = vmatpush1.msra.mxu0 0.0
  %113 = vmatprep.subr.mxu0 0.0
  %114 = vmatpush1.msra.mxu0 0.0
  %115 = vmatprep.subr.mxu0 0.0
  %116 = vmatpush1.msra.mxu0 0.0
  %117 = vmatprep.subr.mxu0 0.0
  %118 = vmatpush1.msra.mxu0 0.0
  %119 = vmatprep.subr.mxu0 0.0
  %120 = vmatpush1.msra.mxu0 0.0
  %121 = vmatprep.subr.mxu0 0.0
  %122 = vmatpush1.msra.mxu0 0.0
  %123 = vmatprep.subr.mxu0 0.0
  %124 = vmatpush1.msra.mxu0 0.0
  %125 = vmatprep.subr.mxu0 0.0
  %126 = vmatpush1.msra.mxu0 0.0
  %127 = vmatprep.subr.mxu0 0.0
  %128 = vmatpush1.msra.mxu0 0.0
  %129 = vmatprep.mubr.f32.mxu0 0.0
  %130 = vmatmul.mubr.f32.gmra.mrb[0].mxu0 %v47
  %v131 = vpop.f32.mrb[0].mxu0
  %v132 = vadd.f32 %v43, %v131
  %v133 = vpop.f32.mrb[0].mxu0
  %134 = vmatprep.mubr.f32.mxu0 0.0
  %135 = vmatmul.mubr.f32.gmra.mrb[0].mxu0 %v50
  %v136 = vpop.f32.mrb[0].mxu0
  %v137 = vadd.f32 %v43, %v136
  %v138 = vpop.f32.mrb[0].mxu0
  %139 = vmatprep.mubr.f32.mxu0 0.0
  %140 = vmatmul.mubr.f32.gmra.mrb[0].mxu0 %v53
  %v141 = vpop.f32.mrb[0].mxu0
  %v142 = vadd.f32 %v43, %v141
  %v143 = vpop.f32.mrb[0].mxu0
  %144 = vmatprep.mubr.f32.mxu0 0.0
  %145 = vmatmul.mubr.f32.gmra.mrb[0].mxu0 %v56
  %v146 = vpop.f32.mrb[0].mxu0
  %v147 = vadd.f32 %v43, %v146
  %v148 = vpop.f32.mrb[0].mxu0
  %149 = vmatprep.mubr.f32.mxu0 0.0
  %150 = vmatmul.mubr.f32.gmra.mrb[0].mxu0 %v59
  %v151 = vpop.f32.mrb[0].mxu0
  %v152 = vadd.f32 %v43, %v151
  %v153 = vpop.f32.mrb[0].mxu0
  %154 = vdwg.mxu0
  %v155 = vlaneseq
  %v156 = vand.u32 %v155, 127
  %v157 = vshra.s32 %v156, 3
  %v158 = vand.u32 %v157, 1
  %v159 = vcvt.s32.f32 %v158
  %v160 = vshra.s32 %v156, 2
  %v161 = vand.u32 %v160, 1
  %v162 = vcvt.s32.f32 %v161
  %v163 = vshra.s32 %v156, 1
  %v164 = vand.u32 %v163, 1
  %v165 = vcvt.s32.f32 %v164
  %v166 = vand.u32 %v156, 1
  %v167 = vcvt.s32.f32 %v166
  %v168 = vld [vmem:[%s4] sm:$0xff]
  %v169 = vld [vmem:[%s6] sm:$0xff]
  %v170 = vld [vmem:[%s6 + $0x8] sm:$0xff]
  %v171 = vld [vmem:[%s7] sm:$0xff]
  %v172 = vld [vmem:[%s7 + $0x8] sm:$0xff]
  %v173 = vld [vmem:[%s1] sm:$0x1f]
  %v174 = vld [vmem:[%s2] sm:$0x1f]
  %vm175 = vcmask 64512
  %v177 = vsel %vm175, %v173, 0
  %179 = vmatprep.subr.mxu0 0.0
  %180 = vmatpush1.msra.mxu0 %v168
  %181 = vmatprep.subr.mxu0 0.0
  %182 = vmatpush1.msra.mxu0 0.0
  %183 = vmatprep.subr.mxu0 0.0
  %184 = vmatpush1.msra.mxu0 0.0
  %185 = vmatprep.subr.mxu0 0.0
  %186 = vmatpush1.msra.mxu0 0.0
  %187 = vmatprep.subr.mxu0 0.0
  %188 = vmatpush1.msra.mxu0 0.0
  %189 = vmatprep.subr.mxu0 0.0
  %190 = vmatpush1.msra.mxu0 0.0
  %191 = vmatprep.subr.mxu0 0.0
  %192 = vmatpush1.msra.mxu0 0.0
  %193 = vmatprep.subr.mxu0 0.0
  %194 = vmatpush1.msra.mxu0 0.0
  %195 = vmatprep.subr.mxu0 0.0
  %196 = vmatpush1.msra.mxu0 0.0
  %197 = vmatprep.subr.mxu0 0.0
  %198 = vmatpush1.msra.mxu0 0.0
  %199 = vmatprep.subr.mxu0 0.0
  %200 = vmatpush1.msra.mxu0 0.0
  %201 = vmatprep.subr.mxu0 0.0
  %202 = vmatpush1.msra.mxu0 0.0
  %203 = vmatprep.subr.mxu0 0.0
  %204 = vmatpush1.msra.mxu0 0.0
  %205 = vmatprep.subr.mxu0 0.0
  %206 = vmatpush1.msra.mxu0 0.0
  %207 = vmatprep.subr.mxu0 0.0
  %208 = vmatpush1.msra.mxu0 0.0
  %209 = vmatprep.subr.mxu0 0.0
  %210 = vmatpush1.msra.mxu0 0.0
  %211 = vmatprep.subr.mxu0 0.0
  %212 = vmatpush1.msra.mxu0 0.0
  %213 = vmatprep.subr.mxu0 0.0
  %214 = vmatpush1.msra.mxu0 0.0
  %215 = vmatprep.subr.mxu0 0.0
  %216 = vmatpush1.msra.mxu0 0.0
  %217 = vmatprep.subr.mxu0 0.0
  %218 = vmatpush1.msra.mxu0 0.0
  %219 = vmatprep.subr.mxu0 0.0
  %220 = vmatpush1.msra.mxu0 0.0
  %221 = vmatprep.subr.mxu0 0.0
  %222 = vmatpush1.msra.mxu0 0.0
  %223 = vmatprep.subr.mxu0 0.0
  %224 = vmatpush1.msra.mxu0 0.0
  %225 = vmatprep.subr.mxu0 0.0
  %226 = vmatpush1.msra.mxu0 0.0
  %227 = vmatprep.subr.mxu0 0.0
  %228 = vmatpush1.msra.mxu0 0.0
  %229 = vmatprep.subr.mxu0 0.0
  %230 = vmatpush1.msra.mxu0 0.0
  %231 = vmatprep.subr.mxu0 0.0
  %232 = vmatpush1.msra.mxu0 0.0
  %233 = vmatprep.subr.mxu0 0.0
  %234 = vmatpush1.msra.mxu0 0.0
  %235 = vmatprep.subr.mxu0 0.0
  %236 = vmatpush1.msra.mxu0 0.0
  %237 = vmatprep.subr.mxu0 0.0
  %238 = vmatpush1.msra.mxu0 0.0
  %239 = vmatprep.subr.mxu0 0.0
  %240 = vmatpush1.msra.mxu0 0.0
  %241 = vmatprep.subr.mxu0 0.0
  %242 = vmatpush1.msra.mxu0 0.0
  %243 = vmatprep.mubr.f32.mxu0 0.0
  %244 = vmatmul.mubr.f32.gmra.mrb[0].mxu0 %v177
  %v245 = vpop.f32.mrb[0].mxu0
  %v246 = vadd.f32 0.0, %v245
  %v247 = vpop.f32.mrb[0].mxu0
  %248 = vdwg.mxu0
  %v249 = vadd.f32 %v132, %v246
  %v250 = vtanh.pop %v249
  %v251 = vmul.f32 %v250, 1.5707964
  %v252 = vand.u32 2147483647, %v251
  %vm253 = vcmp.le.f32.partialorder %v252, 0.7853982
  %vm254 = vcmp.lt.s32.totalorder %v251, 0
  %v255 = vand.u32 %v251, 2139095040
  %v256 = vshrl.u32 %v255, 23
  %v257 = vsub.s32 %v256, 127
  %v258 = vand.u32 2147483647, %v251
  %v259 = vand.u32 %v258, 8388607
  %v260 = vor.u32 %v259, 8388608
  %v261 = vsub.s32 0, %v260
  %v262 = vadd.s32 %v257, 1
  %vm263 = vcmp.gt.s32.totalorder %v262, 0
  %v264 = vsel %vm263, %v262, 0
  %v265 = vshrl.u32 %v264, 5
  %v266 = vand.u32 %v264, 31
  %v267 = vsub.s32 32, %v266
  %v268 = vshrl.u32 683565275, %v267
  %v269 = vshll.u32 683565275, %v266
  %v270 = vshrl.u32 2475754826, %v267
  %v271 = vor.u32 %v269, %v270
  %v272 = vshll.u32 2475754826, %v266
  %v273 = vshrl.u32 2131351028, %v267
  %v274 = vor.u32 %v272, %v273
  %v275 = vshll.u32 2131351028, %v266
  %v276 = vshrl.u32 2102212464, %v267
  %v277 = vor.u32 %v275, %v276
  %v278 = vshll.u32 2102212464, %v266
  %v279 = vshrl.u32 920167782, %v267
  %v280 = vor.u32 %v278, %v279
  %v281 = vshll.u32 920167782, %v266
  %v282 = vshrl.u32 1326507024, %v267
  %v283 = vor.u32 %v281, %v282
  %vm284 = vcmp.lt.s32.totalorder %v265, 1
  %vm285 = vcmp.lt.s32.totalorder %v265, 2
  %vm286 = vcmp.lt.s32.totalorder %v265, 3
  %vm287 = vcmp.lt.s32.totalorder %v265, 4
  %v288 = vsel %vm284, %v268, %v271
  %v289 = vsel %vm287, %v277, 2102212464
  %v290 = vsel %vm286, %v274, %v289
  %v291 = vsel %vm285, %v288, %v290
  %v292 = vsel %vm284, %v271, %v274
  %v293 = vsel %vm287, %v280, 920167782
  %v294 = vsel %vm286, %v277, %v293
  %v295 = vsel %vm285, %v292, %v294
  %v296 = vsel %vm284, %v274, %v277
  %v297 = vsel %vm287, %v283, 1326507024
  %v298 = vsel %vm286, %v280, %v297
  %v299 = vsel %vm285, %v296, %v298
  %v300 = vshll.u32 %v260, 8
  %v301 = vmul.u32.u64.compose %v300, %v299
  %v302 = vextract.low.u32 %v301
  %v303 = vextract.high.u32 %v301
  %v304 = vmul.u32.u64.compose %v300, %v295
  %v305 = vextract.low.u32 %v304
  %v306 = vextract.high.u32 %v304
  %v307 = vmul.u32 %v300, %v291
  %v308 = vadd.s32 %v303, %v305
  %vm309 = vc.u32 %v303, %v305
  %v310 = vadd.s32 %v306, 1
  %v311 = vsel %vm309, %v310, %v306
  %v312 = vadd.s32 %v307, %v311
  %v313 = vadd.s32 %v312, 536870912
  %v314 = vshrl.u32 %v313, 30
  %v315 = vshll.u32 %v314, 30
  %v316 = vsub.s32 %v312, %v315
  %vm317 = vcmp.lt.s32.totalorder %v316, 0
  %v318 = vsub.s32 0, %v316
  %v319 = vsel %vm317, %v318, %v316
  %v320 = vclz %v319
  %v321 = vsub.s32 %v320, 2
  %vm322 = vcmp.gt.s32.totalorder 0, %v321
  %v323 = vsel %vm322, 0, %v321
  %v324 = vsub.s32 32, %v323
  %v325 = vshll.u32 %v316, %v323
  %v326 = vshrl.u32 %v308, %v324
  %v327 = vor.u32 %v325, %v326
  %v328 = vsub.s32 4294967266, %v323
  %v329 = vadd.s32 %v328, 127
  %v330 = vshll.u32 %v329, 23
  %v331 = vor.u32 4788187, %v330
  %v332 = vand.u32 2147483647, %v331
  %v334 = vcvt.s32.f32 %v327
  %v335 = vmul.f32 %v334, %v332
  %v336 = vxor.u32 %v335, 2147483648
  %v337 = vsel %vm254, %v336, %v335
  %v338 = vsub.s32 4, %v314
  %v339 = vsel %vm254, %v338, %v314
  %v340 = vsel %vm253, %v251, %v337
  %v341 = vsel %vm253, 0, %v339
  %v342 = vcosq.f32.pop %v340
  %v343 = vsinq.f32.pop %v340
  %vm344 = vweird.f32 %v251
  %v345 = vand.u32 %v341, 3
  %vm346 = vcmp.lt.s32.totalorder %v345, 2
  %vm347 = vcmp.eq.s32.totalorder %v345, 0
  %v348 = vxor.u32 %v343, 2147483648
  %v349 = vsel %vm347, %v342, %v348
  %vm350 = vcmp.eq.s32.totalorder %v345, 2
  %v351 = vxor.u32 %v342, 2147483648
  %v352 = vsel %vm350, %v351, %v343
  %v353 = vsel %vm346, %v349, %v352
  %v354 = vsel %vm344, nan, %v353
  %v355 = vand.u32 2147483647, %v251
  %vm356 = vcmp.le.f32.partialorder %v355, 0.7853982
  %vm357 = vcmp.lt.s32.totalorder %v251, 0
  %v358 = vand.u32 %v251, 2139095040
  %v359 = vshrl.u32 %v358, 23
  %v360 = vsub.s32 %v359, 127
  %v361 = vand.u32 2147483647, %v251
  %v362 = vand.u32 %v361, 8388607
  %v363 = vor.u32 %v362, 8388608
  %v364 = vsub.s32 0, %v363
  %v365 = vadd.s32 %v360, 1
  %vm366 = vcmp.gt.s32.totalorder %v365, 0
  %v367 = vsel %vm366, %v365, 0
  %v368 = vshrl.u32 %v367, 5
  %v369 = vand.u32 %v367, 31
  %v370 = vsub.s32 32, %v369
  %v371 = vshrl.u32 683565275, %v370
  %v372 = vshll.u32 683565275, %v369
  %v373 = vshrl.u32 2475754826, %v370
  %v374 = vor.u32 %v372, %v373
  %v375 = vshll.u32 2475754826, %v369
  %v376 = vshrl.u32 2131351028, %v370
  %v377 = vor.u32 %v375, %v376
  %v378 = vshll.u32 2131351028, %v369
  %v379 = vshrl.u32 2102212464, %v370
  %v380 = vor.u32 %v378, %v379
  %v381 = vshll.u32 2102212464, %v369
  %v382 = vshrl.u32 920167782, %v370
  %v383 = vor.u32 %v381, %v382
  %v384 = vshll.u32 920167782, %v369
  %v385 = vshrl.u32 1326507024, %v370
  %v386 = vor.u32 %v384, %v385
  %vm387 = vcmp.lt.s32.totalorder %v368, 1
  %vm388 = vcmp.lt.s32.totalorder %v368, 2
  %vm389 = vcmp.lt.s32.totalorder %v368, 3
  %vm390 = vcmp.lt.s32.totalorder %v368, 4
  %v391 = vsel %vm387, %v371, %v374
  %v392 = vsel %vm390, %v380, 2102212464
  %v393 = vsel %vm389, %v377, %v392
  %v394 = vsel %vm388, %v391, %v393
  %v395 = vsel %vm387, %v374, %v377
  %v396 = vsel %vm390, %v383, 920167782
  %v397 = vsel %vm389, %v380, %v396
  %v398 = vsel %vm388, %v395, %v397
  %v399 = vsel %vm387, %v377, %v380
  %v400 = vsel %vm390, %v386, 1326507024
  %v401 = vsel %vm389, %v383, %v400
  %v402 = vsel %vm388, %v399, %v401
  %v403 = vshll.u32 %v363, 8
  %v404 = vmul.u32.u64.compose %v403, %v402
  %v405 = vextract.low.u32 %v404
  %v406 = vextract.high.u32 %v404
  %v407 = vmul.u32.u64.compose %v403, %v398
  %v408 = vextract.low.u32 %v407
  %v409 = vextract.high.u32 %v407
  %v410 = vmul.u32 %v403, %v394
  %v411 = vadd.s32 %v406, %v408
  %vm412 = vc.u32 %v406, %v408
  %v413 = vadd.s32 %v409, 1
  %v414 = vsel %vm412, %v413, %v409
  %v415 = vadd.s32 %v410, %v414
  %v416 = vadd.s32 %v415, 536870912
  %v417 = vshrl.u32 %v416, 30
  %v418 = vshll.u32 %v417, 30
  %v419 = vsub.s32 %v415, %v418
  %vm420 = vcmp.lt.s32.totalorder %v419, 0
  %v421 = vsub.s32 0, %v419
  %v422 = vsel %vm420, %v421, %v419
  %v423 = vclz %v422
  %v424 = vsub.s32 %v423, 2
  %vm425 = vcmp.gt.s32.totalorder 0, %v424
  %v426 = vsel %vm425, 0, %v424
  %v427 = vsub.s32 32, %v426
  %v428 = vshll.u32 %v419, %v426
  %v429 = vshrl.u32 %v411, %v427
  %v430 = vor.u32 %v428, %v429
  %v431 = vsub.s32 4294967266, %v426
  %v432 = vadd.s32 %v431, 127
  %v433 = vshll.u32 %v432, 23
  %v434 = vor.u32 4788187, %v433
  %v435 = vand.u32 2147483647, %v434
  %v437 = vcvt.s32.f32 %v430
  %v438 = vmul.f32 %v437, %v435
  %v439 = vxor.u32 %v438, 2147483648
  %v440 = vsel %vm357, %v439, %v438
  %v441 = vsub.s32 4, %v417
  %v442 = vsel %vm357, %v441, %v417
  %v443 = vsel %vm356, %v251, %v440
  %v444 = vsel %vm356, 0, %v442
  %v445 = vcosq.f32.pop %v443
  %v446 = vsinq.f32.pop %v443
  %vm447 = vweird.f32 %v251
  %v448 = vadd.s32 %v444, 3
  %v449 = vand.u32 %v448, 3
  %vm450 = vcmp.lt.s32.totalorder %v449, 2
  %vm451 = vcmp.eq.s32.totalorder %v449, 0
  %v452 = vxor.u32 %v446, 2147483648
  %v453 = vsel %vm451, %v445, %v452
  %vm454 = vcmp.eq.s32.totalorder %v449, 2
  %v455 = vxor.u32 %v445, 2147483648
  %v456 = vsel %vm454, %v455, %v446
  %v457 = vsel %vm450, %v453, %v456
  %v458 = vsel %vm447, nan, %v457
  %v459 = vsub.f32 %v458, %v354
  %461 = vset.pattern.permute.xlu0 0
  %462 = vperm.xlu0 %461, %v459
  %v463 = vpop.permute.xlu0 %462
  %v465 = vmul.f32 %v463, %v159
  %467 = vset.pattern.permute.xlu0 0
  %468 = vperm.xlu0 %467, %v354
  %v469 = vpop.permute.xlu0 %468
  %v471 = vadd.f32 %v469, %v465
  %472 = vset.pattern.permute.xlu0 1
  %473 = vperm.xlu0 %472, %v459
  %v474 = vpop.permute.xlu0 %473
  %v476 = vmul.f32 %v474, %v162
  %477 = vset.pattern.permute.xlu0 1
  %478 = vperm.xlu0 %477, %v354
  %v479 = vpop.permute.xlu0 %478
  %v481 = vadd.f32 %v479, %v476
  %v482 = vmul.f32 %v471, %v481
  %483 = vset.pattern.permute.xlu0 2
  %484 = vperm.xlu0 %483, %v459
  %v485 = vpop.permute.xlu0 %484
  %v487 = vmul.f32 %v485, %v165
  %488 = vset.pattern.permute.xlu0 2
  %489 = vperm.xlu0 %488, %v354
  %v490 = vpop.permute.xlu0 %489
  %v492 = vadd.f32 %v490, %v487
  %v493 = vmul.f32 %v482, %v492
  %494 = vset.pattern.permute.xlu0 3
  %495 = vperm.xlu0 %494, %v459
  %v496 = vpop.permute.xlu0 %495
  %v498 = vmul.f32 %v496, %v167
  %499 = vset.pattern.permute.xlu0 3
  %500 = vperm.xlu0 %499, %v354
  %v501 = vpop.permute.xlu0 %500
  %v503 = vadd.f32 %v501, %v498
  %v504 = vmul.f32 %v493, %v503
  %vm505 = vcmask 130048
  %v507 = vsel %vm505, %v504, 0
  %509 = vmatprep.subr.mxu0 0.0
  %510 = vmatpush1.msra.mxu0 %v169
  %511 = vmatprep.subr.mxu0 0.0
  %512 = vmatpush1.msra.mxu0 %v170
  %513 = vmatprep.subr.mxu0 0.0
  %514 = vmatpush1.msra.mxu0 0.0
  %515 = vmatprep.subr.mxu0 0.0
  %516 = vmatpush1.msra.mxu0 0.0
  %517 = vmatprep.subr.mxu0 0.0
  %518 = vmatpush1.msra.mxu0 0.0
  %519 = vmatprep.subr.mxu0 0.0
  %520 = vmatpush1.msra.mxu0 0.0
  %521 = vmatprep.subr.mxu0 0.0
  %522 = vmatpush1.msra.mxu0 0.0
  %523 = vmatprep.subr.mxu0 0.0
  %524 = vmatpush1.msra.mxu0 0.0
  %525 = vmatprep.subr.mxu0 0.0
  %526 = vmatpush1.msra.mxu0 0.0
  %527 = vmatprep.subr.mxu0 0.0
  %528 = vmatpush1.msra.mxu0 0.0
  %529 = vmatprep.subr.mxu0 0.0
  %530 = vmatpush1.msra.mxu0 0.0
  %531 = vmatprep.subr.mxu0 0.0
  %532 = vmatpush1.msra.mxu0 0.0
  %533 = vmatprep.subr.mxu0 0.0
  %534 = vmatpush1.msra.mxu0 0.0
  %535 = vmatprep.subr.mxu0 0.0
  %536 = vmatpush1.msra.mxu0 0.0
  %537 = vmatprep.subr.mxu0 0.0
  %538 = vmatpush1.msra.mxu0 0.0
  %539 = vmatprep.subr.mxu0 0.0
  %540 = vmatpush1.msra.mxu0 0.0
  %541 = vmatprep.subr.mxu0 0.0
  %542 = vmatpush1.msra.mxu0 0.0
  %543 = vmatprep.subr.mxu0 0.0
  %544 = vmatpush1.msra.mxu0 0.0
  %545 = vmatprep.subr.mxu0 0.0
  %546 = vmatpush1.msra.mxu0 0.0
  %547 = vmatprep.subr.mxu0 0.0
  %548 = vmatpush1.msra.mxu0 0.0
  %549 = vmatprep.subr.mxu0 0.0
  %550 = vmatpush1.msra.mxu0 0.0
  %551 = vmatprep.subr.mxu0 0.0
  %552 = vmatpush1.msra.mxu0 0.0
  %553 = vmatprep.subr.mxu0 0.0
  %554 = vmatpush1.msra.mxu0 0.0
  %555 = vmatprep.subr.mxu0 0.0
  %556 = vmatpush1.msra.mxu0 0.0
  %557 = vmatprep.subr.mxu0 0.0
  %558 = vmatpush1.msra.mxu0 0.0
  %559 = vmatprep.subr.mxu0 0.0
  %560 = vmatpush1.msra.mxu0 0.0
  %561 = vmatprep.subr.mxu0 0.0
  %562 = vmatpush1.msra.mxu0 0.0
  %563 = vmatprep.subr.mxu0 0.0
  %564 = vmatpush1.msra.mxu0 0.0
  %565 = vmatprep.subr.mxu0 0.0
  %566 = vmatpush1.msra.mxu0 0.0
  %567 = vmatprep.subr.mxu0 0.0
  %568 = vmatpush1.msra.mxu0 0.0
  %569 = vmatprep.subr.mxu0 0.0
  %570 = vmatpush1.msra.mxu0 0.0
  %571 = vmatprep.subr.mxu0 0.0
  %572 = vmatpush1.msra.mxu0 0.0
  %573 = vmatprep.mubr.f32.mxu0 0.0
  %574 = vmatmul.mubr.f32.gmra.mrb[0].mxu0 %v507
  %v575 = vpop.f32.mrb[0].mxu0
  %v576 = vadd.f32 0.0, %v575
  %v577 = vpop.f32.mrb[0].mxu0
  %578 = vdwg.mxu0
  %v579 = vmul.f32 %v576, %v576
  %581 = vrot.lane.b32.xlu0 %v579, 112
  %v582 = vpop.permute.xlu0 %581
  %v584 = vadd.f32 %v579, %v582
  %v586 = vsel %vm505, %v584, 0
  %588 = vmatprep.subr.mxu0 0.0
  %589 = vmatpush1.msra.mxu0 %v171
  %590 = vmatprep.subr.mxu0 0.0
  %591 = vmatpush1.msra.mxu0 %v172
  %592 = vmatprep.subr.mxu0 0.0
  %593 = vmatpush1.msra.mxu0 0.0
  %594 = vmatprep.subr.mxu0 0.0
  %595 = vmatpush1.msra.mxu0 0.0
  %596 = vmatprep.subr.mxu0 0.0
  %597 = vmatpush1.msra.mxu0 0.0
  %598 = vmatprep.subr.mxu0 0.0
  %599 = vmatpush1.msra.mxu0 0.0
  %600 = vmatprep.subr.mxu0 0.0
  %601 = vmatpush1.msra.mxu0 0.0
  %602 = vmatprep.subr.mxu0 0.0
  %603 = vmatpush1.msra.mxu0 0.0
  %604 = vmatprep.subr.mxu0 0.0
  %605 = vmatpush1.msra.mxu0 0.0
  %606 = vmatprep.subr.mxu0 0.0
  %607 = vmatpush1.msra.mxu0 0.0
  %608 = vmatprep.subr.mxu0 0.0
  %609 = vmatpush1.msra.mxu0 0.0
  %610 = vmatprep.subr.mxu0 0.0
  %611 = vmatpush1.msra.mxu0 0.0
  %612 = vmatprep.subr.mxu0 0.0
  %613 = vmatpush1.msra.mxu0 0.0
  %614 = vmatprep.subr.mxu0 0.0
  %615 = vmatpush1.msra.mxu0 0.0
  %616 = vmatprep.subr.mxu0 0.0
  %617 = vmatpush1.msra.mxu0 0.0
  %618 = vmatprep.subr.mxu0 0.0
  %619 = vmatpush1.msra.mxu0 0.0
  %620 = vmatprep.subr.mxu0 0.0
  %621 = vmatpush1.msra.mxu0 0.0
  %622 = vmatprep.subr.mxu0 0.0
  %623 = vmatpush1.msra.mxu0 0.0
  %624 = vmatprep.subr.mxu0 0.0
  %625 = vmatpush1.msra.mxu0 0.0
  %626 = vmatprep.subr.mxu0 0.0
  %627 = vmatpush1.msra.mxu0 0.0
  %628 = vmatprep.subr.mxu0 0.0
  %629 = vmatpush1.msra.mxu0 0.0
  %630 = vmatprep.subr.mxu0 0.0
  %631 = vmatpush1.msra.mxu0 0.0
  %632 = vmatprep.subr.mxu0 0.0
  %633 = vmatpush1.msra.mxu0 0.0
  %634 = vmatprep.subr.mxu0 0.0
  %635 = vmatpush1.msra.mxu0 0.0
  %636 = vmatprep.subr.mxu0 0.0
  %637 = vmatpush1.msra.mxu0 0.0
  %638 = vmatprep.subr.mxu0 0.0
  %639 = vmatpush1.msra.mxu0 0.0
  %640 = vmatprep.subr.mxu0 0.0
  %641 = vmatpush1.msra.mxu0 0.0
  %642 = vmatprep.subr.mxu0 0.0
  %643 = vmatpush1.msra.mxu0 0.0
  %644 = vmatprep.subr.mxu0 0.0
  %645 = vmatpush1.msra.mxu0 0.0
  %646 = vmatprep.subr.mxu0 0.0
  %647 = vmatpush1.msra.mxu0 0.0
  %648 = vmatprep.subr.mxu0 0.0
  %649 = vmatpush1.msra.mxu0 0.0
  %650 = vmatprep.subr.mxu0 0.0
  %651 = vmatpush1.msra.mxu0 0.0
  %652 = vmatprep.mubr.f32.mxu0 0.0
  %653 = vmatmul.mubr.f32.gmra.mrb[0].mxu0 %v586
  %v654 = vpop.f32.mrb[0].mxu0
  %v655 = vadd.f32 0.0, %v654
  %v656 = vpop.f32.mrb[0].mxu0
  %657 = vdwg.mxu0
  %v658 = vxor.u32 %v655, 2147483648
  %v659 = vmul.f32 %v658, 1.442695
  %v660 = vpow.pop %v659
  %v661 = vadd.f32 %v660, 1.0
  %v662 = vrcp.pop %v661
  %v663 = vmul.f32 1.0, %v662
  %v664 = vtanh.pop %v655
  %666 = vset.pattern.permute.xlu0 1
  %667 = vperm.xlu0 %666, %v663
  %v668 = vpop.permute.xlu0 %667
  %v670 = vmul.f32 %v668, %v174
  %672 = vrot.lane.b32.xlu0 %v664, 125
  %v673 = vpop.permute.xlu0 %672
  %v675 = vmul.f32 %v663, %v673
  %677 = vset.pattern.permute.xlu0 0
  %678 = vperm.xlu0 %677, %v675
  %v679 = vpop.permute.xlu0 %678
  %v681 = vadd.f32 %v670, %v679
  %v682 = vtanh.pop %v681
  %683 = vset.pattern.permute.xlu0 2
  %684 = vperm.xlu0 %683, %v663
  %v685 = vpop.permute.xlu0 %684
  %v687 = vmul.f32 %v685, %v682
  %vm688 = vcmask 61440
  %689 = vst.msk [vmem:[%s8] sm:$0x1f] %vm688, %v687
  %690 = vst.msk [vmem:[%s9] sm:$0x1f] %vm688, %v681
  %v692 = vsel %vm175, %v687, 0
  %694 = vmatprep.subr.mxu0 0.0
  %695 = vmatpush1.msra.mxu0 %v168
  %696 = vmatprep.subr.mxu0 0.0
  %697 = vmatpush1.msra.mxu0 0.0
  %698 = vmatprep.subr.mxu0 0.0
  %699 = vmatpush1.msra.mxu0 0.0
  %700 = vmatprep.subr.mxu0 0.0
  %701 = vmatpush1.msra.mxu0 0.0
  %702 = vmatprep.subr.mxu0 0.0
  %703 = vmatpush1.msra.mxu0 0.0
  %704 = vmatprep.subr.mxu0 0.0
  %705 = vmatpush1.msra.mxu0 0.0
  %706 = vmatprep.subr.mxu0 0.0
  %707 = vmatpush1.msra.mxu0 0.0
  %708 = vmatprep.subr.mxu0 0.0
  %709 = vmatpush1.msra.mxu0 0.0
  %710 = vmatprep.subr.mxu0 0.0
  %711 = vmatpush1.msra.mxu0 0.0
  %712 = vmatprep.subr.mxu0 0.0
  %713 = vmatpush1.msra.mxu0 0.0
  %714 = vmatprep.subr.mxu0 0.0
  %715 = vmatpush1.msra.mxu0 0.0
  %716 = vmatprep.subr.mxu0 0.0
  %717 = vmatpush1.msra.mxu0 0.0
  %718 = vmatprep.subr.mxu0 0.0
  %719 = vmatpush1.msra.mxu0 0.0
  %720 = vmatprep.subr.mxu0 0.0
  %721 = vmatpush1.msra.mxu0 0.0
  %722 = vmatprep.subr.mxu0 0.0
  %723 = vmatpush1.msra.mxu0 0.0
  %724 = vmatprep.subr.mxu0 0.0
  %725 = vmatpush1.msra.mxu0 0.0
  %726 = vmatprep.subr.mxu0 0.0
  %727 = vmatpush1.msra.mxu0 0.0
  %728 = vmatprep.subr.mxu0 0.0
  %729 = vmatpush1.msra.mxu0 0.0
  %730 = vmatprep.subr.mxu0 0.0
  %731 = vmatpush1.msra.mxu0 0.0
  %732 = vmatprep.subr.mxu0 0.0
  %733 = vmatpush1.msra.mxu0 0.0
  %734 = vmatprep.subr.mxu0 0.0
  %735 = vmatpush1.msra.mxu0 0.0
  %736 = vmatprep.subr.mxu0 0.0
  %737 = vmatpush1.msra.mxu0 0.0
  %738 = vmatprep.subr.mxu0 0.0
  %739 = vmatpush1.msra.mxu0 0.0
  %740 = vmatprep.subr.mxu0 0.0
  %741 = vmatpush1.msra.mxu0 0.0
  %742 = vmatprep.subr.mxu0 0.0
  %743 = vmatpush1.msra.mxu0 0.0
  %744 = vmatprep.subr.mxu0 0.0
  %745 = vmatpush1.msra.mxu0 0.0
  %746 = vmatprep.subr.mxu0 0.0
  %747 = vmatpush1.msra.mxu0 0.0
  %748 = vmatprep.subr.mxu0 0.0
  %749 = vmatpush1.msra.mxu0 0.0
  %750 = vmatprep.subr.mxu0 0.0
  %751 = vmatpush1.msra.mxu0 0.0
  %752 = vmatprep.subr.mxu0 0.0
  %753 = vmatpush1.msra.mxu0 0.0
  %754 = vmatprep.subr.mxu0 0.0
  %755 = vmatpush1.msra.mxu0 0.0
  %756 = vmatprep.subr.mxu0 0.0
  %757 = vmatpush1.msra.mxu0 0.0
  %758 = vmatprep.mubr.f32.mxu0 0.0
  %759 = vmatmul.mubr.f32.gmra.mrb[0].mxu0 %v692
  %v760 = vpop.f32.mrb[0].mxu0
  %v761 = vadd.f32 0.0, %v760
  %v762 = vpop.f32.mrb[0].mxu0
  %763 = vdwg.mxu0
  %v765 = vrot.slane %v761, 3
  %v767 = vadd.f32 %v132, %v765
  %v768 = vadd.f32 %v137, %v765
  %v769 = vtanh.pop %v767
  %v770 = vtanh.pop %v768
  %v771 = vmul.f32 %v769, 1.5707964
  %v772 = vmul.f32 %v770, 1.5707964
  %v773 = vand.u32 2147483647, %v771
  %vm774 = vcmp.le.f32.partialorder %v773, 0.7853982
  %vm775 = vcmp.lt.s32.totalorder %v771, 0
  %v776 = vand.u32 %v771, 2139095040
  %v777 = vshrl.u32 %v776, 23
  %v778 = vsub.s32 %v777, 127
  %v779 = vand.u32 2147483647, %v771
  %v780 = vand.u32 %v779, 8388607
  %v781 = vor.u32 %v780, 8388608
  %v782 = vsub.s32 0, %v781
  %v783 = vadd.s32 %v778, 1
  %vm784 = vcmp.gt.s32.totalorder %v783, 0
  %v785 = vsel %vm784, %v783, 0
  %v786 = vshrl.u32 %v785, 5
  %v787 = vand.u32 %v785, 31
  %v788 = vsub.s32 32, %v787
  %v789 = vshrl.u32 683565275, %v788
  %v790 = vshll.u32 683565275, %v787
  %v791 = vshrl.u32 2475754826, %v788
  %v792 = vor.u32 %v790, %v791
  %v793 = vshll.u32 2475754826, %v787
  %v794 = vshrl.u32 2131351028, %v788
  %v795 = vor.u32 %v793, %v794
  %v796 = vshll.u32 2131351028, %v787
  %v797 = vshrl.u32 2102212464, %v788
  %v798 = vor.u32 %v796, %v797
  %v799 = vshll.u32 2102212464, %v787
  %v800 = vshrl.u32 920167782, %v788
  %v801 = vor.u32 %v799, %v800
  %v802 = vshll.u32 920167782, %v787
  %v803 = vshrl.u32 1326507024, %v788
  %v804 = vor.u32 %v802, %v803
  %vm805 = vcmp.lt.s32.totalorder %v786, 1
  %vm806 = vcmp.lt.s32.totalorder %v786, 2
  %vm807 = vcmp.lt.s32.totalorder %v786, 3
  %vm808 = vcmp.lt.s32.totalorder %v786, 4
  %v809 = vsel %vm805, %v789, %v792
  %v810 = vsel %vm808, %v798, 2102212464
  %v811 = vsel %vm807, %v795, %v810
  %v812 = vsel %vm806, %v809, %v811
  %v813 = vsel %vm805, %v792, %v795
  %v814 = vsel %vm808, %v801, 920167782
  %v815 = vsel %vm807, %v798, %v814
  %v816 = vsel %vm806, %v813, %v815
  %v817 = vsel %vm805, %v795, %v798
  %v818 = vsel %vm808, %v804, 1326507024
  %v819 = vsel %vm807, %v801, %v818
  %v820 = vsel %vm806, %v817, %v819
  %v821 = vshll.u32 %v781, 8
  %v822 = vmul.u32.u64.compose %v821, %v820
  %v823 = vextract.low.u32 %v822
  %v824 = vextract.high.u32 %v822
  %v825 = vmul.u32.u64.compose %v821, %v816
  %v826 = vextract.low.u32 %v825
  %v827 = vextract.high.u32 %v825
  %v828 = vmul.u32 %v821, %v812
  %v829 = vadd.s32 %v824, %v826
  %vm830 = vc.u32 %v824, %v826
  %v831 = vadd.s32 %v827, 1
  %v832 = vsel %vm830, %v831, %v827
  %v833 = vadd.s32 %v828, %v832
  %v834 = vadd.s32 %v833, 536870912
  %v835 = vshrl.u32 %v834, 30
  %v836 = vshll.u32 %v835, 30
  %v837 = vsub.s32 %v833, %v836
  %vm838 = vcmp.lt.s32.totalorder %v837, 0
  %v839 = vsub.s32 0, %v837
  %v840 = vsel %vm838, %v839, %v837
  %v841 = vclz %v840
  %v842 = vsub.s32 %v841, 2
  %vm843 = vcmp.gt.s32.totalorder 0, %v842
  %v844 = vsel %vm843, 0, %v842
  %v845 = vsub.s32 32, %v844
  %v846 = vshll.u32 %v837, %v844
  %v847 = vshrl.u32 %v829, %v845
  %v848 = vor.u32 %v846, %v847
  %v849 = vsub.s32 4294967266, %v844
  %v850 = vadd.s32 %v849, 127
  %v851 = vshll.u32 %v850, 23
  %v852 = vor.u32 4788187, %v851
  %v853 = vand.u32 2147483647, %v852
  %v855 = vcvt.s32.f32 %v848
  %v856 = vmul.f32 %v855, %v853
  %v857 = vxor.u32 %v856, 2147483648
  %v858 = vsel %vm775, %v857, %v856
  %v859 = vsub.s32 4, %v835
  %v860 = vsel %vm775, %v859, %v835
  %v861 = vsel %vm774, %v771, %v858
  %v862 = vsel %vm774, 0, %v860
  %v863 = vcosq.f32.pop %v861
  %v864 = vsinq.f32.pop %v861
  %vm865 = vweird.f32 %v771
  %v866 = vand.u32 %v862, 3
  %vm867 = vcmp.lt.s32.totalorder %v866, 2
  %vm868 = vcmp.eq.s32.totalorder %v866, 0
  %v869 = vxor.u32 %v864, 2147483648
  %v870 = vsel %vm868, %v863, %v869
  %vm871 = vcmp.eq.s32.totalorder %v866, 2
  %v872 = vxor.u32 %v863, 2147483648
  %v873 = vsel %vm871, %v872, %v864
  %v874 = vsel %vm867, %v870, %v873
  %v875 = vsel %vm865, nan, %v874
  %v876 = vand.u32 2147483647, %v772
  %vm877 = vcmp.le.f32.partialorder %v876, 0.7853982
  %vm878 = vcmp.lt.s32.totalorder %v772, 0
  %v879 = vand.u32 %v772, 2139095040
  %v880 = vshrl.u32 %v879, 23
  %v881 = vsub.s32 %v880, 127
  %v882 = vand.u32 2147483647, %v772
  %v883 = vand.u32 %v882, 8388607
  %v884 = vor.u32 %v883, 8388608
  %v885 = vsub.s32 0, %v884
  %v886 = vadd.s32 %v881, 1
  %vm887 = vcmp.gt.s32.totalorder %v886, 0
  %v888 = vsel %vm887, %v886, 0
  %v889 = vshrl.u32 %v888, 5
  %v890 = vand.u32 %v888, 31
  %v891 = vsub.s32 32, %v890
  %v892 = vshrl.u32 683565275, %v891
  %v893 = vshll.u32 683565275, %v890
  %v894 = vshrl.u32 2475754826, %v891
  %v895 = vor.u32 %v893, %v894
  %v896 = vshll.u32 2475754826, %v890
  %v897 = vshrl.u32 2131351028, %v891
  %v898 = vor.u32 %v896, %v897
  %v899 = vshll.u32 2131351028, %v890
  %v900 = vshrl.u32 2102212464, %v891
  %v901 = vor.u32 %v899, %v900
  %v902 = vshll.u32 2102212464, %v890
  %v903 = vshrl.u32 920167782, %v891
  %v904 = vor.u32 %v902, %v903
  %v905 = vshll.u32 920167782, %v890
  %v906 = vshrl.u32 1326507024, %v891
  %v907 = vor.u32 %v905, %v906
  %vm908 = vcmp.lt.s32.totalorder %v889, 1
  %vm909 = vcmp.lt.s32.totalorder %v889, 2
  %vm910 = vcmp.lt.s32.totalorder %v889, 3
  %vm911 = vcmp.lt.s32.totalorder %v889, 4
  %v912 = vsel %vm908, %v892, %v895
  %v913 = vsel %vm911, %v901, 2102212464
  %v914 = vsel %vm910, %v898, %v913
  %v915 = vsel %vm909, %v912, %v914
  %v916 = vsel %vm908, %v895, %v898
  %v917 = vsel %vm911, %v904, 920167782
  %v918 = vsel %vm910, %v901, %v917
  %v919 = vsel %vm909, %v916, %v918
  %v920 = vsel %vm908, %v898, %v901
  %v921 = vsel %vm911, %v907, 1326507024
  %v922 = vsel %vm910, %v904, %v921
  %v923 = vsel %vm909, %v920, %v922
  %v924 = vshll.u32 %v884, 8
  %v925 = vmul.u32.u64.compose %v924, %v923
  %v926 = vextract.low.u32 %v925
  %v927 = vextract.high.u32 %v925
  %v928 = vmul.u32.u64.compose %v924, %v919
  %v929 = vextract.low.u32 %v928
  %v930 = vextract.high.u32 %v928
  %v931 = vmul.u32 %v924, %v915
  %v932 = vadd.s32 %v927, %v929
  %vm933 = vc.u32 %v927, %v929
  %v934 = vadd.s32 %v930, 1
  %v935 = vsel %vm933, %v934, %v930
  %v936 = vadd.s32 %v931, %v935
  %v937 = vadd.s32 %v936, 536870912
  %v938 = vshrl.u32 %v937, 30
  %v939 = vshll.u32 %v938, 30
  %v940 = vsub.s32 %v936, %v939
  %vm941 = vcmp.lt.s32.totalorder %v940, 0
  %v942 = vsub.s32 0, %v940
  %v943 = vsel %vm941, %v942, %v940
  %v944 = vclz %v943
  %v945 = vsub.s32 %v944, 2
  %vm946 = vcmp.gt.s32.totalorder 0, %v945
  %v947 = vsel %vm946, 0, %v945
  %v948 = vsub.s32 32, %v947
  %v949 = vshll.u32 %v940, %v947
  %v950 = vshrl.u32 %v932, %v948
  %v951 = vor.u32 %v949, %v950
  %v952 = vsub.s32 4294967266, %v947
  %v953 = vadd.s32 %v952, 127
  %v954 = vshll.u32 %v953, 23
  %v955 = vor.u32 4788187, %v954
  %v956 = vand.u32 2147483647, %v955
  %v958 = vcvt.s32.f32 %v951
  %v959 = vmul.f32 %v958, %v956
  %v960 = vxor.u32 %v959, 2147483648
  %v961 = vsel %vm878, %v960, %v959
  %v962 = vsub.s32 4, %v938
  %v963 = vsel %vm878, %v962, %v938
  %v964 = vsel %vm877, %v772, %v961
  %v965 = vsel %vm877, 0, %v963
  %v966 = vcosq.f32.pop %v964
  %v967 = vsinq.f32.pop %v964
  %vm968 = vweird.f32 %v772
  %v969 = vand.u32 %v965, 3
  %vm970 = vcmp.lt.s32.totalorder %v969, 2
  %vm971 = vcmp.eq.s32.totalorder %v969, 0
  %v972 = vxor.u32 %v967, 2147483648
  %v973 = vsel %vm971, %v966, %v972
  %vm974 = vcmp.eq.s32.totalorder %v969, 2
  %v975 = vxor.u32 %v966, 2147483648
  %v976 = vsel %vm974, %v975, %v967
  %v977 = vsel %vm970, %v973, %v976
  %v978 = vsel %vm968, nan, %v977
  %v979 = vand.u32 2147483647, %v771
  %vm980 = vcmp.le.f32.partialorder %v979, 0.7853982
  %vm981 = vcmp.lt.s32.totalorder %v771, 0
  %v982 = vand.u32 %v771, 2139095040
  %v983 = vshrl.u32 %v982, 23
  %v984 = vsub.s32 %v983, 127
  %v985 = vand.u32 2147483647, %v771
  %v986 = vand.u32 %v985, 8388607
  %v987 = vor.u32 %v986, 8388608
  %v988 = vsub.s32 0, %v987
  %v989 = vadd.s32 %v984, 1
  %vm990 = vcmp.gt.s32.totalorder %v989, 0
  %v991 = vsel %vm990, %v989, 0
  %v992 = vshrl.u32 %v991, 5
  %v993 = vand.u32 %v991, 31
  %v994 = vsub.s32 32, %v993
  %v995 = vshrl.u32 683565275, %v994
  %v996 = vshll.u32 683565275, %v993
  %v997 = vshrl.u32 2475754826, %v994
  %v998 = vor.u32 %v996, %v997
  %v999 = vshll.u32 2475754826, %v993
  %v1000 = vshrl.u32 2131351028, %v994
  %v1001 = vor.u32 %v999, %v1000
  %v1002 = vshll.u32 2131351028, %v993
  %v1003 = vshrl.u32 2102212464, %v994
  %v1004 = vor.u32 %v1002, %v1003
  %v1005 = vshll.u32 2102212464, %v993
  %v1006 = vshrl.u32 920167782, %v994
  %v1007 = vor.u32 %v1005, %v1006
  %v1008 = vshll.u32 920167782, %v993
  %v1009 = vshrl.u32 1326507024, %v994
  %v1010 = vor.u32 %v1008, %v1009
  %vm1011 = vcmp.lt.s32.totalorder %v992, 1
  %vm1012 = vcmp.lt.s32.totalorder %v992, 2
  %vm1013 = vcmp.lt.s32.totalorder %v992, 3
  %vm1014 = vcmp.lt.s32.totalorder %v992, 4
  %v1015 = vsel %vm1011, %v995, %v998
  %v1016 = vsel %vm1014, %v1004, 2102212464
  %v1017 = vsel %vm1013, %v1001, %v1016
  %v1018 = vsel %vm1012, %v1015, %v1017
  %v1019 = vsel %vm1011, %v998, %v1001
  %v1020 = vsel %vm1014, %v1007, 920167782
  %v1021 = vsel %vm1013, %v1004, %v1020
  %v1022 = vsel %vm1012, %v1019, %v1021
  %v1023 = vsel %vm1011, %v1001, %v1004
  %v1024 = vsel %vm1014, %v1010, 1326507024
  %v1025 = vsel %vm1013, %v1007, %v1024
  %v1026 = vsel %vm1012, %v1023, %v1025
  %v1027 = vshll.u32 %v987, 8
  %v1028 = vmul.u32.u64.compose %v1027, %v1026
  %v1029 = vextract.low.u32 %v1028
  %v1030 = vextract.high.u32 %v1028
  %v1031 = vmul.u32.u64.compose %v1027, %v1022
  %v1032 = vextract.low.u32 %v1031
  %v1033 = vextract.high.u32 %v1031
  %v1034 = vmul.u32 %v1027, %v1018
  %v1035 = vadd.s32 %v1030, %v1032
  %vm1036 = vc.u32 %v1030, %v1032
  %v1037 = vadd.s32 %v1033, 1
  %v1038 = vsel %vm1036, %v1037, %v1033
  %v1039 = vadd.s32 %v1034, %v1038
  %v1040 = vadd.s32 %v1039, 536870912
  %v1041 = vshrl.u32 %v1040, 30
  %v1042 = vshll.u32 %v1041, 30
  %v1043 = vsub.s32 %v1039, %v1042
  %vm1044 = vcmp.lt.s32.totalorder %v1043, 0
  %v1045 = vsub.s32 0, %v1043
  %v1046 = vsel %vm1044, %v1045, %v1043
  %v1047 = vclz %v1046
  %v1048 = vsub.s32 %v1047, 2
  %vm1049 = vcmp.gt.s32.totalorder 0, %v1048
  %v1050 = vsel %vm1049, 0, %v1048
  %v1051 = vsub.s32 32, %v1050
  %v1052 = vshll.u32 %v1043, %v1050
  %v1053 = vshrl.u32 %v1035, %v1051
  %v1054 = vor.u32 %v1052, %v1053
  %v1055 = vsub.s32 4294967266, %v1050
  %v1056 = vadd.s32 %v1055, 127
  %v1057 = vshll.u32 %v1056, 23
  %v1058 = vor.u32 4788187, %v1057
  %v1059 = vand.u32 2147483647, %v1058
  %v1061 = vcvt.s32.f32 %v1054
  %v1062 = vmul.f32 %v1061, %v1059
  %v1063 = vxor.u32 %v1062, 2147483648
  %v1064 = vsel %vm981, %v1063, %v1062
  %v1065 = vsub.s32 4, %v1041
  %v1066 = vsel %vm981, %v1065, %v1041
  %v1067 = vsel %vm980, %v771, %v1064
  %v1068 = vsel %vm980, 0, %v1066
  %v1069 = vcosq.f32.pop %v1067
  %v1070 = vsinq.f32.pop %v1067
  %vm1071 = vweird.f32 %v771
  %v1072 = vadd.s32 %v1068, 3
  %v1073 = vand.u32 %v1072, 3
  %vm1074 = vcmp.lt.s32.totalorder %v1073, 2
  %vm1075 = vcmp.eq.s32.totalorder %v1073, 0
  %v1076 = vxor.u32 %v1070, 2147483648
  %v1077 = vsel %vm1075, %v1069, %v1076
  %vm1078 = vcmp.eq.s32.totalorder %v1073, 2
  %v1079 = vxor.u32 %v1069, 2147483648
  %v1080 = vsel %vm1078, %v1079, %v1070
  %v1081 = vsel %vm1074, %v1077, %v1080
  %v1082 = vsel %vm1071, nan, %v1081
  %v1083 = vand.u32 2147483647, %v772
  %vm1084 = vcmp.le.f32.partialorder %v1083, 0.7853982
  %vm1085 = vcmp.lt.s32.totalorder %v772, 0
  %v1086 = vand.u32 %v772, 2139095040
  %v1087 = vshrl.u32 %v1086, 23
  %v1088 = vsub.s32 %v1087, 127
  %v1089 = vand.u32 2147483647, %v772
  %v1090 = vand.u32 %v1089, 8388607
  %v1091 = vor.u32 %v1090, 8388608
  %v1092 = vsub.s32 0, %v1091
  %v1093 = vadd.s32 %v1088, 1
  %vm1094 = vcmp.gt.s32.totalorder %v1093, 0
  %v1095 = vsel %vm1094, %v1093, 0
  %v1096 = vshrl.u32 %v1095, 5
  %v1097 = vand.u32 %v1095, 31
  %v1098 = vsub.s32 32, %v1097
  %v1099 = vshrl.u32 683565275, %v1098
  %v1100 = vshll.u32 683565275, %v1097
  %v1101 = vshrl.u32 2475754826, %v1098
  %v1102 = vor.u32 %v1100, %v1101
  %v1103 = vshll.u32 2475754826, %v1097
  %v1104 = vshrl.u32 2131351028, %v1098
  %v1105 = vor.u32 %v1103, %v1104
  %v1106 = vshll.u32 2131351028, %v1097
  %v1107 = vshrl.u32 2102212464, %v1098
  %v1108 = vor.u32 %v1106, %v1107
  %v1109 = vshll.u32 2102212464, %v1097
  %v1110 = vshrl.u32 920167782, %v1098
  %v1111 = vor.u32 %v1109, %v1110
  %v1112 = vshll.u32 920167782, %v1097
  %v1113 = vshrl.u32 1326507024, %v1098
  %v1114 = vor.u32 %v1112, %v1113
  %vm1115 = vcmp.lt.s32.totalorder %v1096, 1
  %vm1116 = vcmp.lt.s32.totalorder %v1096, 2
  %vm1117 = vcmp.lt.s32.totalorder %v1096, 3
  %vm1118 = vcmp.lt.s32.totalorder %v1096, 4
  %v1119 = vsel %vm1115, %v1099, %v1102
  %v1120 = vsel %vm1118, %v1108, 2102212464
  %v1121 = vsel %vm1117, %v1105, %v1120
  %v1122 = vsel %vm1116, %v1119, %v1121
  %v1123 = vsel %vm1115, %v1102, %v1105
  %v1124 = vsel %vm1118, %v1111, 920167782
  %v1125 = vsel %vm1117, %v1108, %v1124
  %v1126 = vsel %vm1116, %v1123, %v1125
  %v1127 = vsel %vm1115, %v1105, %v1108
  %v1128 = vsel %vm1118, %v1114, 1326507024
  %v1129 = vsel %vm1117, %v1111, %v1128
  %v1130 = vsel %vm1116, %v1127, %v1129
  %v1131 = vshll.u32 %v1091, 8
  %v1132 = vmul.u32.u64.compose %v1131, %v1130
  %v1133 = vextract.low.u32 %v1132
  %v1134 = vextract.high.u32 %v1132
  %v1135 = vmul.u32.u64.compose %v1131, %v1126
  %v1136 = vextract.low.u32 %v1135
  %v1137 = vextract.high.u32 %v1135
  %v1138 = vmul.u32 %v1131, %v1122
  %v1139 = vadd.s32 %v1134, %v1136
  %vm1140 = vc.u32 %v1134, %v1136
  %v1141 = vadd.s32 %v1137, 1
  %v1142 = vsel %vm1140, %v1141, %v1137
  %v1143 = vadd.s32 %v1138, %v1142
  %v1144 = vadd.s32 %v1143, 536870912
  %v1145 = vshrl.u32 %v1144, 30
  %v1146 = vshll.u32 %v1145, 30
  %v1147 = vsub.s32 %v1143, %v1146
  %vm1148 = vcmp.lt.s32.totalorder %v1147, 0
  %v1149 = vsub.s32 0, %v1147
  %v1150 = vsel %vm1148, %v1149, %v1147
  %v1151 = vclz %v1150
  %v1152 = vsub.s32 %v1151, 2
  %vm1153 = vcmp.gt.s32.totalorder 0, %v1152
  %v1154 = vsel %vm1153, 0, %v1152
  %v1155 = vsub.s32 32, %v1154
  %v1156 = vshll.u32 %v1147, %v1154
  %v1157 = vshrl.u32 %v1139, %v1155
  %v1158 = vor.u32 %v1156, %v1157
  %v1159 = vsub.s32 4294967266, %v1154
  %v1160 = vadd.s32 %v1159, 127
  %v1161 = vshll.u32 %v1160, 23
  %v1162 = vor.u32 4788187, %v1161
  %v1163 = vand.u32 2147483647, %v1162
  %v1165 = vcvt.s32.f32 %v1158
  %v1166 = vmul.f32 %v1165, %v1163
  %v1167 = vxor.u32 %v1166, 2147483648
  %v1168 = vsel %vm1085, %v1167, %v1166
  %v1169 = vsub.s32 4, %v1145
  %v1170 = vsel %vm1085, %v1169, %v1145
  %v1171 = vsel %vm1084, %v772, %v1168
  %v1172 = vsel %vm1084, 0, %v1170
  %v1173 = vcosq.f32.pop %v1171
  %v1174 = vsinq.f32.pop %v1171
  %vm1175 = vweird.f32 %v772
  %v1176 = vadd.s32 %v1172, 3
  %v1177 = vand.u32 %v1176, 3
  %vm1178 = vcmp.lt.s32.totalorder %v1177, 2
  %vm1179 = vcmp.eq.s32.totalorder %v1177, 0
  %v1180 = vxor.u32 %v1174, 2147483648
  %v1181 = vsel %vm1179, %v1173, %v1180
  %vm1182 = vcmp.eq.s32.totalorder %v1177, 2
  %v1183 = vxor.u32 %v1173, 2147483648
  %v1184 = vsel %vm1182, %v1183, %v1174
  %v1185 = vsel %vm1178, %v1181, %v1184
  %v1186 = vsel %vm1175, nan, %v1185
  %v1187 = vsub.f32 %v1082, %v875
  %v1188 = vsub.f32 %v1186, %v978
  %1190 = vset.pattern.permute.xlu0 0
  %1191 = vperm.xlu0 %1190, %v1187
  %v1192 = vpop.permute.xlu0 %1191
  %1195 = vset.pattern.permute.xlu0 0
  %1196 = vperm.xlu0 %1195, %v1188
  %v1197 = vpop.permute.xlu0 %1196
  %v1199 = vmul.f32 %v1192, %v159
  %v1200 = vmul.f32 %v1197, %v159
  %1202 = vset.pattern.permute.xlu0 0
  %1203 = vperm.xlu0 %1202, %v875
  %v1204 = vpop.permute.xlu0 %1203
  %1207 = vset.pattern.permute.xlu0 0
  %1208 = vperm.xlu0 %1207, %v978
  %v1209 = vpop.permute.xlu0 %1208
  %v1211 = vadd.f32 %v1204, %v1199
  %v1212 = vadd.f32 %v1209, %v1200
  %1213 = vset.pattern.permute.xlu0 1
  %1214 = vperm.xlu0 %1213, %v1187
  %v1215 = vpop.permute.xlu0 %1214
  %1217 = vset.pattern.permute.xlu0 1
  %1218 = vperm.xlu0 %1217, %v1188
  %v1219 = vpop.permute.xlu0 %1218
  %v1221 = vmul.f32 %v1215, %v162
  %v1222 = vmul.f32 %v1219, %v162
  %1223 = vset.pattern.permute.xlu0 1
  %1224 = vperm.xlu0 %1223, %v875
  %v1225 = vpop.permute.xlu0 %1224
  %1227 = vset.pattern.permute.xlu0 1
  %1228 = vperm.xlu0 %1227, %v978
  %v1229 = vpop.permute.xlu0 %1228
  %v1231 = vadd.f32 %v1225, %v1221
  %v1232 = vadd.f32 %v1229, %v1222
  %v1233 = vmul.f32 %v1211, %v1231
  %v1234 = vmul.f32 %v1212, %v1232
  %1235 = vset.pattern.permute.xlu0 2
  %1236 = vperm.xlu0 %1235, %v1187
  %v1237 = vpop.permute.xlu0 %1236
  %1239 = vset.pattern.permute.xlu0 2
  %1240 = vperm.xlu0 %1239, %v1188
  %v1241 = vpop.permute.xlu0 %1240
  %v1243 = vmul.f32 %v1237, %v165
  %v1244 = vmul.f32 %v1241, %v165
  %1245 = vset.pattern.permute.xlu0 2
  %1246 = vperm.xlu0 %1245, %v875
  %v1247 = vpop.permute.xlu0 %1246
  %1249 = vset.pattern.permute.xlu0 2
  %1250 = vperm.xlu0 %1249, %v978
  %v1251 = vpop.permute.xlu0 %1250
  %v1253 = vadd.f32 %v1247, %v1243
  %v1254 = vadd.f32 %v1251, %v1244
  %v1255 = vmul.f32 %v1233, %v1253
  %v1256 = vmul.f32 %v1234, %v1254
  %1257 = vset.pattern.permute.xlu0 3
  %1258 = vperm.xlu0 %1257, %v1187
  %v1259 = vpop.permute.xlu0 %1258
  %1261 = vset.pattern.permute.xlu0 3
  %1262 = vperm.xlu0 %1261, %v1188
  %v1263 = vpop.permute.xlu0 %1262
  %v1265 = vmul.f32 %v1259, %v167
  %v1266 = vmul.f32 %v1263, %v167
  %1267 = vset.pattern.permute.xlu0 3
  %1268 = vperm.xlu0 %1267, %v875
  %v1269 = vpop.permute.xlu0 %1268
  %1271 = vset.pattern.permute.xlu0 3
  %1272 = vperm.xlu0 %1271, %v978
  %v1273 = vpop.permute.xlu0 %1272
  %v1275 = vadd.f32 %v1269, %v1265
  %v1276 = vadd.f32 %v1273, %v1266
  %v1277 = vmul.f32 %v1255, %v1275
  %v1278 = vmul.f32 %v1256, %v1276
  %vm1281 = vcmask 1042432
  %v1282 = vrot.slane %v1277, 5
  %v1283 = vrot.slane %v1278, 5
  %v1284 = vsel %vm1281, %v1282, %v1283
  %v1285 = vsel %vm505, %v1284, 0
  %1287 = vmatprep.subr.mxu0 0.0
  %1288 = vmatpush1.msra.mxu0 %v169
  %1289 = vmatprep.subr.mxu0 0.0
  %1290 = vmatpush1.msra.mxu0 %v170
  %1291 = vmatprep.subr.mxu0 0.0
  %1292 = vmatpush1.msra.mxu0 0.0
  %1293 = vmatprep.subr.mxu0 0.0
  %1294 = vmatpush1.msra.mxu0 0.0
  %1295 = vmatprep.subr.mxu0 0.0
  %1296 = vmatpush1.msra.mxu0 0.0
  %1297 = vmatprep.subr.mxu0 0.0
  %1298 = vmatpush1.msra.mxu0 0.0
  %1299 = vmatprep.subr.mxu0 0.0
  %1300 = vmatpush1.msra.mxu0 0.0
  %1301 = vmatprep.subr.mxu0 0.0
  %1302 = vmatpush1.msra.mxu0 0.0
  %1303 = vmatprep.subr.mxu0 0.0
  %1304 = vmatpush1.msra.mxu0 0.0
  %1305 = vmatprep.subr.mxu0 0.0
  %1306 = vmatpush1.msra.mxu0 0.0
  %1307 = vmatprep.subr.mxu0 0.0
  %1308 = vmatpush1.msra.mxu0 0.0
  %1309 = vmatprep.subr.mxu0 0.0
  %1310 = vmatpush1.msra.mxu0 0.0
  %1311 = vmatprep.subr.mxu0 0.0
  %1312 = vmatpush1.msra.mxu0 0.0
  %1313 = vmatprep.subr.mxu0 0.0
  %1314 = vmatpush1.msra.mxu0 0.0
  %1315 = vmatprep.subr.mxu0 0.0
  %1316 = vmatpush1.msra.mxu0 0.0
  %1317 = vmatprep.subr.mxu0 0.0
  %1318 = vmatpush1.msra.mxu0 0.0
  %1319 = vmatprep.subr.mxu0 0.0
  %1320 = vmatpush1.msra.mxu0 0.0
  %1321 = vmatprep.subr.mxu0 0.0
  %1322 = vmatpush1.msra.mxu0 0.0
  %1323 = vmatprep.subr.mxu0 0.0
  %1324 = vmatpush1.msra.mxu0 0.0
  %1325 = vmatprep.subr.mxu0 0.0
  %1326 = vmatpush1.msra.mxu0 0.0
  %1327 = vmatprep.subr.mxu0 0.0
  %1328 = vmatpush1.msra.mxu0 0.0
  %1329 = vmatprep.subr.mxu0 0.0
  %1330 = vmatpush1.msra.mxu0 0.0
  %1331 = vmatprep.subr.mxu0 0.0
  %1332 = vmatpush1.msra.mxu0 0.0
  %1333 = vmatprep.subr.mxu0 0.0
  %1334 = vmatpush1.msra.mxu0 0.0
  %1335 = vmatprep.subr.mxu0 0.0
  %1336 = vmatpush1.msra.mxu0 0.0
  %1337 = vmatprep.subr.mxu0 0.0
  %1338 = vmatpush1.msra.mxu0 0.0
  %1339 = vmatprep.subr.mxu0 0.0
  %1340 = vmatpush1.msra.mxu0 0.0
  %1341 = vmatprep.subr.mxu0 0.0
  %1342 = vmatpush1.msra.mxu0 0.0
  %1343 = vmatprep.subr.mxu0 0.0
  %1344 = vmatpush1.msra.mxu0 0.0
  %1345 = vmatprep.subr.mxu0 0.0
  %1346 = vmatpush1.msra.mxu0 0.0
  %1347 = vmatprep.subr.mxu0 0.0
  %1348 = vmatpush1.msra.mxu0 0.0
  %1349 = vmatprep.subr.mxu0 0.0
  %1350 = vmatpush1.msra.mxu0 0.0
  %1351 = vmatprep.mubr.f32.mxu0 0.0
  %1352 = vmatmul.mubr.f32.gmra.mrb[0].mxu0 %v1285
  %v1353 = vpop.f32.mrb[0].mxu0
  %v1354 = vadd.f32 0.0, %v1353
  %v1355 = vpop.f32.mrb[0].mxu0
  %1356 = vdwg.mxu0
  %v1357 = vmul.f32 %v1354, %v1354
  %1359 = vrot.lane.b32.xlu0 %v1357, 112
  %v1360 = vpop.permute.xlu0 %1359
  %v1362 = vadd.f32 %v1357, %v1360
  %v1364 = vsel %vm505, %v1362, 0
  %1366 = vmatprep.subr.mxu0 0.0
  %1367 = vmatpush1.msra.mxu0 %v171
  %1368 = vmatprep.subr.mxu0 0.0
  %1369 = vmatpush1.msra.mxu0 %v172
  %1370 = vmatprep.subr.mxu0 0.0
  %1371 = vmatpush1.msra.mxu0 0.0
  %1372 = vmatprep.subr.mxu0 0.0
  %1373 = vmatpush1.msra.mxu0 0.0
  %1374 = vmatprep.subr.mxu0 0.0
  %1375 = vmatpush1.msra.mxu0 0.0
  %1376 = vmatprep.subr.mxu0 0.0
  %1377 = vmatpush1.msra.mxu0 0.0
  %1378 = vmatprep.subr.mxu0 0.0
  %1379 = vmatpush1.msra.mxu0 0.0
  %1380 = vmatprep.subr.mxu0 0.0
  %1381 = vmatpush1.msra.mxu0 0.0
  %1382 = vmatprep.subr.mxu0 0.0
  %1383 = vmatpush1.msra.mxu0 0.0
  %1384 = vmatprep.subr.mxu0 0.0
  %1385 = vmatpush1.msra.mxu0 0.0
  %1386 = vmatprep.subr.mxu0 0.0
  %1387 = vmatpush1.msra.mxu0 0.0
  %1388 = vmatprep.subr.mxu0 0.0
  %1389 = vmatpush1.msra.mxu0 0.0
  %1390 = vmatprep.subr.mxu0 0.0
  %1391 = vmatpush1.msra.mxu0 0.0
  %1392 = vmatprep.subr.mxu0 0.0
  %1393 = vmatpush1.msra.mxu0 0.0
  %1394 = vmatprep.subr.mxu0 0.0
  %1395 = vmatpush1.msra.mxu0 0.0
  %1396 = vmatprep.subr.mxu0 0.0
  %1397 = vmatpush1.msra.mxu0 0.0
  %1398 = vmatprep.subr.mxu0 0.0
  %1399 = vmatpush1.msra.mxu0 0.0
  %1400 = vmatprep.subr.mxu0 0.0
  %1401 = vmatpush1.msra.mxu0 0.0
  %1402 = vmatprep.subr.mxu0 0.0
  %1403 = vmatpush1.msra.mxu0 0.0
  %1404 = vmatprep.subr.mxu0 0.0
  %1405 = vmatpush1.msra.mxu0 0.0
  %1406 = vmatprep.subr.mxu0 0.0
  %1407 = vmatpush1.msra.mxu0 0.0
  %1408 = vmatprep.subr.mxu0 0.0
  %1409 = vmatpush1.msra.mxu0 0.0
  %1410 = vmatprep.subr.mxu0 0.0
  %1411 = vmatpush1.msra.mxu0 0.0
  %1412 = vmatprep.subr.mxu0 0.0
  %1413 = vmatpush1.msra.mxu0 0.0
  %1414 = vmatprep.subr.mxu0 0.0
  %1415 = vmatpush1.msra.mxu0 0.0
  %1416 = vmatprep.subr.mxu0 0.0
  %1417 = vmatpush1.msra.mxu0 0.0
  %1418 = vmatprep.subr.mxu0 0.0
  %1419 = vmatpush1.msra.mxu0 0.0
  %1420 = vmatprep.subr.mxu0 0.0
  %1421 = vmatpush1.msra.mxu0 0.0
  %1422 = vmatprep.subr.mxu0 0.0
  %1423 = vmatpush1.msra.mxu0 0.0
  %1424 = vmatprep.subr.mxu0 0.0
  %1425 = vmatpush1.msra.mxu0 0.0
  %1426 = vmatprep.subr.mxu0 0.0
  %1427 = vmatpush1.msra.mxu0 0.0
  %1428 = vmatprep.subr.mxu0 0.0
  %1429 = vmatpush1.msra.mxu0 0.0
  %1430 = vmatprep.mubr.f32.mxu0 0.0
  %1431 = vmatmul.mubr.f32.gmra.mrb[0].mxu0 %v1364
  %v1432 = vpop.f32.mrb[0].mxu0
  %v1433 = vadd.f32 0.0, %v1432
  %v1434 = vpop.f32.mrb[0].mxu0
  %1435 = vdwg.mxu0
  %v1436 = vxor.u32 %v1433, 2147483648
  %v1437 = vmul.f32 %v1436, 1.442695
  %v1438 = vpow.pop %v1437
  %v1439 = vadd.f32 %v1438, 1.0
  %v1440 = vrcp.pop %v1439
  %v1441 = vmul.f32 1.0, %v1440
  %v1442 = vtanh.pop %v1433
  %1444 = vset.pattern.permute.xlu0 1
  %1445 = vperm.xlu0 %1444, %v1441
  %v1446 = vpop.permute.xlu0 %1445
  %v1448 = vmul.f32 %v1446, %v681
  %1450 = vrot.lane.b32.xlu0 %v1442, 125
  %v1451 = vpop.permute.xlu0 %1450
  %v1453 = vmul.f32 %v1441, %v1451
  %1455 = vset.pattern.permute.xlu0 0
  %1456 = vperm.xlu0 %1455, %v1453
  %v1457 = vpop.permute.xlu0 %1456
  %v1459 = vadd.f32 %v1448, %v1457
  %v1460 = vtanh.pop %v1459
  %1461 = vset.pattern.permute.xlu0 2
  %1462 = vperm.xlu0 %1461, %v1441
  %v1463 = vpop.permute.xlu0 %1462
  %v1465 = vmul.f32 %v1463, %v1460
  %s1466 = scalar_lea.vmem %s8, 8
  %1467 = vst.msk [vmem:[%s1466] sm:$0x1f] %vm688, %v1465
  %s1468 = scalar_lea.vmem %s9, 8
  %1469 = vst.msk [vmem:[%s1468] sm:$0x1f] %vm688, %v1459
  %v1471 = vsel %vm175, %v1465, 0
  %1473 = vmatprep.subr.mxu0 0.0
  %1474 = vmatpush1.msra.mxu0 %v168
  %1475 = vmatprep.subr.mxu0 0.0
  %1476 = vmatpush1.msra.mxu0 0.0
  %1477 = vmatprep.subr.mxu0 0.0
  %1478 = vmatpush1.msra.mxu0 0.0
  %1479 = vmatprep.subr.mxu0 0.0
  %1480 = vmatpush1.msra.mxu0 0.0
  %1481 = vmatprep.subr.mxu0 0.0
  %1482 = vmatpush1.msra.mxu0 0.0
  %1483 = vmatprep.subr.mxu0 0.0
  %1484 = vmatpush1.msra.mxu0 0.0
  %1485 = vmatprep.subr.mxu0 0.0
  %1486 = vmatpush1.msra.mxu0 0.0
  %1487 = vmatprep.subr.mxu0 0.0
  %1488 = vmatpush1.msra.mxu0 0.0
  %1489 = vmatprep.subr.mxu0 0.0
  %1490 = vmatpush1.msra.mxu0 0.0
  %1491 = vmatprep.subr.mxu0 0.0
  %1492 = vmatpush1.msra.mxu0 0.0
  %1493 = vmatprep.subr.mxu0 0.0
  %1494 = vmatpush1.msra.mxu0 0.0
  %1495 = vmatprep.subr.mxu0 0.0
  %1496 = vmatpush1.msra.mxu0 0.0
  %1497 = vmatprep.subr.mxu0 0.0
  %1498 = vmatpush1.msra.mxu0 0.0
  %1499 = vmatprep.subr.mxu0 0.0
  %1500 = vmatpush1.msra.mxu0 0.0
  %1501 = vmatprep.subr.mxu0 0.0
  %1502 = vmatpush1.msra.mxu0 0.0
  %1503 = vmatprep.subr.mxu0 0.0
  %1504 = vmatpush1.msra.mxu0 0.0
  %1505 = vmatprep.subr.mxu0 0.0
  %1506 = vmatpush1.msra.mxu0 0.0
  %1507 = vmatprep.subr.mxu0 0.0
  %1508 = vmatpush1.msra.mxu0 0.0
  %1509 = vmatprep.subr.mxu0 0.0
  %1510 = vmatpush1.msra.mxu0 0.0
  %1511 = vmatprep.subr.mxu0 0.0
  %1512 = vmatpush1.msra.mxu0 0.0
  %1513 = vmatprep.subr.mxu0 0.0
  %1514 = vmatpush1.msra.mxu0 0.0
  %1515 = vmatprep.subr.mxu0 0.0
  %1516 = vmatpush1.msra.mxu0 0.0
  %1517 = vmatprep.subr.mxu0 0.0
  %1518 = vmatpush1.msra.mxu0 0.0
  %1519 = vmatprep.subr.mxu0 0.0
  %1520 = vmatpush1.msra.mxu0 0.0
  %1521 = vmatprep.subr.mxu0 0.0
  %1522 = vmatpush1.msra.mxu0 0.0
  %1523 = vmatprep.subr.mxu0 0.0
  %1524 = vmatpush1.msra.mxu0 0.0
  %1525 = vmatprep.subr.mxu0 0.0
  %1526 = vmatpush1.msra.mxu0 0.0
  %1527 = vmatprep.subr.mxu0 0.0
  %1528 = vmatpush1.msra.mxu0 0.0
  %1529 = vmatprep.subr.mxu0 0.0
  %1530 = vmatpush1.msra.mxu0 0.0
  %1531 = vmatprep.subr.mxu0 0.0
  %1532 = vmatpush1.msra.mxu0 0.0
  %1533 = vmatprep.subr.mxu0 0.0
  %1534 = vmatpush1.msra.mxu0 0.0
  %1535 = vmatprep.subr.mxu0 0.0
  %1536 = vmatpush1.msra.mxu0 0.0
  %1537 = vmatprep.mubr.f32.mxu0 0.0
  %1538 = vmatmul.mubr.f32.gmra.mrb[0].mxu0 %v1471
  %v1539 = vpop.f32.mrb[0].mxu0
  %v1540 = vadd.f32 0.0, %v1539
  %v1541 = vpop.f32.mrb[0].mxu0
  %1542 = vdwg.mxu0
  %v1544 = vrot.slane %v1540, 6
  %v1546 = vadd.f32 %v137, %v1544
  %v1547 = vtanh.pop %v1546
  %v1548 = vmul.f32 %v1547, 1.5707964
  %v1549 = vand.u32 2147483647, %v1548
  %vm1550 = vcmp.le.f32.partialorder %v1549, 0.7853982
  %vm1551 = vcmp.lt.s32.totalorder %v1548, 0
  %v1552 = vand.u32 %v1548, 2139095040
  %v1553 = vshrl.u32 %v1552, 23
  %v1554 = vsub.s32 %v1553, 127
  %v1555 = vand.u32 2147483647, %v1548
  %v1556 = vand.u32 %v1555, 8388607
  %v1557 = vor.u32 %v1556, 8388608
  %v1558 = vsub.s32 0, %v1557
  %v1559 = vadd.s32 %v1554, 1
  %vm1560 = vcmp.gt.s32.totalorder %v1559, 0
  %v1561 = vsel %vm1560, %v1559, 0
  %v1562 = vshrl.u32 %v1561, 5
  %v1563 = vand.u32 %v1561, 31
  %v1564 = vsub.s32 32, %v1563
  %v1565 = vshrl.u32 683565275, %v1564
  %v1566 = vshll.u32 683565275, %v1563
  %v1567 = vshrl.u32 2475754826, %v1564
  %v1568 = vor.u32 %v1566, %v1567
  %v1569 = vshll.u32 2475754826, %v1563
  %v1570 = vshrl.u32 2131351028, %v1564
  %v1571 = vor.u32 %v1569, %v1570
  %v1572 = vshll.u32 2131351028, %v1563
  %v1573 = vshrl.u32 2102212464, %v1564
  %v1574 = vor.u32 %v1572, %v1573
  %v1575 = vshll.u32 2102212464, %v1563
  %v1576 = vshrl.u32 920167782, %v1564
  %v1577 = vor.u32 %v1575, %v1576
  %v1578 = vshll.u32 920167782, %v1563
  %v1579 = vshrl.u32 1326507024, %v1564
  %v1580 = vor.u32 %v1578, %v1579
  %vm1581 = vcmp.lt.s32.totalorder %v1562, 1
  %vm1582 = vcmp.lt.s32.totalorder %v1562, 2
  %vm1583 = vcmp.lt.s32.totalorder %v1562, 3
  %vm1584 = vcmp.lt.s32.totalorder %v1562, 4
  %v1585 = vsel %vm1581, %v1565, %v1568
  %v1586 = vsel %vm1584, %v1574, 2102212464
  %v1587 = vsel %vm1583, %v1571, %v1586
  %v1588 = vsel %vm1582, %v1585, %v1587
  %v1589 = vsel %vm1581, %v1568, %v1571
  %v1590 = vsel %vm1584, %v1577, 920167782
  %v1591 = vsel %vm1583, %v1574, %v1590
  %v1592 = vsel %vm1582, %v1589, %v1591
  %v1593 = vsel %vm1581, %v1571, %v1574
  %v1594 = vsel %vm1584, %v1580, 1326507024
  %v1595 = vsel %vm1583, %v1577, %v1594
  %v1596 = vsel %vm1582, %v1593, %v1595
  %v1597 = vshll.u32 %v1557, 8
  %v1598 = vmul.u32.u64.compose %v1597, %v1596
  %v1599 = vextract.low.u32 %v1598
  %v1600 = vextract.high.u32 %v1598
  %v1601 = vmul.u32.u64.compose %v1597, %v1592
  %v1602 = vextract.low.u32 %v1601
  %v1603 = vextract.high.u32 %v1601
  %v1604 = vmul.u32 %v1597, %v1588
  %v1605 = vadd.s32 %v1600, %v1602
  %vm1606 = vc.u32 %v1600, %v1602
  %v1607 = vadd.s32 %v1603, 1
  %v1608 = vsel %vm1606, %v1607, %v1603
  %v1609 = vadd.s32 %v1604, %v1608
  %v1610 = vadd.s32 %v1609, 536870912
  %v1611 = vshrl.u32 %v1610, 30
  %v1612 = vshll.u32 %v1611, 30
  %v1613 = vsub.s32 %v1609, %v1612
  %vm1614 = vcmp.lt.s32.totalorder %v1613, 0
  %v1615 = vsub.s32 0, %v1613
  %v1616 = vsel %vm1614, %v1615, %v1613
  %v1617 = vclz %v1616
  %v1618 = vsub.s32 %v1617, 2
  %vm1619 = vcmp.gt.s32.totalorder 0, %v1618
  %v1620 = vsel %vm1619, 0, %v1618
  %v1621 = vsub.s32 32, %v1620
  %v1622 = vshll.u32 %v1613, %v1620
  %v1623 = vshrl.u32 %v1605, %v1621
  %v1624 = vor.u32 %v1622, %v1623
  %v1625 = vsub.s32 4294967266, %v1620
  %v1626 = vadd.s32 %v1625, 127
  %v1627 = vshll.u32 %v1626, 23
  %v1628 = vor.u32 4788187, %v1627
  %v1629 = vand.u32 2147483647, %v1628
  %v1631 = vcvt.s32.f32 %v1624
  %v1632 = vmul.f32 %v1631, %v1629
  %v1633 = vxor.u32 %v1632, 2147483648
  %v1634 = vsel %vm1551, %v1633, %v1632
  %v1635 = vsub.s32 4, %v1611
  %v1636 = vsel %vm1551, %v1635, %v1611
  %v1637 = vsel %vm1550, %v1548, %v1634
  %v1638 = vsel %vm1550, 0, %v1636
  %v1639 = vcosq.f32.pop %v1637
  %v1640 = vsinq.f32.pop %v1637
  %vm1641 = vweird.f32 %v1548
  %v1642 = vand.u32 %v1638, 3
  %vm1643 = vcmp.lt.s32.totalorder %v1642, 2
  %vm1644 = vcmp.eq.s32.totalorder %v1642, 0
  %v1645 = vxor.u32 %v1640, 2147483648
  %v1646 = vsel %vm1644, %v1639, %v1645
  %vm1647 = vcmp.eq.s32.totalorder %v1642, 2
  %v1648 = vxor.u32 %v1639, 2147483648
  %v1649 = vsel %vm1647, %v1648, %v1640
  %v1650 = vsel %vm1643, %v1646, %v1649
  %v1651 = vsel %vm1641, nan, %v1650
  %v1652 = vand.u32 2147483647, %v1548
  %vm1653 = vcmp.le.f32.partialorder %v1652, 0.7853982
  %vm1654 = vcmp.lt.s32.totalorder %v1548, 0
  %v1655 = vand.u32 %v1548, 2139095040
  %v1656 = vshrl.u32 %v1655, 23
  %v1657 = vsub.s32 %v1656, 127
  %v1658 = vand.u32 2147483647, %v1548
  %v1659 = vand.u32 %v1658, 8388607
  %v1660 = vor.u32 %v1659, 8388608
  %v1661 = vsub.s32 0, %v1660
  %v1662 = vadd.s32 %v1657, 1
  %vm1663 = vcmp.gt.s32.totalorder %v1662, 0
  %v1664 = vsel %vm1663, %v1662, 0
  %v1665 = vshrl.u32 %v1664, 5
  %v1666 = vand.u32 %v1664, 31
  %v1667 = vsub.s32 32, %v1666
  %v1668 = vshrl.u32 683565275, %v1667
  %v1669 = vshll.u32 683565275, %v1666
  %v1670 = vshrl.u32 2475754826, %v1667
  %v1671 = vor.u32 %v1669, %v1670
  %v1672 = vshll.u32 2475754826, %v1666
  %v1673 = vshrl.u32 2131351028, %v1667
  %v1674 = vor.u32 %v1672, %v1673
  %v1675 = vshll.u32 2131351028, %v1666
  %v1676 = vshrl.u32 2102212464, %v1667
  %v1677 = vor.u32 %v1675, %v1676
  %v1678 = vshll.u32 2102212464, %v1666
  %v1679 = vshrl.u32 920167782, %v1667
  %v1680 = vor.u32 %v1678, %v1679
  %v1681 = vshll.u32 920167782, %v1666
  %v1682 = vshrl.u32 1326507024, %v1667
  %v1683 = vor.u32 %v1681, %v1682
  %vm1684 = vcmp.lt.s32.totalorder %v1665, 1
  %vm1685 = vcmp.lt.s32.totalorder %v1665, 2
  %vm1686 = vcmp.lt.s32.totalorder %v1665, 3
  %vm1687 = vcmp.lt.s32.totalorder %v1665, 4
  %v1688 = vsel %vm1684, %v1668, %v1671
  %v1689 = vsel %vm1687, %v1677, 2102212464
  %v1690 = vsel %vm1686, %v1674, %v1689
  %v1691 = vsel %vm1685, %v1688, %v1690
  %v1692 = vsel %vm1684, %v1671, %v1674
  %v1693 = vsel %vm1687, %v1680, 920167782
  %v1694 = vsel %vm1686, %v1677, %v1693
  %v1695 = vsel %vm1685, %v1692, %v1694
  %v1696 = vsel %vm1684, %v1674, %v1677
  %v1697 = vsel %vm1687, %v1683, 1326507024
  %v1698 = vsel %vm1686, %v1680, %v1697
  %v1699 = vsel %vm1685, %v1696, %v1698
  %v1700 = vshll.u32 %v1660, 8
  %v1701 = vmul.u32.u64.compose %v1700, %v1699
  %v1702 = vextract.low.u32 %v1701
  %v1703 = vextract.high.u32 %v1701
  %v1704 = vmul.u32.u64.compose %v1700, %v1695
  %v1705 = vextract.low.u32 %v1704
  %v1706 = vextract.high.u32 %v1704
  %v1707 = vmul.u32 %v1700, %v1691
  %v1708 = vadd.s32 %v1703, %v1705
  %vm1709 = vc.u32 %v1703, %v1705
  %v1710 = vadd.s32 %v1706, 1
  %v1711 = vsel %vm1709, %v1710, %v1706
  %v1712 = vadd.s32 %v1707, %v1711
  %v1713 = vadd.s32 %v1712, 536870912
  %v1714 = vshrl.u32 %v1713, 30
  %v1715 = vshll.u32 %v1714, 30
  %v1716 = vsub.s32 %v1712, %v1715
  %vm1717 = vcmp.lt.s32.totalorder %v1716, 0
  %v1718 = vsub.s32 0, %v1716
  %v1719 = vsel %vm1717, %v1718, %v1716
  %v1720 = vclz %v1719
  %v1721 = vsub.s32 %v1720, 2
  %vm1722 = vcmp.gt.s32.totalorder 0, %v1721
  %v1723 = vsel %vm1722, 0, %v1721
  %v1724 = vsub.s32 32, %v1723
  %v1725 = vshll.u32 %v1716, %v1723
  %v1726 = vshrl.u32 %v1708, %v1724
  %v1727 = vor.u32 %v1725, %v1726
  %v1728 = vsub.s32 4294967266, %v1723
  %v1729 = vadd.s32 %v1728, 127
  %v1730 = vshll.u32 %v1729, 23
  %v1731 = vor.u32 4788187, %v1730
  %v1732 = vand.u32 2147483647, %v1731
  %v1734 = vcvt.s32.f32 %v1727
  %v1735 = vmul.f32 %v1734, %v1732
  %v1736 = vxor.u32 %v1735, 2147483648
  %v1737 = vsel %vm1654, %v1736, %v1735
  %v1738 = vsub.s32 4, %v1714
  %v1739 = vsel %vm1654, %v1738, %v1714
  %v1740 = vsel %vm1653, %v1548, %v1737
  %v1741 = vsel %vm1653, 0, %v1739
  %v1742 = vcosq.f32.pop %v1740
  %v1743 = vsinq.f32.pop %v1740
  %vm1744 = vweird.f32 %v1548
  %v1745 = vadd.s32 %v1741, 3
  %v1746 = vand.u32 %v1745, 3
  %vm1747 = vcmp.lt.s32.totalorder %v1746, 2
  %vm1748 = vcmp.eq.s32.totalorder %v1746, 0
  %v1749 = vxor.u32 %v1743, 2147483648
  %v1750 = vsel %vm1748, %v1742, %v1749
  %vm1751 = vcmp.eq.s32.totalorder %v1746, 2
  %v1752 = vxor.u32 %v1742, 2147483648
  %v1753 = vsel %vm1751, %v1752, %v1743
  %v1754 = vsel %vm1747, %v1750, %v1753
  %v1755 = vsel %vm1744, nan, %v1754
  %v1756 = vsub.f32 %v1755, %v1651
  %1758 = vset.pattern.permute.xlu0 0
  %1759 = vperm.xlu0 %1758, %v1756
  %v1760 = vpop.permute.xlu0 %1759
  %v1762 = vmul.f32 %v1760, %v159
  %1764 = vset.pattern.permute.xlu0 0
  %1765 = vperm.xlu0 %1764, %v1651
  %v1766 = vpop.permute.xlu0 %1765
  %v1768 = vadd.f32 %v1766, %v1762
  %1769 = vset.pattern.permute.xlu0 1
  %1770 = vperm.xlu0 %1769, %v1756
  %v1771 = vpop.permute.xlu0 %1770
  %v1773 = vmul.f32 %v1771, %v162
  %1774 = vset.pattern.permute.xlu0 1
  %1775 = vperm.xlu0 %1774, %v1651
  %v1776 = vpop.permute.xlu0 %1775
  %v1778 = vadd.f32 %v1776, %v1773
  %v1779 = vmul.f32 %v1768, %v1778
  %1780 = vset.pattern.permute.xlu0 2
  %1781 = vperm.xlu0 %1780, %v1756
  %v1782 = vpop.permute.xlu0 %1781
  %v1784 = vmul.f32 %v1782, %v165
  %1785 = vset.pattern.permute.xlu0 2
  %1786 = vperm.xlu0 %1785, %v1651
  %v1787 = vpop.permute.xlu0 %1786
  %v1789 = vadd.f32 %v1787, %v1784
  %v1790 = vmul.f32 %v1779, %v1789
  %1791 = vset.pattern.permute.xlu0 3
  %1792 = vperm.xlu0 %1791, %v1756
  %v1793 = vpop.permute.xlu0 %1792
  %v1795 = vmul.f32 %v1793, %v167
  %1796 = vset.pattern.permute.xlu0 3
  %1797 = vperm.xlu0 %1796, %v1651
  %v1798 = vpop.permute.xlu0 %1797
  %v1800 = vadd.f32 %v1798, %v1795
  %v1801 = vmul.f32 %v1790, %v1800
  %v1803 = vrot.slane %v1801, 2
  %v1804 = vsel %vm505, %v1803, 0
  %1806 = vmatprep.subr.mxu0 0.0
  %1807 = vmatpush1.msra.mxu0 %v169
  %1808 = vmatprep.subr.mxu0 0.0
  %1809 = vmatpush1.msra.mxu0 %v170
  %1810 = vmatprep.subr.mxu0 0.0
  %1811 = vmatpush1.msra.mxu0 0.0
  %1812 = vmatprep.subr.mxu0 0.0
  %1813 = vmatpush1.msra.mxu0 0.0
  %1814 = vmatprep.subr.mxu0 0.0
  %1815 = vmatpush1.msra.mxu0 0.0
  %1816 = vmatprep.subr.mxu0 0.0
  %1817 = vmatpush1.msra.mxu0 0.0
  %1818 = vmatprep.subr.mxu0 0.0
  %1819 = vmatpush1.msra.mxu0 0.0
  %1820 = vmatprep.subr.mxu0 0.0
  %1821 = vmatpush1.msra.mxu0 0.0
  %1822 = vmatprep.subr.mxu0 0.0
  %1823 = vmatpush1.msra.mxu0 0.0
  %1824 = vmatprep.subr.mxu0 0.0
  %1825 = vmatpush1.msra.mxu0 0.0
  %1826 = vmatprep.subr.mxu0 0.0
  %1827 = vmatpush1.msra.mxu0 0.0
  %1828 = vmatprep.subr.mxu0 0.0
  %1829 = vmatpush1.msra.mxu0 0.0
  %1830 = vmatprep.subr.mxu0 0.0
  %1831 = vmatpush1.msra.mxu0 0.0
  %1832 = vmatprep.subr.mxu0 0.0
  %1833 = vmatpush1.msra.mxu0 0.0
  %1834 = vmatprep.subr.mxu0 0.0
  %1835 = vmatpush1.msra.mxu0 0.0
  %1836 = vmatprep.subr.mxu0 0.0
  %1837 = vmatpush1.msra.mxu0 0.0
  %1838 = vmatprep.subr.mxu0 0.0
  %1839 = vmatpush1.msra.mxu0 0.0
  %1840 = vmatprep.subr.mxu0 0.0
  %1841 = vmatpush1.msra.mxu0 0.0
  %1842 = vmatprep.subr.mxu0 0.0
  %1843 = vmatpush1.msra.mxu0 0.0
  %1844 = vmatprep.subr.mxu0 0.0
  %1845 = vmatpush1.msra.mxu0 0.0
  %1846 = vmatprep.subr.mxu0 0.0
  %1847 = vmatpush1.msra.mxu0 0.0
  %1848 = vmatprep.subr.mxu0 0.0
  %1849 = vmatpush1.msra.mxu0 0.0
  %1850 = vmatprep.subr.mxu0 0.0
  %1851 = vmatpush1.msra.mxu0 0.0
  %1852 = vmatprep.subr.mxu0 0.0
  %1853 = vmatpush1.msra.mxu0 0.0
  %1854 = vmatprep.subr.mxu0 0.0
  %1855 = vmatpush1.msra.mxu0 0.0
  %1856 = vmatprep.subr.mxu0 0.0
  %1857 = vmatpush1.msra.mxu0 0.0
  %1858 = vmatprep.subr.mxu0 0.0
  %1859 = vmatpush1.msra.mxu0 0.0
  %1860 = vmatprep.subr.mxu0 0.0
  %1861 = vmatpush1.msra.mxu0 0.0
  %1862 = vmatprep.subr.mxu0 0.0
  %1863 = vmatpush1.msra.mxu0 0.0
  %1864 = vmatprep.subr.mxu0 0.0
  %1865 = vmatpush1.msra.mxu0 0.0
  %1866 = vmatprep.subr.mxu0 0.0
  %1867 = vmatpush1.msra.mxu0 0.0
  %1868 = vmatprep.subr.mxu0 0.0
  %1869 = vmatpush1.msra.mxu0 0.0
  %1870 = vmatprep.mubr.f32.mxu0 0.0
  %1871 = vmatmul.mubr.f32.gmra.mrb[0].mxu0 %v1804
  %v1872 = vpop.f32.mrb[0].mxu0
  %v1873 = vadd.f32 0.0, %v1872
  %v1874 = vpop.f32.mrb[0].mxu0
  %1875 = vdwg.mxu0
  %v1876 = vmul.f32 %v1873, %v1873
  %1878 = vrot.lane.b32.xlu0 %v1876, 112
  %v1879 = vpop.permute.xlu0 %1878
  %v1881 = vadd.f32 %v1876, %v1879
  %v1883 = vsel %vm505, %v1881, 0
  %1885 = vmatprep.subr.mxu0 0.0
  %1886 = vmatpush1.msra.mxu0 %v171
  %1887 = vmatprep.subr.mxu0 0.0
  %1888 = vmatpush1.msra.mxu0 %v172
  %1889 = vmatprep.subr.mxu0 0.0
  %1890 = vmatpush1.msra.mxu0 0.0
  %1891 = vmatprep.subr.mxu0 0.0
  %1892 = vmatpush1.msra.mxu0 0.0
  %1893 = vmatprep.subr.mxu0 0.0
  %1894 = vmatpush1.msra.mxu0 0.0
  %1895 = vmatprep.subr.mxu0 0.0
  %1896 = vmatpush1.msra.mxu0 0.0
  %1897 = vmatprep.subr.mxu0 0.0
  %1898 = vmatpush1.msra.mxu0 0.0
  %1899 = vmatprep.subr.mxu0 0.0
  %1900 = vmatpush1.msra.mxu0 0.0
  %1901 = vmatprep.subr.mxu0 0.0
  %1902 = vmatpush1.msra.mxu0 0.0
  %1903 = vmatprep.subr.mxu0 0.0
  %1904 = vmatpush1.msra.mxu0 0.0
  %1905 = vmatprep.subr.mxu0 0.0
  %1906 = vmatpush1.msra.mxu0 0.0
  %1907 = vmatprep.subr.mxu0 0.0
  %1908 = vmatpush1.msra.mxu0 0.0
  %1909 = vmatprep.subr.mxu0 0.0
  %1910 = vmatpush1.msra.mxu0 0.0
  %1911 = vmatprep.subr.mxu0 0.0
  %1912 = vmatpush1.msra.mxu0 0.0
  %1913 = vmatprep.subr.mxu0 0.0
  %1914 = vmatpush1.msra.mxu0 0.0
  %1915 = vmatprep.subr.mxu0 0.0
  %1916 = vmatpush1.msra.mxu0 0.0
  %1917 = vmatprep.subr.mxu0 0.0
  %1918 = vmatpush1.msra.mxu0 0.0
  %1919 = vmatprep.subr.mxu0 0.0
  %1920 = vmatpush1.msra.mxu0 0.0
  %1921 = vmatprep.subr.mxu0 0.0
  %1922 = vmatpush1.msra.mxu0 0.0
  %1923 = vmatprep.subr.mxu0 0.0
  %1924 = vmatpush1.msra.mxu0 0.0
  %1925 = vmatprep.subr.mxu0 0.0
  %1926 = vmatpush1.msra.mxu0 0.0
  %1927 = vmatprep.subr.mxu0 0.0
  %1928 = vmatpush1.msra.mxu0 0.0
  %1929 = vmatprep.subr.mxu0 0.0
  %1930 = vmatpush1.msra.mxu0 0.0
  %1931 = vmatprep.subr.mxu0 0.0
  %1932 = vmatpush1.msra.mxu0 0.0
  %1933 = vmatprep.subr.mxu0 0.0
  %1934 = vmatpush1.msra.mxu0 0.0
  %1935 = vmatprep.subr.mxu0 0.0
  %1936 = vmatpush1.msra.mxu0 0.0
  %1937 = vmatprep.subr.mxu0 0.0
  %1938 = vmatpush1.msra.mxu0 0.0
  %1939 = vmatprep.subr.mxu0 0.0
  %1940 = vmatpush1.msra.mxu0 0.0
  %1941 = vmatprep.subr.mxu0 0.0
  %1942 = vmatpush1.msra.mxu0 0.0
  %1943 = vmatprep.subr.mxu0 0.0
  %1944 = vmatpush1.msra.mxu0 0.0
  %1945 = vmatprep.subr.mxu0 0.0
  %1946 = vmatpush1.msra.mxu0 0.0
  %1947 = vmatprep.subr.mxu0 0.0
  %1948 = vmatpush1.msra.mxu0 0.0
  %1949 = vmatprep.mubr.f32.mxu0 0.0
  %1950 = vmatmul.mubr.f32.gmra.mrb[0].mxu0 %v1883
  %v1951 = vpop.f32.mrb[0].mxu0
  %v1952 = vadd.f32 0.0, %v1951
  %v1953 = vpop.f32.mrb[0].mxu0
  %1954 = vdwg.mxu0
  %v1955 = vxor.u32 %v1952, 2147483648
  %v1956 = vmul.f32 %v1955, 1.442695
  %v1957 = vpow.pop %v1956
  %v1958 = vadd.f32 %v1957, 1.0
  %v1959 = vrcp.pop %v1958
  %v1960 = vmul.f32 1.0, %v1959
  %v1961 = vtanh.pop %v1952
  %1963 = vset.pattern.permute.xlu0 1
  %1964 = vperm.xlu0 %1963, %v1960
  %v1965 = vpop.permute.xlu0 %1964
  %v1967 = vmul.f32 %v1965, %v1459
  %1969 = vrot.lane.b32.xlu0 %v1961, 125
  %v1970 = vpop.permute.xlu0 %1969
  %v1972 = vmul.f32 %v1960, %v1970
  %1974 = vset.pattern.permute.xlu0 0
  %1975 = vperm.xlu0 %1974, %v1972
  %v1976 = vpop.permute.xlu0 %1975
  %v1978 = vadd.f32 %v1967, %v1976
  %v1979 = vtanh.pop %v1978
  %1980 = vset.pattern.permute.xlu0 2
  %1981 = vperm.xlu0 %1980, %v1960
  %v1982 = vpop.permute.xlu0 %1981
  %v1984 = vmul.f32 %v1982, %v1979
  %s1985 = scalar_lea.vmem %s8, 16
  %1986 = vst.msk [vmem:[%s1985] sm:$0x1f] %vm688, %v1984
  %s1987 = scalar_lea.vmem %s9, 16
  %1988 = vst.msk [vmem:[%s1987] sm:$0x1f] %vm688, %v1978
  %v1990 = vsel %vm175, %v1984, 0
  %1992 = vmatprep.subr.mxu0 0.0
  %1993 = vmatpush1.msra.mxu0 %v168
  %1994 = vmatprep.subr.mxu0 0.0
  %1995 = vmatpush1.msra.mxu0 0.0
  %1996 = vmatprep.subr.mxu0 0.0
  %1997 = vmatpush1.msra.mxu0 0.0
  %1998 = vmatprep.subr.mxu0 0.0
  %1999 = vmatpush1.msra.mxu0 0.0
  %2000 = vmatprep.subr.mxu0 0.0
  %2001 = vmatpush1.msra.mxu0 0.0
  %2002 = vmatprep.subr.mxu0 0.0
  %2003 = vmatpush1.msra.mxu0 0.0
  %2004 = vmatprep.subr.mxu0 0.0
  %2005 = vmatpush1.msra.mxu0 0.0
  %2006 = vmatprep.subr.mxu0 0.0
  %2007 = vmatpush1.msra.mxu0 0.0
  %2008 = vmatprep.subr.mxu0 0.0
  %2009 = vmatpush1.msra.mxu0 0.0
  %2010 = vmatprep.subr.mxu0 0.0
  %2011 = vmatpush1.msra.mxu0 0.0
  %2012 = vmatprep.subr.mxu0 0.0
  %2013 = vmatpush1.msra.mxu0 0.0
  %2014 = vmatprep.subr.mxu0 0.0
  %2015 = vmatpush1.msra.mxu0 0.0
  %2016 = vmatprep.subr.mxu0 0.0
  %2017 = vmatpush1.msra.mxu0 0.0
  %2018 = vmatprep.subr.mxu0 0.0
  %2019 = vmatpush1.msra.mxu0 0.0
  %2020 = vmatprep.subr.mxu0 0.0
  %2021 = vmatpush1.msra.mxu0 0.0
  %2022 = vmatprep.subr.mxu0 0.0
  %2023 = vmatpush1.msra.mxu0 0.0
  %2024 = vmatprep.subr.mxu0 0.0
  %2025 = vmatpush1.msra.mxu0 0.0
  %2026 = vmatprep.subr.mxu0 0.0
  %2027 = vmatpush1.msra.mxu0 0.0
  %2028 = vmatprep.subr.mxu0 0.0
  %2029 = vmatpush1.msra.mxu0 0.0
  %2030 = vmatprep.subr.mxu0 0.0
  %2031 = vmatpush1.msra.mxu0 0.0
  %2032 = vmatprep.subr.mxu0 0.0
  %2033 = vmatpush1.msra.mxu0 0.0
  %2034 = vmatprep.subr.mxu0 0.0
  %2035 = vmatpush1.msra.mxu0 0.0
  %2036 = vmatprep.subr.mxu0 0.0
  %2037 = vmatpush1.msra.mxu0 0.0
  %2038 = vmatprep.subr.mxu0 0.0
  %2039 = vmatpush1.msra.mxu0 0.0
  %2040 = vmatprep.subr.mxu0 0.0
  %2041 = vmatpush1.msra.mxu0 0.0
  %2042 = vmatprep.subr.mxu0 0.0
  %2043 = vmatpush1.msra.mxu0 0.0
  %2044 = vmatprep.subr.mxu0 0.0
  %2045 = vmatpush1.msra.mxu0 0.0
  %2046 = vmatprep.subr.mxu0 0.0
  %2047 = vmatpush1.msra.mxu0 0.0
  %2048 = vmatprep.subr.mxu0 0.0
  %2049 = vmatpush1.msra.mxu0 0.0
  %2050 = vmatprep.subr.mxu0 0.0
  %2051 = vmatpush1.msra.mxu0 0.0
  %2052 = vmatprep.subr.mxu0 0.0
  %2053 = vmatpush1.msra.mxu0 0.0
  %2054 = vmatprep.subr.mxu0 0.0
  %2055 = vmatpush1.msra.mxu0 0.0
  %2056 = vmatprep.mubr.f32.mxu0 0.0
  %2057 = vmatmul.mubr.f32.gmra.mrb[0].mxu0 %v1990
  %v2058 = vpop.f32.mrb[0].mxu0
  %v2059 = vadd.f32 0.0, %v2058
  %v2060 = vpop.f32.mrb[0].mxu0
  %2061 = vdwg.mxu0
  %v2063 = vrot.slane %v2059, 1
  %v2065 = vadd.f32 %v137, %v2063
  %v2066 = vadd.f32 %v142, %v2063
  %v2067 = vtanh.pop %v2065
  %v2068 = vtanh.pop %v2066
  %v2069 = vmul.f32 %v2067, 1.5707964
  %v2070 = vmul.f32 %v2068, 1.5707964
  %v2071 = vand.u32 2147483647, %v2069
  %vm2072 = vcmp.le.f32.partialorder %v2071, 0.7853982
  %vm2073 = vcmp.lt.s32.totalorder %v2069, 0
  %v2074 = vand.u32 %v2069, 2139095040
  %v2075 = vshrl.u32 %v2074, 23
  %v2076 = vsub.s32 %v2075, 127
  %v2077 = vand.u32 2147483647, %v2069
  %v2078 = vand.u32 %v2077, 8388607
  %v2079 = vor.u32 %v2078, 8388608
  %v2080 = vsub.s32 0, %v2079
  %v2081 = vadd.s32 %v2076, 1
  %vm2082 = vcmp.gt.s32.totalorder %v2081, 0
  %v2083 = vsel %vm2082, %v2081, 0
  %v2084 = vshrl.u32 %v2083, 5
  %v2085 = vand.u32 %v2083, 31
  %v2086 = vsub.s32 32, %v2085
  %v2087 = vshrl.u32 683565275, %v2086
  %v2088 = vshll.u32 683565275, %v2085
  %v2089 = vshrl.u32 2475754826, %v2086
  %v2090 = vor.u32 %v2088, %v2089
  %v2091 = vshll.u32 2475754826, %v2085
  %v2092 = vshrl.u32 2131351028, %v2086
  %v2093 = vor.u32 %v2091, %v2092
  %v2094 = vshll.u32 2131351028, %v2085
  %v2095 = vshrl.u32 2102212464, %v2086
  %v2096 = vor.u32 %v2094, %v2095
  %v2097 = vshll.u32 2102212464, %v2085
  %v2098 = vshrl.u32 920167782, %v2086
  %v2099 = vor.u32 %v2097, %v2098
  %v2100 = vshll.u32 920167782, %v2085
  %v2101 = vshrl.u32 1326507024, %v2086
  %v2102 = vor.u32 %v2100, %v2101
  %vm2103 = vcmp.lt.s32.totalorder %v2084, 1
  %vm2104 = vcmp.lt.s32.totalorder %v2084, 2
  %vm2105 = vcmp.lt.s32.totalorder %v2084, 3
  %vm2106 = vcmp.lt.s32.totalorder %v2084, 4
  %v2107 = vsel %vm2103, %v2087, %v2090
  %v2108 = vsel %vm2106, %v2096, 2102212464
  %v2109 = vsel %vm2105, %v2093, %v2108
  %v2110 = vsel %vm2104, %v2107, %v2109
  %v2111 = vsel %vm2103, %v2090, %v2093
  %v2112 = vsel %vm2106, %v2099, 920167782
  %v2113 = vsel %vm2105, %v2096, %v2112
  %v2114 = vsel %vm2104, %v2111, %v2113
  %v2115 = vsel %vm2103, %v2093, %v2096
  %v2116 = vsel %vm2106, %v2102, 1326507024
  %v2117 = vsel %vm2105, %v2099, %v2116
  %v2118 = vsel %vm2104, %v2115, %v2117
  %v2119 = vshll.u32 %v2079, 8
  %v2120 = vmul.u32.u64.compose %v2119, %v2118
  %v2121 = vextract.low.u32 %v2120
  %v2122 = vextract.high.u32 %v2120
  %v2123 = vmul.u32.u64.compose %v2119, %v2114
  %v2124 = vextract.low.u32 %v2123
  %v2125 = vextract.high.u32 %v2123
  %v2126 = vmul.u32 %v2119, %v2110
  %v2127 = vadd.s32 %v2122, %v2124
  %vm2128 = vc.u32 %v2122, %v2124
  %v2129 = vadd.s32 %v2125, 1
  %v2130 = vsel %vm2128, %v2129, %v2125
  %v2131 = vadd.s32 %v2126, %v2130
  %v2132 = vadd.s32 %v2131, 536870912
  %v2133 = vshrl.u32 %v2132, 30
  %v2134 = vshll.u32 %v2133, 30
  %v2135 = vsub.s32 %v2131, %v2134
  %vm2136 = vcmp.lt.s32.totalorder %v2135, 0
  %v2137 = vsub.s32 0, %v2135
  %v2138 = vsel %vm2136, %v2137, %v2135
  %v2139 = vclz %v2138
  %v2140 = vsub.s32 %v2139, 2
  %vm2141 = vcmp.gt.s32.totalorder 0, %v2140
  %v2142 = vsel %vm2141, 0, %v2140
  %v2143 = vsub.s32 32, %v2142
  %v2144 = vshll.u32 %v2135, %v2142
  %v2145 = vshrl.u32 %v2127, %v2143
  %v2146 = vor.u32 %v2144, %v2145
  %v2147 = vsub.s32 4294967266, %v2142
  %v2148 = vadd.s32 %v2147, 127
  %v2149 = vshll.u32 %v2148, 23
  %v2150 = vor.u32 4788187, %v2149
  %v2151 = vand.u32 2147483647, %v2150
  %v2153 = vcvt.s32.f32 %v2146
  %v2154 = vmul.f32 %v2153, %v2151
  %v2155 = vxor.u32 %v2154, 2147483648
  %v2156 = vsel %vm2073, %v2155, %v2154
  %v2157 = vsub.s32 4, %v2133
  %v2158 = vsel %vm2073, %v2157, %v2133
  %v2159 = vsel %vm2072, %v2069, %v2156
  %v2160 = vsel %vm2072, 0, %v2158
  %v2161 = vcosq.f32.pop %v2159
  %v2162 = vsinq.f32.pop %v2159
  %vm2163 = vweird.f32 %v2069
  %v2164 = vand.u32 %v2160, 3
  %vm2165 = vcmp.lt.s32.totalorder %v2164, 2
  %vm2166 = vcmp.eq.s32.totalorder %v2164, 0
  %v2167 = vxor.u32 %v2162, 2147483648
  %v2168 = vsel %vm2166, %v2161, %v2167
  %vm2169 = vcmp.eq.s32.totalorder %v2164, 2
  %v2170 = vxor.u32 %v2161, 2147483648
  %v2171 = vsel %vm2169, %v2170, %v2162
  %v2172 = vsel %vm2165, %v2168, %v2171
  %v2173 = vsel %vm2163, nan, %v2172
  %v2174 = vand.u32 2147483647, %v2070
  %vm2175 = vcmp.le.f32.partialorder %v2174, 0.7853982
  %vm2176 = vcmp.lt.s32.totalorder %v2070, 0
  %v2177 = vand.u32 %v2070, 2139095040
  %v2178 = vshrl.u32 %v2177, 23
  %v2179 = vsub.s32 %v2178, 127
  %v2180 = vand.u32 2147483647, %v2070
  %v2181 = vand.u32 %v2180, 8388607
  %v2182 = vor.u32 %v2181, 8388608
  %v2183 = vsub.s32 0, %v2182
  %v2184 = vadd.s32 %v2179, 1
  %vm2185 = vcmp.gt.s32.totalorder %v2184, 0
  %v2186 = vsel %vm2185, %v2184, 0
  %v2187 = vshrl.u32 %v2186, 5
  %v2188 = vand.u32 %v2186, 31
  %v2189 = vsub.s32 32, %v2188
  %v2190 = vshrl.u32 683565275, %v2189
  %v2191 = vshll.u32 683565275, %v2188
  %v2192 = vshrl.u32 2475754826, %v2189
  %v2193 = vor.u32 %v2191, %v2192
  %v2194 = vshll.u32 2475754826, %v2188
  %v2195 = vshrl.u32 2131351028, %v2189
  %v2196 = vor.u32 %v2194, %v2195
  %v2197 = vshll.u32 2131351028, %v2188
  %v2198 = vshrl.u32 2102212464, %v2189
  %v2199 = vor.u32 %v2197, %v2198
  %v2200 = vshll.u32 2102212464, %v2188
  %v2201 = vshrl.u32 920167782, %v2189
  %v2202 = vor.u32 %v2200, %v2201
  %v2203 = vshll.u32 920167782, %v2188
  %v2204 = vshrl.u32 1326507024, %v2189
  %v2205 = vor.u32 %v2203, %v2204
  %vm2206 = vcmp.lt.s32.totalorder %v2187, 1
  %vm2207 = vcmp.lt.s32.totalorder %v2187, 2
  %vm2208 = vcmp.lt.s32.totalorder %v2187, 3
  %vm2209 = vcmp.lt.s32.totalorder %v2187, 4
  %v2210 = vsel %vm2206, %v2190, %v2193
  %v2211 = vsel %vm2209, %v2199, 2102212464
  %v2212 = vsel %vm2208, %v2196, %v2211
  %v2213 = vsel %vm2207, %v2210, %v2212
  %v2214 = vsel %vm2206, %v2193, %v2196
  %v2215 = vsel %vm2209, %v2202, 920167782
  %v2216 = vsel %vm2208, %v2199, %v2215
  %v2217 = vsel %vm2207, %v2214, %v2216
  %v2218 = vsel %vm2206, %v2196, %v2199
  %v2219 = vsel %vm2209, %v2205, 1326507024
  %v2220 = vsel %vm2208, %v2202, %v2219
  %v2221 = vsel %vm2207, %v2218, %v2220
  %v2222 = vshll.u32 %v2182, 8
  %v2223 = vmul.u32.u64.compose %v2222, %v2221
  %v2224 = vextract.low.u32 %v2223
  %v2225 = vextract.high.u32 %v2223
  %v2226 = vmul.u32.u64.compose %v2222, %v2217
  %v2227 = vextract.low.u32 %v2226
  %v2228 = vextract.high.u32 %v2226
  %v2229 = vmul.u32 %v2222, %v2213
  %v2230 = vadd.s32 %v2225, %v2227
  %vm2231 = vc.u32 %v2225, %v2227
  %v2232 = vadd.s32 %v2228, 1
  %v2233 = vsel %vm2231, %v2232, %v2228
  %v2234 = vadd.s32 %v2229, %v2233
  %v2235 = vadd.s32 %v2234, 536870912
  %v2236 = vshrl.u32 %v2235, 30
  %v2237 = vshll.u32 %v2236, 30
  %v2238 = vsub.s32 %v2234, %v2237
  %vm2239 = vcmp.lt.s32.totalorder %v2238, 0
  %v2240 = vsub.s32 0, %v2238
  %v2241 = vsel %vm2239, %v2240, %v2238
  %v2242 = vclz %v2241
  %v2243 = vsub.s32 %v2242, 2
  %vm2244 = vcmp.gt.s32.totalorder 0, %v2243
  %v2245 = vsel %vm2244, 0, %v2243
  %v2246 = vsub.s32 32, %v2245
  %v2247 = vshll.u32 %v2238, %v2245
  %v2248 = vshrl.u32 %v2230, %v2246
  %v2249 = vor.u32 %v2247, %v2248
  %v2250 = vsub.s32 4294967266, %v2245
  %v2251 = vadd.s32 %v2250, 127
  %v2252 = vshll.u32 %v2251, 23
  %v2253 = vor.u32 4788187, %v2252
  %v2254 = vand.u32 2147483647, %v2253
  %v2256 = vcvt.s32.f32 %v2249
  %v2257 = vmul.f32 %v2256, %v2254
  %v2258 = vxor.u32 %v2257, 2147483648
  %v2259 = vsel %vm2176, %v2258, %v2257
  %v2260 = vsub.s32 4, %v2236
  %v2261 = vsel %vm2176, %v2260, %v2236
  %v2262 = vsel %vm2175, %v2070, %v2259
  %v2263 = vsel %vm2175, 0, %v2261
  %v2264 = vcosq.f32.pop %v2262
  %v2265 = vsinq.f32.pop %v2262
  %vm2266 = vweird.f32 %v2070
  %v2267 = vand.u32 %v2263, 3
  %vm2268 = vcmp.lt.s32.totalorder %v2267, 2
  %vm2269 = vcmp.eq.s32.totalorder %v2267, 0
  %v2270 = vxor.u32 %v2265, 2147483648
  %v2271 = vsel %vm2269, %v2264, %v2270
  %vm2272 = vcmp.eq.s32.totalorder %v2267, 2
  %v2273 = vxor.u32 %v2264, 2147483648
  %v2274 = vsel %vm2272, %v2273, %v2265
  %v2275 = vsel %vm2268, %v2271, %v2274
  %v2276 = vsel %vm2266, nan, %v2275
  %v2277 = vand.u32 2147483647, %v2069
  %vm2278 = vcmp.le.f32.partialorder %v2277, 0.7853982
  %vm2279 = vcmp.lt.s32.totalorder %v2069, 0
  %v2280 = vand.u32 %v2069, 2139095040
  %v2281 = vshrl.u32 %v2280, 23
  %v2282 = vsub.s32 %v2281, 127
  %v2283 = vand.u32 2147483647, %v2069
  %v2284 = vand.u32 %v2283, 8388607
  %v2285 = vor.u32 %v2284, 8388608
  %v2286 = vsub.s32 0, %v2285
  %v2287 = vadd.s32 %v2282, 1
  %vm2288 = vcmp.gt.s32.totalorder %v2287, 0
  %v2289 = vsel %vm2288, %v2287, 0
  %v2290 = vshrl.u32 %v2289, 5
  %v2291 = vand.u32 %v2289, 31
  %v2292 = vsub.s32 32, %v2291
  %v2293 = vshrl.u32 683565275, %v2292
  %v2294 = vshll.u32 683565275, %v2291
  %v2295 = vshrl.u32 2475754826, %v2292
  %v2296 = vor.u32 %v2294, %v2295
  %v2297 = vshll.u32 2475754826, %v2291
  %v2298 = vshrl.u32 2131351028, %v2292
  %v2299 = vor.u32 %v2297, %v2298
  %v2300 = vshll.u32 2131351028, %v2291
  %v2301 = vshrl.u32 2102212464, %v2292
  %v2302 = vor.u32 %v2300, %v2301
  %v2303 = vshll.u32 2102212464, %v2291
  %v2304 = vshrl.u32 920167782, %v2292
  %v2305 = vor.u32 %v2303, %v2304
  %v2306 = vshll.u32 920167782, %v2291
  %v2307 = vshrl.u32 1326507024, %v2292
  %v2308 = vor.u32 %v2306, %v2307
  %vm2309 = vcmp.lt.s32.totalorder %v2290, 1
  %vm2310 = vcmp.lt.s32.totalorder %v2290, 2
  %vm2311 = vcmp.lt.s32.totalorder %v2290, 3
  %vm2312 = vcmp.lt.s32.totalorder %v2290, 4
  %v2313 = vsel %vm2309, %v2293, %v2296
  %v2314 = vsel %vm2312, %v2302, 2102212464
  %v2315 = vsel %vm2311, %v2299, %v2314
  %v2316 = vsel %vm2310, %v2313, %v2315
  %v2317 = vsel %vm2309, %v2296, %v2299
  %v2318 = vsel %vm2312, %v2305, 920167782
  %v2319 = vsel %vm2311, %v2302, %v2318
  %v2320 = vsel %vm2310, %v2317, %v2319
  %v2321 = vsel %vm2309, %v2299, %v2302
  %v2322 = vsel %vm2312, %v2308, 1326507024
  %v2323 = vsel %vm2311, %v2305, %v2322
  %v2324 = vsel %vm2310, %v2321, %v2323
  %v2325 = vshll.u32 %v2285, 8
  %v2326 = vmul.u32.u64.compose %v2325, %v2324
  %v2327 = vextract.low.u32 %v2326
  %v2328 = vextract.high.u32 %v2326
  %v2329 = vmul.u32.u64.compose %v2325, %v2320
  %v2330 = vextract.low.u32 %v2329
  %v2331 = vextract.high.u32 %v2329
  %v2332 = vmul.u32 %v2325, %v2316
  %v2333 = vadd.s32 %v2328, %v2330
  %vm2334 = vc.u32 %v2328, %v2330
  %v2335 = vadd.s32 %v2331, 1
  %v2336 = vsel %vm2334, %v2335, %v2331
  %v2337 = vadd.s32 %v2332, %v2336
  %v2338 = vadd.s32 %v2337, 536870912
  %v2339 = vshrl.u32 %v2338, 30
  %v2340 = vshll.u32 %v2339, 30
  %v2341 = vsub.s32 %v2337, %v2340
  %vm2342 = vcmp.lt.s32.totalorder %v2341, 0
  %v2343 = vsub.s32 0, %v2341
  %v2344 = vsel %vm2342, %v2343, %v2341
  %v2345 = vclz %v2344
  %v2346 = vsub.s32 %v2345, 2
  %vm2347 = vcmp.gt.s32.totalorder 0, %v2346
  %v2348 = vsel %vm2347, 0, %v2346
  %v2349 = vsub.s32 32, %v2348
  %v2350 = vshll.u32 %v2341, %v2348
  %v2351 = vshrl.u32 %v2333, %v2349
  %v2352 = vor.u32 %v2350, %v2351
  %v2353 = vsub.s32 4294967266, %v2348
  %v2354 = vadd.s32 %v2353, 127
  %v2355 = vshll.u32 %v2354, 23
  %v2356 = vor.u32 4788187, %v2355
  %v2357 = vand.u32 2147483647, %v2356
  %v2359 = vcvt.s32.f32 %v2352
  %v2360 = vmul.f32 %v2359, %v2357
  %v2361 = vxor.u32 %v2360, 2147483648
  %v2362 = vsel %vm2279, %v2361, %v2360
  %v2363 = vsub.s32 4, %v2339
  %v2364 = vsel %vm2279, %v2363, %v2339
  %v2365 = vsel %vm2278, %v2069, %v2362
  %v2366 = vsel %vm2278, 0, %v2364
  %v2367 = vcosq.f32.pop %v2365
  %v2368 = vsinq.f32.pop %v2365
  %vm2369 = vweird.f32 %v2069
  %v2370 = vadd.s32 %v2366, 3
  %v2371 = vand.u32 %v2370, 3
  %vm2372 = vcmp.lt.s32.totalorder %v2371, 2
  %vm2373 = vcmp.eq.s32.totalorder %v2371, 0
  %v2374 = vxor.u32 %v2368, 2147483648
  %v2375 = vsel %vm2373, %v2367, %v2374
  %vm2376 = vcmp.eq.s32.totalorder %v2371, 2
  %v2377 = vxor.u32 %v2367, 2147483648
  %v2378 = vsel %vm2376, %v2377, %v2368
  %v2379 = vsel %vm2372, %v2375, %v2378
  %v2380 = vsel %vm2369, nan, %v2379
  %v2381 = vand.u32 2147483647, %v2070
  %vm2382 = vcmp.le.f32.partialorder %v2381, 0.7853982
  %vm2383 = vcmp.lt.s32.totalorder %v2070, 0
  %v2384 = vand.u32 %v2070, 2139095040
  %v2385 = vshrl.u32 %v2384, 23
  %v2386 = vsub.s32 %v2385, 127
  %v2387 = vand.u32 2147483647, %v2070
  %v2388 = vand.u32 %v2387, 8388607
  %v2389 = vor.u32 %v2388, 8388608
  %v2390 = vsub.s32 0, %v2389
  %v2391 = vadd.s32 %v2386, 1
  %vm2392 = vcmp.gt.s32.totalorder %v2391, 0
  %v2393 = vsel %vm2392, %v2391, 0
  %v2394 = vshrl.u32 %v2393, 5
  %v2395 = vand.u32 %v2393, 31
  %v2396 = vsub.s32 32, %v2395
  %v2397 = vshrl.u32 683565275, %v2396
  %v2398 = vshll.u32 683565275, %v2395
  %v2399 = vshrl.u32 2475754826, %v2396
  %v2400 = vor.u32 %v2398, %v2399
  %v2401 = vshll.u32 2475754826, %v2395
  %v2402 = vshrl.u32 2131351028, %v2396
  %v2403 = vor.u32 %v2401, %v2402
  %v2404 = vshll.u32 2131351028, %v2395
  %v2405 = vshrl.u32 2102212464, %v2396
  %v2406 = vor.u32 %v2404, %v2405
  %v2407 = vshll.u32 2102212464, %v2395
  %v2408 = vshrl.u32 920167782, %v2396
  %v2409 = vor.u32 %v2407, %v2408
  %v2410 = vshll.u32 920167782, %v2395
  %v2411 = vshrl.u32 1326507024, %v2396
  %v2412 = vor.u32 %v2410, %v2411
  %vm2413 = vcmp.lt.s32.totalorder %v2394, 1
  %vm2414 = vcmp.lt.s32.totalorder %v2394, 2
  %vm2415 = vcmp.lt.s32.totalorder %v2394, 3
  %vm2416 = vcmp.lt.s32.totalorder %v2394, 4
  %v2417 = vsel %vm2413, %v2397, %v2400
  %v2418 = vsel %vm2416, %v2406, 2102212464
  %v2419 = vsel %vm2415, %v2403, %v2418
  %v2420 = vsel %vm2414, %v2417, %v2419
  %v2421 = vsel %vm2413, %v2400, %v2403
  %v2422 = vsel %vm2416, %v2409, 920167782
  %v2423 = vsel %vm2415, %v2406, %v2422
  %v2424 = vsel %vm2414, %v2421, %v2423
  %v2425 = vsel %vm2413, %v2403, %v2406
  %v2426 = vsel %vm2416, %v2412, 1326507024
  %v2427 = vsel %vm2415, %v2409, %v2426
  %v2428 = vsel %vm2414, %v2425, %v2427
  %v2429 = vshll.u32 %v2389, 8
  %v2430 = vmul.u32.u64.compose %v2429, %v2428
  %v2431 = vextract.low.u32 %v2430
  %v2432 = vextract.high.u32 %v2430
  %v2433 = vmul.u32.u64.compose %v2429, %v2424
  %v2434 = vextract.low.u32 %v2433
  %v2435 = vextract.high.u32 %v2433
  %v2436 = vmul.u32 %v2429, %v2420
  %v2437 = vadd.s32 %v2432, %v2434
  %vm2438 = vc.u32 %v2432, %v2434
  %v2439 = vadd.s32 %v2435, 1
  %v2440 = vsel %vm2438, %v2439, %v2435
  %v2441 = vadd.s32 %v2436, %v2440
  %v2442 = vadd.s32 %v2441, 536870912
  %v2443 = vshrl.u32 %v2442, 30
  %v2444 = vshll.u32 %v2443, 30
  %v2445 = vsub.s32 %v2441, %v2444
  %vm2446 = vcmp.lt.s32.totalorder %v2445, 0
  %v2447 = vsub.s32 0, %v2445
  %v2448 = vsel %vm2446, %v2447, %v2445
  %v2449 = vclz %v2448
  %v2450 = vsub.s32 %v2449, 2
  %vm2451 = vcmp.gt.s32.totalorder 0, %v2450
  %v2452 = vsel %vm2451, 0, %v2450
  %v2453 = vsub.s32 32, %v2452
  %v2454 = vshll.u32 %v2445, %v2452
  %v2455 = vshrl.u32 %v2437, %v2453
  %v2456 = vor.u32 %v2454, %v2455
  %v2457 = vsub.s32 4294967266, %v2452
  %v2458 = vadd.s32 %v2457, 127
  %v2459 = vshll.u32 %v2458, 23
  %v2460 = vor.u32 4788187, %v2459
  %v2461 = vand.u32 2147483647, %v2460
  %v2463 = vcvt.s32.f32 %v2456
  %v2464 = vmul.f32 %v2463, %v2461
  %v2465 = vxor.u32 %v2464, 2147483648
  %v2466 = vsel %vm2383, %v2465, %v2464
  %v2467 = vsub.s32 4, %v2443
  %v2468 = vsel %vm2383, %v2467, %v2443
  %v2469 = vsel %vm2382, %v2070, %v2466
  %v2470 = vsel %vm2382, 0, %v2468
  %v2471 = vcosq.f32.pop %v2469
  %v2472 = vsinq.f32.pop %v2469
  %vm2473 = vweird.f32 %v2070
  %v2474 = vadd.s32 %v2470, 3
  %v2475 = vand.u32 %v2474, 3
  %vm2476 = vcmp.lt.s32.totalorder %v2475, 2
  %vm2477 = vcmp.eq.s32.totalorder %v2475, 0
  %v2478 = vxor.u32 %v2472, 2147483648
  %v2479 = vsel %vm2477, %v2471, %v2478
  %vm2480 = vcmp.eq.s32.totalorder %v2475, 2
  %v2481 = vxor.u32 %v2471, 2147483648
  %v2482 = vsel %vm2480, %v2481, %v2472
  %v2483 = vsel %vm2476, %v2479, %v2482
  %v2484 = vsel %vm2473, nan, %v2483
  %v2485 = vsub.f32 %v2380, %v2173
  %v2486 = vsub.f32 %v2484, %v2276
  %2488 = vset.pattern.permute.xlu0 0
  %2489 = vperm.xlu0 %2488, %v2485
  %v2490 = vpop.permute.xlu0 %2489
  %2493 = vset.pattern.permute.xlu0 0
  %2494 = vperm.xlu0 %2493, %v2486
  %v2495 = vpop.permute.xlu0 %2494
  %v2497 = vmul.f32 %v2490, %v159
  %v2498 = vmul.f32 %v2495, %v159
  %2500 = vset.pattern.permute.xlu0 0
  %2501 = vperm.xlu0 %2500, %v2173
  %v2502 = vpop.permute.xlu0 %2501
  %2505 = vset.pattern.permute.xlu0 0
  %2506 = vperm.xlu0 %2505, %v2276
  %v2507 = vpop.permute.xlu0 %2506
  %v2509 = vadd.f32 %v2502, %v2497
  %v2510 = vadd.f32 %v2507, %v2498
  %2511 = vset.pattern.permute.xlu0 1
  %2512 = vperm.xlu0 %2511, %v2485
  %v2513 = vpop.permute.xlu0 %2512
  %2515 = vset.pattern.permute.xlu0 1
  %2516 = vperm.xlu0 %2515, %v2486
  %v2517 = vpop.permute.xlu0 %2516
  %v2519 = vmul.f32 %v2513, %v162
  %v2520 = vmul.f32 %v2517, %v162
  %2521 = vset.pattern.permute.xlu0 1
  %2522 = vperm.xlu0 %2521, %v2173
  %v2523 = vpop.permute.xlu0 %2522
  %2525 = vset.pattern.permute.xlu0 1
  %2526 = vperm.xlu0 %2525, %v2276
  %v2527 = vpop.permute.xlu0 %2526
  %v2529 = vadd.f32 %v2523, %v2519
  %v2530 = vadd.f32 %v2527, %v2520
  %v2531 = vmul.f32 %v2509, %v2529
  %v2532 = vmul.f32 %v2510, %v2530
  %2533 = vset.pattern.permute.xlu0 2
  %2534 = vperm.xlu0 %2533, %v2485
  %v2535 = vpop.permute.xlu0 %2534
  %2537 = vset.pattern.permute.xlu0 2
  %2538 = vperm.xlu0 %2537, %v2486
  %v2539 = vpop.permute.xlu0 %2538
  %v2541 = vmul.f32 %v2535, %v165
  %v2542 = vmul.f32 %v2539, %v165
  %2543 = vset.pattern.permute.xlu0 2
  %2544 = vperm.xlu0 %2543, %v2173
  %v2545 = vpop.permute.xlu0 %2544
  %2547 = vset.pattern.permute.xlu0 2
  %2548 = vperm.xlu0 %2547, %v2276
  %v2549 = vpop.permute.xlu0 %2548
  %v2551 = vadd.f32 %v2545, %v2541
  %v2552 = vadd.f32 %v2549, %v2542
  %v2553 = vmul.f32 %v2531, %v2551
  %v2554 = vmul.f32 %v2532, %v2552
  %2555 = vset.pattern.permute.xlu0 3
  %2556 = vperm.xlu0 %2555, %v2485
  %v2557 = vpop.permute.xlu0 %2556
  %2559 = vset.pattern.permute.xlu0 3
  %2560 = vperm.xlu0 %2559, %v2486
  %v2561 = vpop.permute.xlu0 %2560
  %v2563 = vmul.f32 %v2557, %v167
  %v2564 = vmul.f32 %v2561, %v167
  %2565 = vset.pattern.permute.xlu0 3
  %2566 = vperm.xlu0 %2565, %v2173
  %v2567 = vpop.permute.xlu0 %2566
  %2569 = vset.pattern.permute.xlu0 3
  %2570 = vperm.xlu0 %2569, %v2276
  %v2571 = vpop.permute.xlu0 %2570
  %v2573 = vadd.f32 %v2567, %v2563
  %v2574 = vadd.f32 %v2571, %v2564
  %v2575 = vmul.f32 %v2553, %v2573
  %v2576 = vmul.f32 %v2554, %v2574
  %vm2579 = vcmask 1040384
  %v2580 = vrot.slane %v2575, 7
  %v2581 = vrot.slane %v2576, 7
  %v2582 = vsel %vm2579, %v2580, %v2581
  %v2583 = vsel %vm505, %v2582, 0
  %2585 = vmatprep.subr.mxu0 0.0
  %2586 = vmatpush1.msra.mxu0 %v169
  %2587 = vmatprep.subr.mxu0 0.0
  %2588 = vmatpush1.msra.mxu0 %v170
  %2589 = vmatprep.subr.mxu0 0.0
  %2590 = vmatpush1.msra.mxu0 0.0
  %2591 = vmatprep.subr.mxu0 0.0
  %2592 = vmatpush1.msra.mxu0 0.0
  %2593 = vmatprep.subr.mxu0 0.0
  %2594 = vmatpush1.msra.mxu0 0.0
  %2595 = vmatprep.subr.mxu0 0.0
  %2596 = vmatpush1.msra.mxu0 0.0
  %2597 = vmatprep.subr.mxu0 0.0
  %2598 = vmatpush1.msra.mxu0 0.0
  %2599 = vmatprep.subr.mxu0 0.0
  %2600 = vmatpush1.msra.mxu0 0.0
  %2601 = vmatprep.subr.mxu0 0.0
  %2602 = vmatpush1.msra.mxu0 0.0
  %2603 = vmatprep.subr.mxu0 0.0
  %2604 = vmatpush1.msra.mxu0 0.0
  %2605 = vmatprep.subr.mxu0 0.0
  %2606 = vmatpush1.msra.mxu0 0.0
  %2607 = vmatprep.subr.mxu0 0.0
  %2608 = vmatpush1.msra.mxu0 0.0
  %2609 = vmatprep.subr.mxu0 0.0
  %2610 = vmatpush1.msra.mxu0 0.0
  %2611 = vmatprep.subr.mxu0 0.0
  %2612 = vmatpush1.msra.mxu0 0.0
  %2613 = vmatprep.subr.mxu0 0.0
  %2614 = vmatpush1.msra.mxu0 0.0
  %2615 = vmatprep.subr.mxu0 0.0
  %2616 = vmatpush1.msra.mxu0 0.0
  %2617 = vmatprep.subr.mxu0 0.0
  %2618 = vmatpush1.msra.mxu0 0.0
  %2619 = vmatprep.subr.mxu0 0.0
  %2620 = vmatpush1.msra.mxu0 0.0
  %2621 = vmatprep.subr.mxu0 0.0
  %2622 = vmatpush1.msra.mxu0 0.0
  %2623 = vmatprep.subr.mxu0 0.0
  %2624 = vmatpush1.msra.mxu0 0.0
  %2625 = vmatprep.subr.mxu0 0.0
  %2626 = vmatpush1.msra.mxu0 0.0
  %2627 = vmatprep.subr.mxu0 0.0
  %2628 = vmatpush1.msra.mxu0 0.0
  %2629 = vmatprep.subr.mxu0 0.0
  %2630 = vmatpush1.msra.mxu0 0.0
  %2631 = vmatprep.subr.mxu0 0.0
  %2632 = vmatpush1.msra.mxu0 0.0
  %2633 = vmatprep.subr.mxu0 0.0
  %2634 = vmatpush1.msra.mxu0 0.0
  %2635 = vmatprep.subr.mxu0 0.0
  %2636 = vmatpush1.msra.mxu0 0.0
  %2637 = vmatprep.subr.mxu0 0.0
  %2638 = vmatpush1.msra.mxu0 0.0
  %2639 = vmatprep.subr.mxu0 0.0
  %2640 = vmatpush1.msra.mxu0 0.0
  %2641 = vmatprep.subr.mxu0 0.0
  %2642 = vmatpush1.msra.mxu0 0.0
  %2643 = vmatprep.subr.mxu0 0.0
  %2644 = vmatpush1.msra.mxu0 0.0
  %2645 = vmatprep.subr.mxu0 0.0
  %2646 = vmatpush1.msra.mxu0 0.0
  %2647 = vmatprep.subr.mxu0 0.0
  %2648 = vmatpush1.msra.mxu0 0.0
  %2649 = vmatprep.mubr.f32.mxu0 0.0
  %2650 = vmatmul.mubr.f32.gmra.mrb[0].mxu0 %v2583
  %v2651 = vpop.f32.mrb[0].mxu0
  %v2652 = vadd.f32 0.0, %v2651
  %v2653 = vpop.f32.mrb[0].mxu0
  %2654 = vdwg.mxu0
  %v2655 = vmul.f32 %v2652, %v2652
  %2657 = vrot.lane.b32.xlu0 %v2655, 112
  %v2658 = vpop.permute.xlu0 %2657
  %v2660 = vadd.f32 %v2655, %v2658
  %v2662 = vsel %vm505, %v2660, 0
  %2664 = vmatprep.subr.mxu0 0.0
  %2665 = vmatpush1.msra.mxu0 %v171
  %2666 = vmatprep.subr.mxu0 0.0
  %2667 = vmatpush1.msra.mxu0 %v172
  %2668 = vmatprep.subr.mxu0 0.0
  %2669 = vmatpush1.msra.mxu0 0.0
  %2670 = vmatprep.subr.mxu0 0.0
  %2671 = vmatpush1.msra.mxu0 0.0
  %2672 = vmatprep.subr.mxu0 0.0
  %2673 = vmatpush1.msra.mxu0 0.0
  %2674 = vmatprep.subr.mxu0 0.0
  %2675 = vmatpush1.msra.mxu0 0.0
  %2676 = vmatprep.subr.mxu0 0.0
  %2677 = vmatpush1.msra.mxu0 0.0
  %2678 = vmatprep.subr.mxu0 0.0
  %2679 = vmatpush1.msra.mxu0 0.0
  %2680 = vmatprep.subr.mxu0 0.0
  %2681 = vmatpush1.msra.mxu0 0.0
  %2682 = vmatprep.subr.mxu0 0.0
  %2683 = vmatpush1.msra.mxu0 0.0
  %2684 = vmatprep.subr.mxu0 0.0
  %2685 = vmatpush1.msra.mxu0 0.0
  %2686 = vmatprep.subr.mxu0 0.0
  %2687 = vmatpush1.msra.mxu0 0.0
  %2688 = vmatprep.subr.mxu0 0.0
  %2689 = vmatpush1.msra.mxu0 0.0
  %2690 = vmatprep.subr.mxu0 0.0
  %2691 = vmatpush1.msra.mxu0 0.0
  %2692 = vmatprep.subr.mxu0 0.0
  %2693 = vmatpush1.msra.mxu0 0.0
  %2694 = vmatprep.subr.mxu0 0.0
  %2695 = vmatpush1.msra.mxu0 0.0
  %2696 = vmatprep.subr.mxu0 0.0
  %2697 = vmatpush1.msra.mxu0 0.0
  %2698 = vmatprep.subr.mxu0 0.0
  %2699 = vmatpush1.msra.mxu0 0.0
  %2700 = vmatprep.subr.mxu0 0.0
  %2701 = vmatpush1.msra.mxu0 0.0
  %2702 = vmatprep.subr.mxu0 0.0
  %2703 = vmatpush1.msra.mxu0 0.0
  %2704 = vmatprep.subr.mxu0 0.0
  %2705 = vmatpush1.msra.mxu0 0.0
  %2706 = vmatprep.subr.mxu0 0.0
  %2707 = vmatpush1.msra.mxu0 0.0
  %2708 = vmatprep.subr.mxu0 0.0
  %2709 = vmatpush1.msra.mxu0 0.0
  %2710 = vmatprep.subr.mxu0 0.0
  %2711 = vmatpush1.msra.mxu0 0.0
  %2712 = vmatprep.subr.mxu0 0.0
  %2713 = vmatpush1.msra.mxu0 0.0
  %2714 = vmatprep.subr.mxu0 0.0
  %2715 = vmatpush1.msra.mxu0 0.0
  %2716 = vmatprep.subr.mxu0 0.0
  %2717 = vmatpush1.msra.mxu0 0.0
  %2718 = vmatprep.subr.mxu0 0.0
  %2719 = vmatpush1.msra.mxu0 0.0
  %2720 = vmatprep.subr.mxu0 0.0
  %2721 = vmatpush1.msra.mxu0 0.0
  %2722 = vmatprep.subr.mxu0 0.0
  %2723 = vmatpush1.msra.mxu0 0.0
  %2724 = vmatprep.subr.mxu0 0.0
  %2725 = vmatpush1.msra.mxu0 0.0
  %2726 = vmatprep.subr.mxu0 0.0
  %2727 = vmatpush1.msra.mxu0 0.0
  %2728 = vmatprep.mubr.f32.mxu0 0.0
  %2729 = vmatmul.mubr.f32.gmra.mrb[0].mxu0 %v2662
  %v2730 = vpop.f32.mrb[0].mxu0
  %v2731 = vadd.f32 0.0, %v2730
  %v2732 = vpop.f32.mrb[0].mxu0
  %2733 = vdwg.mxu0
  %v2734 = vxor.u32 %v2731, 2147483648
  %v2735 = vmul.f32 %v2734, 1.442695
  %v2736 = vpow.pop %v2735
  %v2737 = vadd.f32 %v2736, 1.0
  %v2738 = vrcp.pop %v2737
  %v2739 = vmul.f32 1.0, %v2738
  %v2740 = vtanh.pop %v2731
  %2742 = vset.pattern.permute.xlu0 1
  %2743 = vperm.xlu0 %2742, %v2739
  %v2744 = vpop.permute.xlu0 %2743
  %v2746 = vmul.f32 %v2744, %v1978
  %2748 = vrot.lane.b32.xlu0 %v2740, 125
  %v2749 = vpop.permute.xlu0 %2748
  %v2751 = vmul.f32 %v2739, %v2749
  %2753 = vset.pattern.permute.xlu0 0
  %2754 = vperm.xlu0 %2753, %v2751
  %v2755 = vpop.permute.xlu0 %2754
  %v2757 = vadd.f32 %v2746, %v2755
  %v2758 = vtanh.pop %v2757
  %2759 = vset.pattern.permute.xlu0 2
  %2760 = vperm.xlu0 %2759, %v2739
  %v2761 = vpop.permute.xlu0 %2760
  %v2763 = vmul.f32 %v2761, %v2758
  %s2764 = scalar_lea.vmem %s8, 24
  %2765 = vst.msk [vmem:[%s2764] sm:$0x1f] %vm688, %v2763
  %s2766 = scalar_lea.vmem %s9, 24
  %2767 = vst.msk [vmem:[%s2766] sm:$0x1f] %vm688, %v2757
  %v2769 = vsel %vm175, %v2763, 0
  %2771 = vmatprep.subr.mxu0 0.0
  %2772 = vmatpush1.msra.mxu0 %v168
  %2773 = vmatprep.subr.mxu0 0.0
  %2774 = vmatpush1.msra.mxu0 0.0
  %2775 = vmatprep.subr.mxu0 0.0
  %2776 = vmatpush1.msra.mxu0 0.0
  %2777 = vmatprep.subr.mxu0 0.0
  %2778 = vmatpush1.msra.mxu0 0.0
  %2779 = vmatprep.subr.mxu0 0.0
  %2780 = vmatpush1.msra.mxu0 0.0
  %2781 = vmatprep.subr.mxu0 0.0
  %2782 = vmatpush1.msra.mxu0 0.0
  %2783 = vmatprep.subr.mxu0 0.0
  %2784 = vmatpush1.msra.mxu0 0.0
  %2785 = vmatprep.subr.mxu0 0.0
  %2786 = vmatpush1.msra.mxu0 0.0
  %2787 = vmatprep.subr.mxu0 0.0
  %2788 = vmatpush1.msra.mxu0 0.0
  %2789 = vmatprep.subr.mxu0 0.0
  %2790 = vmatpush1.msra.mxu0 0.0
  %2791 = vmatprep.subr.mxu0 0.0
  %2792 = vmatpush1.msra.mxu0 0.0
  %2793 = vmatprep.subr.mxu0 0.0
  %2794 = vmatpush1.msra.mxu0 0.0
  %2795 = vmatprep.subr.mxu0 0.0
  %2796 = vmatpush1.msra.mxu0 0.0
  %2797 = vmatprep.subr.mxu0 0.0
  %2798 = vmatpush1.msra.mxu0 0.0
  %2799 = vmatprep.subr.mxu0 0.0
  %2800 = vmatpush1.msra.mxu0 0.0
  %2801 = vmatprep.subr.mxu0 0.0
  %2802 = vmatpush1.msra.mxu0 0.0
  %2803 = vmatprep.subr.mxu0 0.0
  %2804 = vmatpush1.msra.mxu0 0.0
  %2805 = vmatprep.subr.mxu0 0.0
  %2806 = vmatpush1.msra.mxu0 0.0
  %2807 = vmatprep.subr.mxu0 0.0
  %2808 = vmatpush1.msra.mxu0 0.0
  %2809 = vmatprep.subr.mxu0 0.0
  %2810 = vmatpush1.msra.mxu0 0.0
  %2811 = vmatprep.subr.mxu0 0.0
  %2812 = vmatpush1.msra.mxu0 0.0
  %2813 = vmatprep.subr.mxu0 0.0
  %2814 = vmatpush1.msra.mxu0 0.0
  %2815 = vmatprep.subr.mxu0 0.0
  %2816 = vmatpush1.msra.mxu0 0.0
  %2817 = vmatprep.subr.mxu0 0.0
  %2818 = vmatpush1.msra.mxu0 0.0
  %2819 = vmatprep.subr.mxu0 0.0
  %2820 = vmatpush1.msra.mxu0 0.0
  %2821 = vmatprep.subr.mxu0 0.0
  %2822 = vmatpush1.msra.mxu0 0.0
  %2823 = vmatprep.subr.mxu0 0.0
  %2824 = vmatpush1.msra.mxu0 0.0
  %2825 = vmatprep.subr.mxu0 0.0
  %2826 = vmatpush1.msra.mxu0 0.0
  %2827 = vmatprep.subr.mxu0 0.0
  %2828 = vmatpush1.msra.mxu0 0.0
  %2829 = vmatprep.subr.mxu0 0.0
  %2830 = vmatpush1.msra.mxu0 0.0
  %2831 = vmatprep.subr.mxu0 0.0
  %2832 = vmatpush1.msra.mxu0 0.0
  %2833 = vmatprep.subr.mxu0 0.0
  %2834 = vmatpush1.msra.mxu0 0.0
  %2835 = vmatprep.mubr.f32.mxu0 0.0
  %2836 = vmatmul.mubr.f32.gmra.mrb[0].mxu0 %v2769
  %v2837 = vpop.f32.mrb[0].mxu0
  %v2838 = vadd.f32 0.0, %v2837
  %v2839 = vpop.f32.mrb[0].mxu0
  %2840 = vdwg.mxu0
  %v2842 = vrot.slane %v2838, 4
  %v2844 = vadd.f32 %v142, %v2842
  %v2845 = vadd.f32 %v147, %v2842
  %v2846 = vtanh.pop %v2844
  %v2847 = vtanh.pop %v2845
  %v2848 = vmul.f32 %v2846, 1.5707964
  %v2849 = vmul.f32 %v2847, 1.5707964
  %v2850 = vand.u32 2147483647, %v2848
  %vm2851 = vcmp.le.f32.partialorder %v2850, 0.7853982
  %vm2852 = vcmp.lt.s32.totalorder %v2848, 0
  %v2853 = vand.u32 %v2848, 2139095040
  %v2854 = vshrl.u32 %v2853, 23
  %v2855 = vsub.s32 %v2854, 127
  %v2856 = vand.u32 2147483647, %v2848
  %v2857 = vand.u32 %v2856, 8388607
  %v2858 = vor.u32 %v2857, 8388608
  %v2859 = vsub.s32 0, %v2858
  %v2860 = vadd.s32 %v2855, 1
  %vm2861 = vcmp.gt.s32.totalorder %v2860, 0
  %v2862 = vsel %vm2861, %v2860, 0
  %v2863 = vshrl.u32 %v2862, 5
  %v2864 = vand.u32 %v2862, 31
  %v2865 = vsub.s32 32, %v2864
  %v2866 = vshrl.u32 683565275, %v2865
  %v2867 = vshll.u32 683565275, %v2864
  %v2868 = vshrl.u32 2475754826, %v2865
  %v2869 = vor.u32 %v2867, %v2868
  %v2870 = vshll.u32 2475754826, %v2864
  %v2871 = vshrl.u32 2131351028, %v2865
  %v2872 = vor.u32 %v2870, %v2871
  %v2873 = vshll.u32 2131351028, %v2864
  %v2874 = vshrl.u32 2102212464, %v2865
  %v2875 = vor.u32 %v2873, %v2874
  %v2876 = vshll.u32 2102212464, %v2864
  %v2877 = vshrl.u32 920167782, %v2865
  %v2878 = vor.u32 %v2876, %v2877
  %v2879 = vshll.u32 920167782, %v2864
  %v2880 = vshrl.u32 1326507024, %v2865
  %v2881 = vor.u32 %v2879, %v2880
  %vm2882 = vcmp.lt.s32.totalorder %v2863, 1
  %vm2883 = vcmp.lt.s32.totalorder %v2863, 2
  %vm2884 = vcmp.lt.s32.totalorder %v2863, 3
  %vm2885 = vcmp.lt.s32.totalorder %v2863, 4
  %v2886 = vsel %vm2882, %v2866, %v2869
  %v2887 = vsel %vm2885, %v2875, 2102212464
  %v2888 = vsel %vm2884, %v2872, %v2887
  %v2889 = vsel %vm2883, %v2886, %v2888
  %v2890 = vsel %vm2882, %v2869, %v2872
  %v2891 = vsel %vm2885, %v2878, 920167782
  %v2892 = vsel %vm2884, %v2875, %v2891
  %v2893 = vsel %vm2883, %v2890, %v2892
  %v2894 = vsel %vm2882, %v2872, %v2875
  %v2895 = vsel %vm2885, %v2881, 1326507024
  %v2896 = vsel %vm2884, %v2878, %v2895
  %v2897 = vsel %vm2883, %v2894, %v2896
  %v2898 = vshll.u32 %v2858, 8
  %v2899 = vmul.u32.u64.compose %v2898, %v2897
  %v2900 = vextract.low.u32 %v2899
  %v2901 = vextract.high.u32 %v2899
  %v2902 = vmul.u32.u64.compose %v2898, %v2893
  %v2903 = vextract.low.u32 %v2902
  %v2904 = vextract.high.u32 %v2902
  %v2905 = vmul.u32 %v2898, %v2889
  %v2906 = vadd.s32 %v2901, %v2903
  %vm2907 = vc.u32 %v2901, %v2903
  %v2908 = vadd.s32 %v2904, 1
  %v2909 = vsel %vm2907, %v2908, %v2904
  %v2910 = vadd.s32 %v2905, %v2909
  %v2911 = vadd.s32 %v2910, 536870912
  %v2912 = vshrl.u32 %v2911, 30
  %v2913 = vshll.u32 %v2912, 30
  %v2914 = vsub.s32 %v2910, %v2913
  %vm2915 = vcmp.lt.s32.totalorder %v2914, 0
  %v2916 = vsub.s32 0, %v2914
  %v2917 = vsel %vm2915, %v2916, %v2914
  %v2918 = vclz %v2917
  %v2919 = vsub.s32 %v2918, 2
  %vm2920 = vcmp.gt.s32.totalorder 0, %v2919
  %v2921 = vsel %vm2920, 0, %v2919
  %v2922 = vsub.s32 32, %v2921
  %v2923 = vshll.u32 %v2914, %v2921
  %v2924 = vshrl.u32 %v2906, %v2922
  %v2925 = vor.u32 %v2923, %v2924
  %v2926 = vsub.s32 4294967266, %v2921
  %v2927 = vadd.s32 %v2926, 127
  %v2928 = vshll.u32 %v2927, 23
  %v2929 = vor.u32 4788187, %v2928
  %v2930 = vand.u32 2147483647, %v2929
  %v2932 = vcvt.s32.f32 %v2925
  %v2933 = vmul.f32 %v2932, %v2930
  %v2934 = vxor.u32 %v2933, 2147483648
  %v2935 = vsel %vm2852, %v2934, %v2933
  %v2936 = vsub.s32 4, %v2912
  %v2937 = vsel %vm2852, %v2936, %v2912
  %v2938 = vsel %vm2851, %v2848, %v2935
  %v2939 = vsel %vm2851, 0, %v2937
  %v2940 = vcosq.f32.pop %v2938
  %v2941 = vsinq.f32.pop %v2938
  %vm2942 = vweird.f32 %v2848
  %v2943 = vand.u32 %v2939, 3
  %vm2944 = vcmp.lt.s32.totalorder %v2943, 2
  %vm2945 = vcmp.eq.s32.totalorder %v2943, 0
  %v2946 = vxor.u32 %v2941, 2147483648
  %v2947 = vsel %vm2945, %v2940, %v2946
  %vm2948 = vcmp.eq.s32.totalorder %v2943, 2
  %v2949 = vxor.u32 %v2940, 2147483648
  %v2950 = vsel %vm2948, %v2949, %v2941
  %v2951 = vsel %vm2944, %v2947, %v2950
  %v2952 = vsel %vm2942, nan, %v2951
  %v2953 = vand.u32 2147483647, %v2849
  %vm2954 = vcmp.le.f32.partialorder %v2953, 0.7853982
  %vm2955 = vcmp.lt.s32.totalorder %v2849, 0
  %v2956 = vand.u32 %v2849, 2139095040
  %v2957 = vshrl.u32 %v2956, 23
  %v2958 = vsub.s32 %v2957, 127
  %v2959 = vand.u32 2147483647, %v2849
  %v2960 = vand.u32 %v2959, 8388607
  %v2961 = vor.u32 %v2960, 8388608
  %v2962 = vsub.s32 0, %v2961
  %v2963 = vadd.s32 %v2958, 1
  %vm2964 = vcmp.gt.s32.totalorder %v2963, 0
  %v2965 = vsel %vm2964, %v2963, 0
  %v2966 = vshrl.u32 %v2965, 5
  %v2967 = vand.u32 %v2965, 31
  %v2968 = vsub.s32 32, %v2967
  %v2969 = vshrl.u32 683565275, %v2968
  %v2970 = vshll.u32 683565275, %v2967
  %v2971 = vshrl.u32 2475754826, %v2968
  %v2972 = vor.u32 %v2970, %v2971
  %v2973 = vshll.u32 2475754826, %v2967
  %v2974 = vshrl.u32 2131351028, %v2968
  %v2975 = vor.u32 %v2973, %v2974
  %v2976 = vshll.u32 2131351028, %v2967
  %v2977 = vshrl.u32 2102212464, %v2968
  %v2978 = vor.u32 %v2976, %v2977
  %v2979 = vshll.u32 2102212464, %v2967
  %v2980 = vshrl.u32 920167782, %v2968
  %v2981 = vor.u32 %v2979, %v2980
  %v2982 = vshll.u32 920167782, %v2967
  %v2983 = vshrl.u32 1326507024, %v2968
  %v2984 = vor.u32 %v2982, %v2983
  %vm2985 = vcmp.lt.s32.totalorder %v2966, 1
  %vm2986 = vcmp.lt.s32.totalorder %v2966, 2
  %vm2987 = vcmp.lt.s32.totalorder %v2966, 3
  %vm2988 = vcmp.lt.s32.totalorder %v2966, 4
  %v2989 = vsel %vm2985, %v2969, %v2972
  %v2990 = vsel %vm2988, %v2978, 2102212464
  %v2991 = vsel %vm2987, %v2975, %v2990
  %v2992 = vsel %vm2986, %v2989, %v2991
  %v2993 = vsel %vm2985, %v2972, %v2975
  %v2994 = vsel %vm2988, %v2981, 920167782
  %v2995 = vsel %vm2987, %v2978, %v2994
  %v2996 = vsel %vm2986, %v2993, %v2995
  %v2997 = vsel %vm2985, %v2975, %v2978
  %v2998 = vsel %vm2988, %v2984, 1326507024
  %v2999 = vsel %vm2987, %v2981, %v2998
  %v3000 = vsel %vm2986, %v2997, %v2999
  %v3001 = vshll.u32 %v2961, 8
  %v3002 = vmul.u32.u64.compose %v3001, %v3000
  %v3003 = vextract.low.u32 %v3002
  %v3004 = vextract.high.u32 %v3002
  %v3005 = vmul.u32.u64.compose %v3001, %v2996
  %v3006 = vextract.low.u32 %v3005
  %v3007 = vextract.high.u32 %v3005
  %v3008 = vmul.u32 %v3001, %v2992
  %v3009 = vadd.s32 %v3004, %v3006
  %vm3010 = vc.u32 %v3004, %v3006
  %v3011 = vadd.s32 %v3007, 1
  %v3012 = vsel %vm3010, %v3011, %v3007
  %v3013 = vadd.s32 %v3008, %v3012
  %v3014 = vadd.s32 %v3013, 536870912
  %v3015 = vshrl.u32 %v3014, 30
  %v3016 = vshll.u32 %v3015, 30
  %v3017 = vsub.s32 %v3013, %v3016
  %vm3018 = vcmp.lt.s32.totalorder %v3017, 0
  %v3019 = vsub.s32 0, %v3017
  %v3020 = vsel %vm3018, %v3019, %v3017
  %v3021 = vclz %v3020
  %v3022 = vsub.s32 %v3021, 2
  %vm3023 = vcmp.gt.s32.totalorder 0, %v3022
  %v3024 = vsel %vm3023, 0, %v3022
  %v3025 = vsub.s32 32, %v3024
  %v3026 = vshll.u32 %v3017, %v3024
  %v3027 = vshrl.u32 %v3009, %v3025
  %v3028 = vor.u32 %v3026, %v3027
  %v3029 = vsub.s32 4294967266, %v3024
  %v3030 = vadd.s32 %v3029, 127
  %v3031 = vshll.u32 %v3030, 23
  %v3032 = vor.u32 4788187, %v3031
  %v3033 = vand.u32 2147483647, %v3032
  %v3035 = vcvt.s32.f32 %v3028
  %v3036 = vmul.f32 %v3035, %v3033
  %v3037 = vxor.u32 %v3036, 2147483648
  %v3038 = vsel %vm2955, %v3037, %v3036
  %v3039 = vsub.s32 4, %v3015
  %v3040 = vsel %vm2955, %v3039, %v3015
  %v3041 = vsel %vm2954, %v2849, %v3038
  %v3042 = vsel %vm2954, 0, %v3040
  %v3043 = vcosq.f32.pop %v3041
  %v3044 = vsinq.f32.pop %v3041
  %vm3045 = vweird.f32 %v2849
  %v3046 = vand.u32 %v3042, 3
  %vm3047 = vcmp.lt.s32.totalorder %v3046, 2
  %vm3048 = vcmp.eq.s32.totalorder %v3046, 0
  %v3049 = vxor.u32 %v3044, 2147483648
  %v3050 = vsel %vm3048, %v3043, %v3049
  %vm3051 = vcmp.eq.s32.totalorder %v3046, 2
  %v3052 = vxor.u32 %v3043, 2147483648
  %v3053 = vsel %vm3051, %v3052, %v3044
  %v3054 = vsel %vm3047, %v3050, %v3053
  %v3055 = vsel %vm3045, nan, %v3054
  %v3056 = vand.u32 2147483647, %v2848
  %vm3057 = vcmp.le.f32.partialorder %v3056, 0.7853982
  %vm3058 = vcmp.lt.s32.totalorder %v2848, 0
  %v3059 = vand.u32 %v2848, 2139095040
  %v3060 = vshrl.u32 %v3059, 23
  %v3061 = vsub.s32 %v3060, 127
  %v3062 = vand.u32 2147483647, %v2848
  %v3063 = vand.u32 %v3062, 8388607
  %v3064 = vor.u32 %v3063, 8388608
  %v3065 = vsub.s32 0, %v3064
  %v3066 = vadd.s32 %v3061, 1
  %vm3067 = vcmp.gt.s32.totalorder %v3066, 0
  %v3068 = vsel %vm3067, %v3066, 0
  %v3069 = vshrl.u32 %v3068, 5
  %v3070 = vand.u32 %v3068, 31
  %v3071 = vsub.s32 32, %v3070
  %v3072 = vshrl.u32 683565275, %v3071
  %v3073 = vshll.u32 683565275, %v3070
  %v3074 = vshrl.u32 2475754826, %v3071
  %v3075 = vor.u32 %v3073, %v3074
  %v3076 = vshll.u32 2475754826, %v3070
  %v3077 = vshrl.u32 2131351028, %v3071
  %v3078 = vor.u32 %v3076, %v3077
  %v3079 = vshll.u32 2131351028, %v3070
  %v3080 = vshrl.u32 2102212464, %v3071
  %v3081 = vor.u32 %v3079, %v3080
  %v3082 = vshll.u32 2102212464, %v3070
  %v3083 = vshrl.u32 920167782, %v3071
  %v3084 = vor.u32 %v3082, %v3083
  %v3085 = vshll.u32 920167782, %v3070
  %v3086 = vshrl.u32 1326507024, %v3071
  %v3087 = vor.u32 %v3085, %v3086
  %vm3088 = vcmp.lt.s32.totalorder %v3069, 1
  %vm3089 = vcmp.lt.s32.totalorder %v3069, 2
  %vm3090 = vcmp.lt.s32.totalorder %v3069, 3
  %vm3091 = vcmp.lt.s32.totalorder %v3069, 4
  %v3092 = vsel %vm3088, %v3072, %v3075
  %v3093 = vsel %vm3091, %v3081, 2102212464
  %v3094 = vsel %vm3090, %v3078, %v3093
  %v3095 = vsel %vm3089, %v3092, %v3094
  %v3096 = vsel %vm3088, %v3075, %v3078
  %v3097 = vsel %vm3091, %v3084, 920167782
  %v3098 = vsel %vm3090, %v3081, %v3097
  %v3099 = vsel %vm3089, %v3096, %v3098
  %v3100 = vsel %vm3088, %v3078, %v3081
  %v3101 = vsel %vm3091, %v3087, 1326507024
  %v3102 = vsel %vm3090, %v3084, %v3101
  %v3103 = vsel %vm3089, %v3100, %v3102
  %v3104 = vshll.u32 %v3064, 8
  %v3105 = vmul.u32.u64.compose %v3104, %v3103
  %v3106 = vextract.low.u32 %v3105
  %v3107 = vextract.high.u32 %v3105
  %v3108 = vmul.u32.u64.compose %v3104, %v3099
  %v3109 = vextract.low.u32 %v3108
  %v3110 = vextract.high.u32 %v3108
  %v3111 = vmul.u32 %v3104, %v3095
  %v3112 = vadd.s32 %v3107, %v3109
  %vm3113 = vc.u32 %v3107, %v3109
  %v3114 = vadd.s32 %v3110, 1
  %v3115 = vsel %vm3113, %v3114, %v3110
  %v3116 = vadd.s32 %v3111, %v3115
  %v3117 = vadd.s32 %v3116, 536870912
  %v3118 = vshrl.u32 %v3117, 30
  %v3119 = vshll.u32 %v3118, 30
  %v3120 = vsub.s32 %v3116, %v3119
  %vm3121 = vcmp.lt.s32.totalorder %v3120, 0
  %v3122 = vsub.s32 0, %v3120
  %v3123 = vsel %vm3121, %v3122, %v3120
  %v3124 = vclz %v3123
  %v3125 = vsub.s32 %v3124, 2
  %vm3126 = vcmp.gt.s32.totalorder 0, %v3125
  %v3127 = vsel %vm3126, 0, %v3125
  %v3128 = vsub.s32 32, %v3127
  %v3129 = vshll.u32 %v3120, %v3127
  %v3130 = vshrl.u32 %v3112, %v3128
  %v3131 = vor.u32 %v3129, %v3130
  %v3132 = vsub.s32 4294967266, %v3127
  %v3133 = vadd.s32 %v3132, 127
  %v3134 = vshll.u32 %v3133, 23
  %v3135 = vor.u32 4788187, %v3134
  %v3136 = vand.u32 2147483647, %v3135
  %v3138 = vcvt.s32.f32 %v3131
  %v3139 = vmul.f32 %v3138, %v3136
  %v3140 = vxor.u32 %v3139, 2147483648
  %v3141 = vsel %vm3058, %v3140, %v3139
  %v3142 = vsub.s32 4, %v3118
  %v3143 = vsel %vm3058, %v3142, %v3118
  %v3144 = vsel %vm3057, %v2848, %v3141
  %v3145 = vsel %vm3057, 0, %v3143
  %v3146 = vcosq.f32.pop %v3144
  %v3147 = vsinq.f32.pop %v3144
  %vm3148 = vweird.f32 %v2848
  %v3149 = vadd.s32 %v3145, 3
  %v3150 = vand.u32 %v3149, 3
  %vm3151 = vcmp.lt.s32.totalorder %v3150, 2
  %vm3152 = vcmp.eq.s32.totalorder %v3150, 0
  %v3153 = vxor.u32 %v3147, 2147483648
  %v3154 = vsel %vm3152, %v3146, %v3153
  %vm3155 = vcmp.eq.s32.totalorder %v3150, 2
  %v3156 = vxor.u32 %v3146, 2147483648
  %v3157 = vsel %vm3155, %v3156, %v3147
  %v3158 = vsel %vm3151, %v3154, %v3157
  %v3159 = vsel %vm3148, nan, %v3158
  %v3160 = vand.u32 2147483647, %v2849
  %vm3161 = vcmp.le.f32.partialorder %v3160, 0.7853982
  %vm3162 = vcmp.lt.s32.totalorder %v2849, 0
  %v3163 = vand.u32 %v2849, 2139095040
  %v3164 = vshrl.u32 %v3163, 23
  %v3165 = vsub.s32 %v3164, 127
  %v3166 = vand.u32 2147483647, %v2849
  %v3167 = vand.u32 %v3166, 8388607
  %v3168 = vor.u32 %v3167, 8388608
  %v3169 = vsub.s32 0, %v3168
  %v3170 = vadd.s32 %v3165, 1
  %vm3171 = vcmp.gt.s32.totalorder %v3170, 0
  %v3172 = vsel %vm3171, %v3170, 0
  %v3173 = vshrl.u32 %v3172, 5
  %v3174 = vand.u32 %v3172, 31
  %v3175 = vsub.s32 32, %v3174
  %v3176 = vshrl.u32 683565275, %v3175
  %v3177 = vshll.u32 683565275, %v3174
  %v3178 = vshrl.u32 2475754826, %v3175
  %v3179 = vor.u32 %v3177, %v3178
  %v3180 = vshll.u32 2475754826, %v3174
  %v3181 = vshrl.u32 2131351028, %v3175
  %v3182 = vor.u32 %v3180, %v3181
  %v3183 = vshll.u32 2131351028, %v3174
  %v3184 = vshrl.u32 2102212464, %v3175
  %v3185 = vor.u32 %v3183, %v3184
  %v3186 = vshll.u32 2102212464, %v3174
  %v3187 = vshrl.u32 920167782, %v3175
  %v3188 = vor.u32 %v3186, %v3187
  %v3189 = vshll.u32 920167782, %v3174
  %v3190 = vshrl.u32 1326507024, %v3175
  %v3191 = vor.u32 %v3189, %v3190
  %vm3192 = vcmp.lt.s32.totalorder %v3173, 1
  %vm3193 = vcmp.lt.s32.totalorder %v3173, 2
  %vm3194 = vcmp.lt.s32.totalorder %v3173, 3
  %vm3195 = vcmp.lt.s32.totalorder %v3173, 4
  %v3196 = vsel %vm3192, %v3176, %v3179
  %v3197 = vsel %vm3195, %v3185, 2102212464
  %v3198 = vsel %vm3194, %v3182, %v3197
  %v3199 = vsel %vm3193, %v3196, %v3198
  %v3200 = vsel %vm3192, %v3179, %v3182
  %v3201 = vsel %vm3195, %v3188, 920167782
  %v3202 = vsel %vm3194, %v3185, %v3201
  %v3203 = vsel %vm3193, %v3200, %v3202
  %v3204 = vsel %vm3192, %v3182, %v3185
  %v3205 = vsel %vm3195, %v3191, 1326507024
  %v3206 = vsel %vm3194, %v3188, %v3205
  %v3207 = vsel %vm3193, %v3204, %v3206
  %v3208 = vshll.u32 %v3168, 8
  %v3209 = vmul.u32.u64.compose %v3208, %v3207
  %v3210 = vextract.low.u32 %v3209
  %v3211 = vextract.high.u32 %v3209
  %v3212 = vmul.u32.u64.compose %v3208, %v3203
  %v3213 = vextract.low.u32 %v3212
  %v3214 = vextract.high.u32 %v3212
  %v3215 = vmul.u32 %v3208, %v3199
  %v3216 = vadd.s32 %v3211, %v3213
  %vm3217 = vc.u32 %v3211, %v3213
  %v3218 = vadd.s32 %v3214, 1
  %v3219 = vsel %vm3217, %v3218, %v3214
  %v3220 = vadd.s32 %v3215, %v3219
  %v3221 = vadd.s32 %v3220, 536870912
  %v3222 = vshrl.u32 %v3221, 30
  %v3223 = vshll.u32 %v3222, 30
  %v3224 = vsub.s32 %v3220, %v3223
  %vm3225 = vcmp.lt.s32.totalorder %v3224, 0
  %v3226 = vsub.s32 0, %v3224
  %v3227 = vsel %vm3225, %v3226, %v3224
  %v3228 = vclz %v3227
  %v3229 = vsub.s32 %v3228, 2
  %vm3230 = vcmp.gt.s32.totalorder 0, %v3229
  %v3231 = vsel %vm3230, 0, %v3229
  %v3232 = vsub.s32 32, %v3231
  %v3233 = vshll.u32 %v3224, %v3231
  %v3234 = vshrl.u32 %v3216, %v3232
  %v3235 = vor.u32 %v3233, %v3234
  %v3236 = vsub.s32 4294967266, %v3231
  %v3237 = vadd.s32 %v3236, 127
  %v3238 = vshll.u32 %v3237, 23
  %v3239 = vor.u32 4788187, %v3238
  %v3240 = vand.u32 2147483647, %v3239
  %v3242 = vcvt.s32.f32 %v3235
  %v3243 = vmul.f32 %v3242, %v3240
  %v3244 = vxor.u32 %v3243, 2147483648
  %v3245 = vsel %vm3162, %v3244, %v3243
  %v3246 = vsub.s32 4, %v3222
  %v3247 = vsel %vm3162, %v3246, %v3222
  %v3248 = vsel %vm3161, %v2849, %v3245
  %v3249 = vsel %vm3161, 0, %v3247
  %v3250 = vcosq.f32.pop %v3248
  %v3251 = vsinq.f32.pop %v3248
  %vm3252 = vweird.f32 %v2849
  %v3253 = vadd.s32 %v3249, 3
  %v3254 = vand.u32 %v3253, 3
  %vm3255 = vcmp.lt.s32.totalorder %v3254, 2
  %vm3256 = vcmp.eq.s32.totalorder %v3254, 0
  %v3257 = vxor.u32 %v3251, 2147483648
  %v3258 = vsel %vm3256, %v3250, %v3257
  %vm3259 = vcmp.eq.s32.totalorder %v3254, 2
  %v3260 = vxor.u32 %v3250, 2147483648
  %v3261 = vsel %vm3259, %v3260, %v3251
  %v3262 = vsel %vm3255, %v3258, %v3261
  %v3263 = vsel %vm3252, nan, %v3262
  %v3264 = vsub.f32 %v3159, %v2952
  %v3265 = vsub.f32 %v3263, %v3055
  %3267 = vset.pattern.permute.xlu0 0
  %3268 = vperm.xlu0 %3267, %v3264
  %v3269 = vpop.permute.xlu0 %3268
  %3272 = vset.pattern.permute.xlu0 0
  %3273 = vperm.xlu0 %3272, %v3265
  %v3274 = vpop.permute.xlu0 %3273
  %v3276 = vmul.f32 %v3269, %v159
  %v3277 = vmul.f32 %v3274, %v159
  %3279 = vset.pattern.permute.xlu0 0
  %3280 = vperm.xlu0 %3279, %v2952
  %v3281 = vpop.permute.xlu0 %3280
  %3284 = vset.pattern.permute.xlu0 0
  %3285 = vperm.xlu0 %3284, %v3055
  %v3286 = vpop.permute.xlu0 %3285
  %v3288 = vadd.f32 %v3281, %v3276
  %v3289 = vadd.f32 %v3286, %v3277
  %3290 = vset.pattern.permute.xlu0 1
  %3291 = vperm.xlu0 %3290, %v3264
  %v3292 = vpop.permute.xlu0 %3291
  %3294 = vset.pattern.permute.xlu0 1
  %3295 = vperm.xlu0 %3294, %v3265
  %v3296 = vpop.permute.xlu0 %3295
  %v3298 = vmul.f32 %v3292, %v162
  %v3299 = vmul.f32 %v3296, %v162
  %3300 = vset.pattern.permute.xlu0 1
  %3301 = vperm.xlu0 %3300, %v2952
  %v3302 = vpop.permute.xlu0 %3301
  %3304 = vset.pattern.permute.xlu0 1
  %3305 = vperm.xlu0 %3304, %v3055
  %v3306 = vpop.permute.xlu0 %3305
  %v3308 = vadd.f32 %v3302, %v3298
  %v3309 = vadd.f32 %v3306, %v3299
  %v3310 = vmul.f32 %v3288, %v3308
  %v3311 = vmul.f32 %v3289, %v3309
  %3312 = vset.pattern.permute.xlu0 2
  %3313 = vperm.xlu0 %3312, %v3264
  %v3314 = vpop.permute.xlu0 %3313
  %3316 = vset.pattern.permute.xlu0 2
  %3317 = vperm.xlu0 %3316, %v3265
  %v3318 = vpop.permute.xlu0 %3317
  %v3320 = vmul.f32 %v3314, %v165
  %v3321 = vmul.f32 %v3318, %v165
  %3322 = vset.pattern.permute.xlu0 2
  %3323 = vperm.xlu0 %3322, %v2952
  %v3324 = vpop.permute.xlu0 %3323
  %3326 = vset.pattern.permute.xlu0 2
  %3327 = vperm.xlu0 %3326, %v3055
  %v3328 = vpop.permute.xlu0 %3327
  %v3330 = vadd.f32 %v3324, %v3320
  %v3331 = vadd.f32 %v3328, %v3321
  %v3332 = vmul.f32 %v3310, %v3330
  %v3333 = vmul.f32 %v3311, %v3331
  %3334 = vset.pattern.permute.xlu0 3
  %3335 = vperm.xlu0 %3334, %v3264
  %v3336 = vpop.permute.xlu0 %3335
  %3338 = vset.pattern.permute.xlu0 3
  %3339 = vperm.xlu0 %3338, %v3265
  %v3340 = vpop.permute.xlu0 %3339
  %v3342 = vmul.f32 %v3336, %v167
  %v3343 = vmul.f32 %v3340, %v167
  %3344 = vset.pattern.permute.xlu0 3
  %3345 = vperm.xlu0 %3344, %v2952
  %v3346 = vpop.permute.xlu0 %3345
  %3348 = vset.pattern.permute.xlu0 3
  %3349 = vperm.xlu0 %3348, %v3055
  %v3350 = vpop.permute.xlu0 %3349
  %v3352 = vadd.f32 %v3346, %v3342
  %v3353 = vadd.f32 %v3350, %v3343
  %v3354 = vmul.f32 %v3332, %v3352
  %v3355 = vmul.f32 %v3333, %v3353
  %vm3358 = vcmask 1043456
  %v3359 = vrot.slane %v3354, 4
  %v3360 = vrot.slane %v3355, 4
  %v3361 = vsel %vm3358, %v3359, %v3360
  %v3362 = vsel %vm505, %v3361, 0
  %3364 = vmatprep.subr.mxu0 0.0
  %3365 = vmatpush1.msra.mxu0 %v169
  %3366 = vmatprep.subr.mxu0 0.0
  %3367 = vmatpush1.msra.mxu0 %v170
  %3368 = vmatprep.subr.mxu0 0.0
  %3369 = vmatpush1.msra.mxu0 0.0
  %3370 = vmatprep.subr.mxu0 0.0
  %3371 = vmatpush1.msra.mxu0 0.0
  %3372 = vmatprep.subr.mxu0 0.0
  %3373 = vmatpush1.msra.mxu0 0.0
  %3374 = vmatprep.subr.mxu0 0.0
  %3375 = vmatpush1.msra.mxu0 0.0
  %3376 = vmatprep.subr.mxu0 0.0
  %3377 = vmatpush1.msra.mxu0 0.0
  %3378 = vmatprep.subr.mxu0 0.0
  %3379 = vmatpush1.msra.mxu0 0.0
  %3380 = vmatprep.subr.mxu0 0.0
  %3381 = vmatpush1.msra.mxu0 0.0
  %3382 = vmatprep.subr.mxu0 0.0
  %3383 = vmatpush1.msra.mxu0 0.0
  %3384 = vmatprep.subr.mxu0 0.0
  %3385 = vmatpush1.msra.mxu0 0.0
  %3386 = vmatprep.subr.mxu0 0.0
  %3387 = vmatpush1.msra.mxu0 0.0
  %3388 = vmatprep.subr.mxu0 0.0
  %3389 = vmatpush1.msra.mxu0 0.0
  %3390 = vmatprep.subr.mxu0 0.0
  %3391 = vmatpush1.msra.mxu0 0.0
  %3392 = vmatprep.subr.mxu0 0.0
  %3393 = vmatpush1.msra.mxu0 0.0
  %3394 = vmatprep.subr.mxu0 0.0
  %3395 = vmatpush1.msra.mxu0 0.0
  %3396 = vmatprep.subr.mxu0 0.0
  %3397 = vmatpush1.msra.mxu0 0.0
  %3398 = vmatprep.subr.mxu0 0.0
  %3399 = vmatpush1.msra.mxu0 0.0
  %3400 = vmatprep.subr.mxu0 0.0
  %3401 = vmatpush1.msra.mxu0 0.0
  %3402 = vmatprep.subr.mxu0 0.0
  %3403 = vmatpush1.msra.mxu0 0.0
  %3404 = vmatprep.subr.mxu0 0.0
  %3405 = vmatpush1.msra.mxu0 0.0
  %3406 = vmatprep.subr.mxu0 0.0
  %3407 = vmatpush1.msra.mxu0 0.0
  %3408 = vmatprep.subr.mxu0 0.0
  %3409 = vmatpush1.msra.mxu0 0.0
  %3410 = vmatprep.subr.mxu0 0.0
  %3411 = vmatpush1.msra.mxu0 0.0
  %3412 = vmatprep.subr.mxu0 0.0
  %3413 = vmatpush1.msra.mxu0 0.0
  %3414 = vmatprep.subr.mxu0 0.0
  %3415 = vmatpush1.msra.mxu0 0.0
  %3416 = vmatprep.subr.mxu0 0.0
  %3417 = vmatpush1.msra.mxu0 0.0
  %3418 = vmatprep.subr.mxu0 0.0
  %3419 = vmatpush1.msra.mxu0 0.0
  %3420 = vmatprep.subr.mxu0 0.0
  %3421 = vmatpush1.msra.mxu0 0.0
  %3422 = vmatprep.subr.mxu0 0.0
  %3423 = vmatpush1.msra.mxu0 0.0
  %3424 = vmatprep.subr.mxu0 0.0
  %3425 = vmatpush1.msra.mxu0 0.0
  %3426 = vmatprep.subr.mxu0 0.0
  %3427 = vmatpush1.msra.mxu0 0.0
  %3428 = vmatprep.mubr.f32.mxu0 0.0
  %3429 = vmatmul.mubr.f32.gmra.mrb[0].mxu0 %v3362
  %v3430 = vpop.f32.mrb[0].mxu0
  %v3431 = vadd.f32 0.0, %v3430
  %v3432 = vpop.f32.mrb[0].mxu0
  %3433 = vdwg.mxu0
  %v3434 = vmul.f32 %v3431, %v3431
  %3436 = vrot.lane.b32.xlu0 %v3434, 112
  %v3437 = vpop.permute.xlu0 %3436
  %v3439 = vadd.f32 %v3434, %v3437
  %v3441 = vsel %vm505, %v3439, 0
  %3443 = vmatprep.subr.mxu0 0.0
  %3444 = vmatpush1.msra.mxu0 %v171
  %3445 = vmatprep.subr.mxu0 0.0
  %3446 = vmatpush1.msra.mxu0 %v172
  %3447 = vmatprep.subr.mxu0 0.0
  %3448 = vmatpush1.msra.mxu0 0.0
  %3449 = vmatprep.subr.mxu0 0.0
  %3450 = vmatpush1.msra.mxu0 0.0
  %3451 = vmatprep.subr.mxu0 0.0
  %3452 = vmatpush1.msra.mxu0 0.0
  %3453 = vmatprep.subr.mxu0 0.0
  %3454 = vmatpush1.msra.mxu0 0.0
  %3455 = vmatprep.subr.mxu0 0.0
  %3456 = vmatpush1.msra.mxu0 0.0
  %3457 = vmatprep.subr.mxu0 0.0
  %3458 = vmatpush1.msra.mxu0 0.0
  %3459 = vmatprep.subr.mxu0 0.0
  %3460 = vmatpush1.msra.mxu0 0.0
  %3461 = vmatprep.subr.mxu0 0.0
  %3462 = vmatpush1.msra.mxu0 0.0
  %3463 = vmatprep.subr.mxu0 0.0
  %3464 = vmatpush1.msra.mxu0 0.0
  %3465 = vmatprep.subr.mxu0 0.0
  %3466 = vmatpush1.msra.mxu0 0.0
  %3467 = vmatprep.subr.mxu0 0.0
  %3468 = vmatpush1.msra.mxu0 0.0
  %3469 = vmatprep.subr.mxu0 0.0
  %3470 = vmatpush1.msra.mxu0 0.0
  %3471 = vmatprep.subr.mxu0 0.0
  %3472 = vmatpush1.msra.mxu0 0.0
  %3473 = vmatprep.subr.mxu0 0.0
  %3474 = vmatpush1.msra.mxu0 0.0
  %3475 = vmatprep.subr.mxu0 0.0
  %3476 = vmatpush1.msra.mxu0 0.0
  %3477 = vmatprep.subr.mxu0 0.0
  %3478 = vmatpush1.msra.mxu0 0.0
  %3479 = vmatprep.subr.mxu0 0.0
  %3480 = vmatpush1.msra.mxu0 0.0
  %3481 = vmatprep.subr.mxu0 0.0
  %3482 = vmatpush1.msra.mxu0 0.0
  %3483 = vmatprep.subr.mxu0 0.0
  %3484 = vmatpush1.msra.mxu0 0.0
  %3485 = vmatprep.subr.mxu0 0.0
  %3486 = vmatpush1.msra.mxu0 0.0
  %3487 = vmatprep.subr.mxu0 0.0
  %3488 = vmatpush1.msra.mxu0 0.0
  %3489 = vmatprep.subr.mxu0 0.0
  %3490 = vmatpush1.msra.mxu0 0.0
  %3491 = vmatprep.subr.mxu0 0.0
  %3492 = vmatpush1.msra.mxu0 0.0
  %3493 = vmatprep.subr.mxu0 0.0
  %3494 = vmatpush1.msra.mxu0 0.0
  %3495 = vmatprep.subr.mxu0 0.0
  %3496 = vmatpush1.msra.mxu0 0.0
  %3497 = vmatprep.subr.mxu0 0.0
  %3498 = vmatpush1.msra.mxu0 0.0
  %3499 = vmatprep.subr.mxu0 0.0
  %3500 = vmatpush1.msra.mxu0 0.0
  %3501 = vmatprep.subr.mxu0 0.0
  %3502 = vmatpush1.msra.mxu0 0.0
  %3503 = vmatprep.subr.mxu0 0.0
  %3504 = vmatpush1.msra.mxu0 0.0
  %3505 = vmatprep.subr.mxu0 0.0
  %3506 = vmatpush1.msra.mxu0 0.0
  %3507 = vmatprep.mubr.f32.mxu0 0.0
  %3508 = vmatmul.mubr.f32.gmra.mrb[0].mxu0 %v3441
  %v3509 = vpop.f32.mrb[0].mxu0
  %v3510 = vadd.f32 0.0, %v3509
  %v3511 = vpop.f32.mrb[0].mxu0
  %3512 = vdwg.mxu0
  %v3513 = vxor.u32 %v3510, 2147483648
  %v3514 = vmul.f32 %v3513, 1.442695
  %v3515 = vpow.pop %v3514
  %v3516 = vadd.f32 %v3515, 1.0
  %v3517 = vrcp.pop %v3516
  %v3518 = vmul.f32 1.0, %v3517
  %v3519 = vtanh.pop %v3510
  %3521 = vset.pattern.permute.xlu0 1
  %3522 = vperm.xlu0 %3521, %v3518
  %v3523 = vpop.permute.xlu0 %3522
  %v3525 = vmul.f32 %v3523, %v2757
  %3527 = vrot.lane.b32.xlu0 %v3519, 125
  %v3528 = vpop.permute.xlu0 %3527
  %v3530 = vmul.f32 %v3518, %v3528
  %3532 = vset.pattern.permute.xlu0 0
  %3533 = vperm.xlu0 %3532, %v3530
  %v3534 = vpop.permute.xlu0 %3533
  %v3536 = vadd.f32 %v3525, %v3534
  %v3537 = vtanh.pop %v3536
  %3538 = vset.pattern.permute.xlu0 2
  %3539 = vperm.xlu0 %3538, %v3518
  %v3540 = vpop.permute.xlu0 %3539
  %v3542 = vmul.f32 %v3540, %v3537
  %s3543 = scalar_lea.vmem %s8, 32
  %3544 = vst.msk [vmem:[%s3543] sm:$0x1f] %vm688, %v3542
  %s3545 = scalar_lea.vmem %s9, 32
  %3546 = vst.msk [vmem:[%s3545] sm:$0x1f] %vm688, %v3536
  %v3548 = vsel %vm175, %v3542, 0
  %3550 = vmatprep.subr.mxu0 0.0
  %3551 = vmatpush1.msra.mxu0 %v168
  %3552 = vmatprep.subr.mxu0 0.0
  %3553 = vmatpush1.msra.mxu0 0.0
  %3554 = vmatprep.subr.mxu0 0.0
  %3555 = vmatpush1.msra.mxu0 0.0
  %3556 = vmatprep.subr.mxu0 0.0
  %3557 = vmatpush1.msra.mxu0 0.0
  %3558 = vmatprep.subr.mxu0 0.0
  %3559 = vmatpush1.msra.mxu0 0.0
  %3560 = vmatprep.subr.mxu0 0.0
  %3561 = vmatpush1.msra.mxu0 0.0
  %3562 = vmatprep.subr.mxu0 0.0
  %3563 = vmatpush1.msra.mxu0 0.0
  %3564 = vmatprep.subr.mxu0 0.0
  %3565 = vmatpush1.msra.mxu0 0.0
  %3566 = vmatprep.subr.mxu0 0.0
  %3567 = vmatpush1.msra.mxu0 0.0
  %3568 = vmatprep.subr.mxu0 0.0
  %3569 = vmatpush1.msra.mxu0 0.0
  %3570 = vmatprep.subr.mxu0 0.0
  %3571 = vmatpush1.msra.mxu0 0.0
  %3572 = vmatprep.subr.mxu0 0.0
  %3573 = vmatpush1.msra.mxu0 0.0
  %3574 = vmatprep.subr.mxu0 0.0
  %3575 = vmatpush1.msra.mxu0 0.0
  %3576 = vmatprep.subr.mxu0 0.0
  %3577 = vmatpush1.msra.mxu0 0.0
  %3578 = vmatprep.subr.mxu0 0.0
  %3579 = vmatpush1.msra.mxu0 0.0
  %3580 = vmatprep.subr.mxu0 0.0
  %3581 = vmatpush1.msra.mxu0 0.0
  %3582 = vmatprep.subr.mxu0 0.0
  %3583 = vmatpush1.msra.mxu0 0.0
  %3584 = vmatprep.subr.mxu0 0.0
  %3585 = vmatpush1.msra.mxu0 0.0
  %3586 = vmatprep.subr.mxu0 0.0
  %3587 = vmatpush1.msra.mxu0 0.0
  %3588 = vmatprep.subr.mxu0 0.0
  %3589 = vmatpush1.msra.mxu0 0.0
  %3590 = vmatprep.subr.mxu0 0.0
  %3591 = vmatpush1.msra.mxu0 0.0
  %3592 = vmatprep.subr.mxu0 0.0
  %3593 = vmatpush1.msra.mxu0 0.0
  %3594 = vmatprep.subr.mxu0 0.0
  %3595 = vmatpush1.msra.mxu0 0.0
  %3596 = vmatprep.subr.mxu0 0.0
  %3597 = vmatpush1.msra.mxu0 0.0
  %3598 = vmatprep.subr.mxu0 0.0
  %3599 = vmatpush1.msra.mxu0 0.0
  %3600 = vmatprep.subr.mxu0 0.0
  %3601 = vmatpush1.msra.mxu0 0.0
  %3602 = vmatprep.subr.mxu0 0.0
  %3603 = vmatpush1.msra.mxu0 0.0
  %3604 = vmatprep.subr.mxu0 0.0
  %3605 = vmatpush1.msra.mxu0 0.0
  %3606 = vmatprep.subr.mxu0 0.0
  %3607 = vmatpush1.msra.mxu0 0.0
  %3608 = vmatprep.subr.mxu0 0.0
  %3609 = vmatpush1.msra.mxu0 0.0
  %3610 = vmatprep.subr.mxu0 0.0
  %3611 = vmatpush1.msra.mxu0 0.0
  %3612 = vmatprep.subr.mxu0 0.0
  %3613 = vmatpush1.msra.mxu0 0.0
  %3614 = vmatprep.mubr.f32.mxu0 0.0
  %3615 = vmatmul.mubr.f32.gmra.mrb[0].mxu0 %v3548
  %v3616 = vpop.f32.mrb[0].mxu0
  %v3617 = vadd.f32 0.0, %v3616
  %v3618 = vpop.f32.mrb[0].mxu0
  %3619 = vdwg.mxu0
  %v3621 = vrot.slane %v3617, 7
  %v3623 = vadd.f32 %v147, %v3621
  %v3624 = vtanh.pop %v3623
  %v3625 = vmul.f32 %v3624, 1.5707964
  %v3626 = vand.u32 2147483647, %v3625
  %vm3627 = vcmp.le.f32.partialorder %v3626, 0.7853982
  %vm3628 = vcmp.lt.s32.totalorder %v3625, 0
  %v3629 = vand.u32 %v3625, 2139095040
  %v3630 = vshrl.u32 %v3629, 23
  %v3631 = vsub.s32 %v3630, 127
  %v3632 = vand.u32 2147483647, %v3625
  %v3633 = vand.u32 %v3632, 8388607
  %v3634 = vor.u32 %v3633, 8388608
  %v3635 = vsub.s32 0, %v3634
  %v3636 = vadd.s32 %v3631, 1
  %vm3637 = vcmp.gt.s32.totalorder %v3636, 0
  %v3638 = vsel %vm3637, %v3636, 0
  %v3639 = vshrl.u32 %v3638, 5
  %v3640 = vand.u32 %v3638, 31
  %v3641 = vsub.s32 32, %v3640
  %v3642 = vshrl.u32 683565275, %v3641
  %v3643 = vshll.u32 683565275, %v3640
  %v3644 = vshrl.u32 2475754826, %v3641
  %v3645 = vor.u32 %v3643, %v3644
  %v3646 = vshll.u32 2475754826, %v3640
  %v3647 = vshrl.u32 2131351028, %v3641
  %v3648 = vor.u32 %v3646, %v3647
  %v3649 = vshll.u32 2131351028, %v3640
  %v3650 = vshrl.u32 2102212464, %v3641
  %v3651 = vor.u32 %v3649, %v3650
  %v3652 = vshll.u32 2102212464, %v3640
  %v3653 = vshrl.u32 920167782, %v3641
  %v3654 = vor.u32 %v3652, %v3653
  %v3655 = vshll.u32 920167782, %v3640
  %v3656 = vshrl.u32 1326507024, %v3641
  %v3657 = vor.u32 %v3655, %v3656
  %vm3658 = vcmp.lt.s32.totalorder %v3639, 1
  %vm3659 = vcmp.lt.s32.totalorder %v3639, 2
  %vm3660 = vcmp.lt.s32.totalorder %v3639, 3
  %vm3661 = vcmp.lt.s32.totalorder %v3639, 4
  %v3662 = vsel %vm3658, %v3642, %v3645
  %v3663 = vsel %vm3661, %v3651, 2102212464
  %v3664 = vsel %vm3660, %v3648, %v3663
  %v3665 = vsel %vm3659, %v3662, %v3664
  %v3666 = vsel %vm3658, %v3645, %v3648
  %v3667 = vsel %vm3661, %v3654, 920167782
  %v3668 = vsel %vm3660, %v3651, %v3667
  %v3669 = vsel %vm3659, %v3666, %v3668
  %v3670 = vsel %vm3658, %v3648, %v3651
  %v3671 = vsel %vm3661, %v3657, 1326507024
  %v3672 = vsel %vm3660, %v3654, %v3671
  %v3673 = vsel %vm3659, %v3670, %v3672
  %v3674 = vshll.u32 %v3634, 8
  %v3675 = vmul.u32.u64.compose %v3674, %v3673
  %v3676 = vextract.low.u32 %v3675
  %v3677 = vextract.high.u32 %v3675
  %v3678 = vmul.u32.u64.compose %v3674, %v3669
  %v3679 = vextract.low.u32 %v3678
  %v3680 = vextract.high.u32 %v3678
  %v3681 = vmul.u32 %v3674, %v3665
  %v3682 = vadd.s32 %v3677, %v3679
  %vm3683 = vc.u32 %v3677, %v3679
  %v3684 = vadd.s32 %v3680, 1
  %v3685 = vsel %vm3683, %v3684, %v3680
  %v3686 = vadd.s32 %v3681, %v3685
  %v3687 = vadd.s32 %v3686, 536870912
  %v3688 = vshrl.u32 %v3687, 30
  %v3689 = vshll.u32 %v3688, 30
  %v3690 = vsub.s32 %v3686, %v3689
  %vm3691 = vcmp.lt.s32.totalorder %v3690, 0
  %v3692 = vsub.s32 0, %v3690
  %v3693 = vsel %vm3691, %v3692, %v3690
  %v3694 = vclz %v3693
  %v3695 = vsub.s32 %v3694, 2
  %vm3696 = vcmp.gt.s32.totalorder 0, %v3695
  %v3697 = vsel %vm3696, 0, %v3695
  %v3698 = vsub.s32 32, %v3697
  %v3699 = vshll.u32 %v3690, %v3697
  %v3700 = vshrl.u32 %v3682, %v3698
  %v3701 = vor.u32 %v3699, %v3700
  %v3702 = vsub.s32 4294967266, %v3697
  %v3703 = vadd.s32 %v3702, 127
  %v3704 = vshll.u32 %v3703, 23
  %v3705 = vor.u32 4788187, %v3704
  %v3706 = vand.u32 2147483647, %v3705
  %v3708 = vcvt.s32.f32 %v3701
  %v3709 = vmul.f32 %v3708, %v3706
  %v3710 = vxor.u32 %v3709, 2147483648
  %v3711 = vsel %vm3628, %v3710, %v3709
  %v3712 = vsub.s32 4, %v3688
  %v3713 = vsel %vm3628, %v3712, %v3688
  %v3714 = vsel %vm3627, %v3625, %v3711
  %v3715 = vsel %vm3627, 0, %v3713
  %v3716 = vcosq.f32.pop %v3714
  %v3717 = vsinq.f32.pop %v3714
  %vm3718 = vweird.f32 %v3625
  %v3719 = vand.u32 %v3715, 3
  %vm3720 = vcmp.lt.s32.totalorder %v3719, 2
  %vm3721 = vcmp.eq.s32.totalorder %v3719, 0
  %v3722 = vxor.u32 %v3717, 2147483648
  %v3723 = vsel %vm3721, %v3716, %v3722
  %vm3724 = vcmp.eq.s32.totalorder %v3719, 2
  %v3725 = vxor.u32 %v3716, 2147483648
  %v3726 = vsel %vm3724, %v3725, %v3717
  %v3727 = vsel %vm3720, %v3723, %v3726
  %v3728 = vsel %vm3718, nan, %v3727
  %v3729 = vand.u32 2147483647, %v3625
  %vm3730 = vcmp.le.f32.partialorder %v3729, 0.7853982
  %vm3731 = vcmp.lt.s32.totalorder %v3625, 0
  %v3732 = vand.u32 %v3625, 2139095040
  %v3733 = vshrl.u32 %v3732, 23
  %v3734 = vsub.s32 %v3733, 127
  %v3735 = vand.u32 2147483647, %v3625
  %v3736 = vand.u32 %v3735, 8388607
  %v3737 = vor.u32 %v3736, 8388608
  %v3738 = vsub.s32 0, %v3737
  %v3739 = vadd.s32 %v3734, 1
  %vm3740 = vcmp.gt.s32.totalorder %v3739, 0
  %v3741 = vsel %vm3740, %v3739, 0
  %v3742 = vshrl.u32 %v3741, 5
  %v3743 = vand.u32 %v3741, 31
  %v3744 = vsub.s32 32, %v3743
  %v3745 = vshrl.u32 683565275, %v3744
  %v3746 = vshll.u32 683565275, %v3743
  %v3747 = vshrl.u32 2475754826, %v3744
  %v3748 = vor.u32 %v3746, %v3747
  %v3749 = vshll.u32 2475754826, %v3743
  %v3750 = vshrl.u32 2131351028, %v3744
  %v3751 = vor.u32 %v3749, %v3750
  %v3752 = vshll.u32 2131351028, %v3743
  %v3753 = vshrl.u32 2102212464, %v3744
  %v3754 = vor.u32 %v3752, %v3753
  %v3755 = vshll.u32 2102212464, %v3743
  %v3756 = vshrl.u32 920167782, %v3744
  %v3757 = vor.u32 %v3755, %v3756
  %v3758 = vshll.u32 920167782, %v3743
  %v3759 = vshrl.u32 1326507024, %v3744
  %v3760 = vor.u32 %v3758, %v3759
  %vm3761 = vcmp.lt.s32.totalorder %v3742, 1
  %vm3762 = vcmp.lt.s32.totalorder %v3742, 2
  %vm3763 = vcmp.lt.s32.totalorder %v3742, 3
  %vm3764 = vcmp.lt.s32.totalorder %v3742, 4
  %v3765 = vsel %vm3761, %v3745, %v3748
  %v3766 = vsel %vm3764, %v3754, 2102212464
  %v3767 = vsel %vm3763, %v3751, %v3766
  %v3768 = vsel %vm3762, %v3765, %v3767
  %v3769 = vsel %vm3761, %v3748, %v3751
  %v3770 = vsel %vm3764, %v3757, 920167782
  %v3771 = vsel %vm3763, %v3754, %v3770
  %v3772 = vsel %vm3762, %v3769, %v3771
  %v3773 = vsel %vm3761, %v3751, %v3754
  %v3774 = vsel %vm3764, %v3760, 1326507024
  %v3775 = vsel %vm3763, %v3757, %v3774
  %v3776 = vsel %vm3762, %v3773, %v3775
  %v3777 = vshll.u32 %v3737, 8
  %v3778 = vmul.u32.u64.compose %v3777, %v3776
  %v3779 = vextract.low.u32 %v3778
  %v3780 = vextract.high.u32 %v3778
  %v3781 = vmul.u32.u64.compose %v3777, %v3772
  %v3782 = vextract.low.u32 %v3781
  %v3783 = vextract.high.u32 %v3781
  %v3784 = vmul.u32 %v3777, %v3768
  %v3785 = vadd.s32 %v3780, %v3782
  %vm3786 = vc.u32 %v3780, %v3782
  %v3787 = vadd.s32 %v3783, 1
  %v3788 = vsel %vm3786, %v3787, %v3783
  %v3789 = vadd.s32 %v3784, %v3788
  %v3790 = vadd.s32 %v3789, 536870912
  %v3791 = vshrl.u32 %v3790, 30
  %v3792 = vshll.u32 %v3791, 30
  %v3793 = vsub.s32 %v3789, %v3792
  %vm3794 = vcmp.lt.s32.totalorder %v3793, 0
  %v3795 = vsub.s32 0, %v3793
  %v3796 = vsel %vm3794, %v3795, %v3793
  %v3797 = vclz %v3796
  %v3798 = vsub.s32 %v3797, 2
  %vm3799 = vcmp.gt.s32.totalorder 0, %v3798
  %v3800 = vsel %vm3799, 0, %v3798
  %v3801 = vsub.s32 32, %v3800
  %v3802 = vshll.u32 %v3793, %v3800
  %v3803 = vshrl.u32 %v3785, %v3801
  %v3804 = vor.u32 %v3802, %v3803
  %v3805 = vsub.s32 4294967266, %v3800
  %v3806 = vadd.s32 %v3805, 127
  %v3807 = vshll.u32 %v3806, 23
  %v3808 = vor.u32 4788187, %v3807
  %v3809 = vand.u32 2147483647, %v3808
  %v3811 = vcvt.s32.f32 %v3804
  %v3812 = vmul.f32 %v3811, %v3809
  %v3813 = vxor.u32 %v3812, 2147483648
  %v3814 = vsel %vm3731, %v3813, %v3812
  %v3815 = vsub.s32 4, %v3791
  %v3816 = vsel %vm3731, %v3815, %v3791
  %v3817 = vsel %vm3730, %v3625, %v3814
  %v3818 = vsel %vm3730, 0, %v3816
  %v3819 = vcosq.f32.pop %v3817
  %v3820 = vsinq.f32.pop %v3817
  %vm3821 = vweird.f32 %v3625
  %v3822 = vadd.s32 %v3818, 3
  %v3823 = vand.u32 %v3822, 3
  %vm3824 = vcmp.lt.s32.totalorder %v3823, 2
  %vm3825 = vcmp.eq.s32.totalorder %v3823, 0
  %v3826 = vxor.u32 %v3820, 2147483648
  %v3827 = vsel %vm3825, %v3819, %v3826
  %vm3828 = vcmp.eq.s32.totalorder %v3823, 2
  %v3829 = vxor.u32 %v3819, 2147483648
  %v3830 = vsel %vm3828, %v3829, %v3820
  %v3831 = vsel %vm3824, %v3827, %v3830
  %v3832 = vsel %vm3821, nan, %v3831
  %v3833 = vsub.f32 %v3832, %v3728
  %3835 = vset.pattern.permute.xlu0 0
  %3836 = vperm.xlu0 %3835, %v3833
  %v3837 = vpop.permute.xlu0 %3836
  %v3839 = vmul.f32 %v3837, %v159
  %3841 = vset.pattern.permute.xlu0 0
  %3842 = vperm.xlu0 %3841, %v3728
  %v3843 = vpop.permute.xlu0 %3842
  %v3845 = vadd.f32 %v3843, %v3839
  %3846 = vset.pattern.permute.xlu0 1
  %3847 = vperm.xlu0 %3846, %v3833
  %v3848 = vpop.permute.xlu0 %3847
  %v3850 = vmul.f32 %v3848, %v162
  %3851 = vset.pattern.permute.xlu0 1
  %3852 = vperm.xlu0 %3851, %v3728
  %v3853 = vpop.permute.xlu0 %3852
  %v3855 = vadd.f32 %v3853, %v3850
  %v3856 = vmul.f32 %v3845, %v3855
  %3857 = vset.pattern.permute.xlu0 2
  %3858 = vperm.xlu0 %3857, %v3833
  %v3859 = vpop.permute.xlu0 %3858
  %v3861 = vmul.f32 %v3859, %v165
  %3862 = vset.pattern.permute.xlu0 2
  %3863 = vperm.xlu0 %3862, %v3728
  %v3864 = vpop.permute.xlu0 %3863
  %v3866 = vadd.f32 %v3864, %v3861
  %v3867 = vmul.f32 %v3856, %v3866
  %3868 = vset.pattern.permute.xlu0 3
  %3869 = vperm.xlu0 %3868, %v3833
  %v3870 = vpop.permute.xlu0 %3869
  %v3872 = vmul.f32 %v3870, %v167
  %3873 = vset.pattern.permute.xlu0 3
  %3874 = vperm.xlu0 %3873, %v3728
  %v3875 = vpop.permute.xlu0 %3874
  %v3877 = vadd.f32 %v3875, %v3872
  %v3878 = vmul.f32 %v3867, %v3877
  %v3880 = vrot.slane %v3878, 1
  %v3881 = vsel %vm505, %v3880, 0
  %3883 = vmatprep.subr.mxu0 0.0
  %3884 = vmatpush1.msra.mxu0 %v169
  %3885 = vmatprep.subr.mxu0 0.0
  %3886 = vmatpush1.msra.mxu0 %v170
  %3887 = vmatprep.subr.mxu0 0.0
  %3888 = vmatpush1.msra.mxu0 0.0
  %3889 = vmatprep.subr.mxu0 0.0
  %3890 = vmatpush1.msra.mxu0 0.0
  %3891 = vmatprep.subr.mxu0 0.0
  %3892 = vmatpush1.msra.mxu0 0.0
  %3893 = vmatprep.subr.mxu0 0.0
  %3894 = vmatpush1.msra.mxu0 0.0
  %3895 = vmatprep.subr.mxu0 0.0
  %3896 = vmatpush1.msra.mxu0 0.0
  %3897 = vmatprep.subr.mxu0 0.0
  %3898 = vmatpush1.msra.mxu0 0.0
  %3899 = vmatprep.subr.mxu0 0.0
  %3900 = vmatpush1.msra.mxu0 0.0
  %3901 = vmatprep.subr.mxu0 0.0
  %3902 = vmatpush1.msra.mxu0 0.0
  %3903 = vmatprep.subr.mxu0 0.0
  %3904 = vmatpush1.msra.mxu0 0.0
  %3905 = vmatprep.subr.mxu0 0.0
  %3906 = vmatpush1.msra.mxu0 0.0
  %3907 = vmatprep.subr.mxu0 0.0
  %3908 = vmatpush1.msra.mxu0 0.0
  %3909 = vmatprep.subr.mxu0 0.0
  %3910 = vmatpush1.msra.mxu0 0.0
  %3911 = vmatprep.subr.mxu0 0.0
  %3912 = vmatpush1.msra.mxu0 0.0
  %3913 = vmatprep.subr.mxu0 0.0
  %3914 = vmatpush1.msra.mxu0 0.0
  %3915 = vmatprep.subr.mxu0 0.0
  %3916 = vmatpush1.msra.mxu0 0.0
  %3917 = vmatprep.subr.mxu0 0.0
  %3918 = vmatpush1.msra.mxu0 0.0
  %3919 = vmatprep.subr.mxu0 0.0
  %3920 = vmatpush1.msra.mxu0 0.0
  %3921 = vmatprep.subr.mxu0 0.0
  %3922 = vmatpush1.msra.mxu0 0.0
  %3923 = vmatprep.subr.mxu0 0.0
  %3924 = vmatpush1.msra.mxu0 0.0
  %3925 = vmatprep.subr.mxu0 0.0
  %3926 = vmatpush1.msra.mxu0 0.0
  %3927 = vmatprep.subr.mxu0 0.0
  %3928 = vmatpush1.msra.mxu0 0.0
  %3929 = vmatprep.subr.mxu0 0.0
  %3930 = vmatpush1.msra.mxu0 0.0
  %3931 = vmatprep.subr.mxu0 0.0
  %3932 = vmatpush1.msra.mxu0 0.0
  %3933 = vmatprep.subr.mxu0 0.0
  %3934 = vmatpush1.msra.mxu0 0.0
  %3935 = vmatprep.subr.mxu0 0.0
  %3936 = vmatpush1.msra.mxu0 0.0
  %3937 = vmatprep.subr.mxu0 0.0
  %3938 = vmatpush1.msra.mxu0 0.0
  %3939 = vmatprep.subr.mxu0 0.0
  %3940 = vmatpush1.msra.mxu0 0.0
  %3941 = vmatprep.subr.mxu0 0.0
  %3942 = vmatpush1.msra.mxu0 0.0
  %3943 = vmatprep.subr.mxu0 0.0
  %3944 = vmatpush1.msra.mxu0 0.0
  %3945 = vmatprep.subr.mxu0 0.0
  %3946 = vmatpush1.msra.mxu0 0.0
  %3947 = vmatprep.mubr.f32.mxu0 0.0
  %3948 = vmatmul.mubr.f32.gmra.mrb[0].mxu0 %v3881
  %v3949 = vpop.f32.mrb[0].mxu0
  %v3950 = vadd.f32 0.0, %v3949
  %v3951 = vpop.f32.mrb[0].mxu0
  %3952 = vdwg.mxu0
  %v3953 = vmul.f32 %v3950, %v3950
  %3955 = vrot.lane.b32.xlu0 %v3953, 112
  %v3956 = vpop.permute.xlu0 %3955
  %v3958 = vadd.f32 %v3953, %v3956
  %v3960 = vsel %vm505, %v3958, 0
  %3962 = vmatprep.subr.mxu0 0.0
  %3963 = vmatpush1.msra.mxu0 %v171
  %3964 = vmatprep.subr.mxu0 0.0
  %3965 = vmatpush1.msra.mxu0 %v172
  %3966 = vmatprep.subr.mxu0 0.0
  %3967 = vmatpush1.msra.mxu0 0.0
  %3968 = vmatprep.subr.mxu0 0.0
  %3969 = vmatpush1.msra.mxu0 0.0
  %3970 = vmatprep.subr.mxu0 0.0
  %3971 = vmatpush1.msra.mxu0 0.0
  %3972 = vmatprep.subr.mxu0 0.0
  %3973 = vmatpush1.msra.mxu0 0.0
  %3974 = vmatprep.subr.mxu0 0.0
  %3975 = vmatpush1.msra.mxu0 0.0
  %3976 = vmatprep.subr.mxu0 0.0
  %3977 = vmatpush1.msra.mxu0 0.0
  %3978 = vmatprep.subr.mxu0 0.0
  %3979 = vmatpush1.msra.mxu0 0.0
  %3980 = vmatprep.subr.mxu0 0.0
  %3981 = vmatpush1.msra.mxu0 0.0
  %3982 = vmatprep.subr.mxu0 0.0
  %3983 = vmatpush1.msra.mxu0 0.0
  %3984 = vmatprep.subr.mxu0 0.0
  %3985 = vmatpush1.msra.mxu0 0.0
  %3986 = vmatprep.subr.mxu0 0.0
  %3987 = vmatpush1.msra.mxu0 0.0
  %3988 = vmatprep.subr.mxu0 0.0
  %3989 = vmatpush1.msra.mxu0 0.0
  %3990 = vmatprep.subr.mxu0 0.0
  %3991 = vmatpush1.msra.mxu0 0.0
  %3992 = vmatprep.subr.mxu0 0.0
  %3993 = vmatpush1.msra.mxu0 0.0
  %3994 = vmatprep.subr.mxu0 0.0
  %3995 = vmatpush1.msra.mxu0 0.0
  %3996 = vmatprep.subr.mxu0 0.0
  %3997 = vmatpush1.msra.mxu0 0.0
  %3998 = vmatprep.subr.mxu0 0.0
  %3999 = vmatpush1.msra.mxu0 0.0
  %4000 = vmatprep.subr.mxu0 0.0
  %4001 = vmatpush1.msra.mxu0 0.0
  %4002 = vmatprep.subr.mxu0 0.0
  %4003 = vmatpush1.msra.mxu0 0.0
  %4004 = vmatprep.subr.mxu0 0.0
  %4005 = vmatpush1.msra.mxu0 0.0
  %4006 = vmatprep.subr.mxu0 0.0
  %4007 = vmatpush1.msra.mxu0 0.0
  %4008 = vmatprep.subr.mxu0 0.0
  %4009 = vmatpush1.msra.mxu0 0.0
  %4010 = vmatprep.subr.mxu0 0.0
  %4011 = vmatpush1.msra.mxu0 0.0
  %4012 = vmatprep.subr.mxu0 0.0
  %4013 = vmatpush1.msra.mxu0 0.0
  %4014 = vmatprep.subr.mxu0 0.0
  %4015 = vmatpush1.msra.mxu0 0.0
  %4016 = vmatprep.subr.mxu0 0.0
  %4017 = vmatpush1.msra.mxu0 0.0
  %4018 = vmatprep.subr.mxu0 0.0
  %4019 = vmatpush1.msra.mxu0 0.0
  %4020 = vmatprep.subr.mxu0 0.0
  %4021 = vmatpush1.msra.mxu0 0.0
  %4022 = vmatprep.subr.mxu0 0.0
  %4023 = vmatpush1.msra.mxu0 0.0
  %4024 = vmatprep.subr.mxu0 0.0
  %4025 = vmatpush1.msra.mxu0 0.0
  %4026 = vmatprep.mubr.f32.mxu0 0.0
  %4027 = vmatmul.mubr.f32.gmra.mrb[0].mxu0 %v3960
  %v4028 = vpop.f32.mrb[0].mxu0
  %v4029 = vadd.f32 0.0, %v4028
  %v4030 = vpop.f32.mrb[0].mxu0
  %4031 = vdwg.mxu0
  %v4032 = vxor.u32 %v4029, 2147483648
  %v4033 = vmul.f32 %v4032, 1.442695
  %v4034 = vpow.pop %v4033
  %v4035 = vadd.f32 %v4034, 1.0
  %v4036 = vrcp.pop %v4035
  %v4037 = vmul.f32 1.0, %v4036
  %v4038 = vtanh.pop %v4029
  %4040 = vset.pattern.permute.xlu0 1
  %4041 = vperm.xlu0 %4040, %v4037
  %v4042 = vpop.permute.xlu0 %4041
  %v4044 = vmul.f32 %v4042, %v3536
  %4046 = vrot.lane.b32.xlu0 %v4038, 125
  %v4047 = vpop.permute.xlu0 %4046
  %v4049 = vmul.f32 %v4037, %v4047
  %4051 = vset.pattern.permute.xlu0 0
  %4052 = vperm.xlu0 %4051, %v4049
  %v4053 = vpop.permute.xlu0 %4052
  %v4055 = vadd.f32 %v4044, %v4053
  %v4056 = vtanh.pop %v4055
  %4057 = vset.pattern.permute.xlu0 2
  %4058 = vperm.xlu0 %4057, %v4037
  %v4059 = vpop.permute.xlu0 %4058
  %v4061 = vmul.f32 %v4059, %v4056
  %s4062 = scalar_lea.vmem %s8, 40
  %4063 = vst.msk [vmem:[%s4062] sm:$0x1f] %vm688, %v4061
  %s4064 = scalar_lea.vmem %s9, 40
  %4065 = vst.msk [vmem:[%s4064] sm:$0x1f] %vm688, %v4055
  %v4067 = vsel %vm175, %v4061, 0
  %4069 = vmatprep.subr.mxu0 0.0
  %4070 = vmatpush1.msra.mxu0 %v168
  %4071 = vmatprep.subr.mxu0 0.0
  %4072 = vmatpush1.msra.mxu0 0.0
  %4073 = vmatprep.subr.mxu0 0.0
  %4074 = vmatpush1.msra.mxu0 0.0
  %4075 = vmatprep.subr.mxu0 0.0
  %4076 = vmatpush1.msra.mxu0 0.0
  %4077 = vmatprep.subr.mxu0 0.0
  %4078 = vmatpush1.msra.mxu0 0.0
  %4079 = vmatprep.subr.mxu0 0.0
  %4080 = vmatpush1.msra.mxu0 0.0
  %4081 = vmatprep.subr.mxu0 0.0
  %4082 = vmatpush1.msra.mxu0 0.0
  %4083 = vmatprep.subr.mxu0 0.0
  %4084 = vmatpush1.msra.mxu0 0.0
  %4085 = vmatprep.subr.mxu0 0.0
  %4086 = vmatpush1.msra.mxu0 0.0
  %4087 = vmatprep.subr.mxu0 0.0
  %4088 = vmatpush1.msra.mxu0 0.0
  %4089 = vmatprep.subr.mxu0 0.0
  %4090 = vmatpush1.msra.mxu0 0.0
  %4091 = vmatprep.subr.mxu0 0.0
  %4092 = vmatpush1.msra.mxu0 0.0
  %4093 = vmatprep.subr.mxu0 0.0
  %4094 = vmatpush1.msra.mxu0 0.0
  %4095 = vmatprep.subr.mxu0 0.0
  %4096 = vmatpush1.msra.mxu0 0.0
  %4097 = vmatprep.subr.mxu0 0.0
  %4098 = vmatpush1.msra.mxu0 0.0
  %4099 = vmatprep.subr.mxu0 0.0
  %4100 = vmatpush1.msra.mxu0 0.0
  %4101 = vmatprep.subr.mxu0 0.0
  %4102 = vmatpush1.msra.mxu0 0.0
  %4103 = vmatprep.subr.mxu0 0.0
  %4104 = vmatpush1.msra.mxu0 0.0
  %4105 = vmatprep.subr.mxu0 0.0
  %4106 = vmatpush1.msra.mxu0 0.0
  %4107 = vmatprep.subr.mxu0 0.0
  %4108 = vmatpush1.msra.mxu0 0.0
  %4109 = vmatprep.subr.mxu0 0.0
  %4110 = vmatpush1.msra.mxu0 0.0
  %4111 = vmatprep.subr.mxu0 0.0
  %4112 = vmatpush1.msra.mxu0 0.0
  %4113 = vmatprep.subr.mxu0 0.0
  %4114 = vmatpush1.msra.mxu0 0.0
  %4115 = vmatprep.subr.mxu0 0.0
  %4116 = vmatpush1.msra.mxu0 0.0
  %4117 = vmatprep.subr.mxu0 0.0
  %4118 = vmatpush1.msra.mxu0 0.0
  %4119 = vmatprep.subr.mxu0 0.0
  %4120 = vmatpush1.msra.mxu0 0.0
  %4121 = vmatprep.subr.mxu0 0.0
  %4122 = vmatpush1.msra.mxu0 0.0
  %4123 = vmatprep.subr.mxu0 0.0
  %4124 = vmatpush1.msra.mxu0 0.0
  %4125 = vmatprep.subr.mxu0 0.0
  %4126 = vmatpush1.msra.mxu0 0.0
  %4127 = vmatprep.subr.mxu0 0.0
  %4128 = vmatpush1.msra.mxu0 0.0
  %4129 = vmatprep.subr.mxu0 0.0
  %4130 = vmatpush1.msra.mxu0 0.0
  %4131 = vmatprep.subr.mxu0 0.0
  %4132 = vmatpush1.msra.mxu0 0.0
  %4133 = vmatprep.mubr.f32.mxu0 0.0
  %4134 = vmatmul.mubr.f32.gmra.mrb[0].mxu0 %v4067
  %v4135 = vpop.f32.mrb[0].mxu0
  %v4136 = vadd.f32 0.0, %v4135
  %v4137 = vpop.f32.mrb[0].mxu0
  %4138 = vdwg.mxu0
  %v4140 = vrot.slane %v4136, 2
  %v4142 = vadd.f32 %v147, %v4140
  %v4143 = vadd.f32 %v152, %v4140
  %v4144 = vtanh.pop %v4142
  %v4145 = vtanh.pop %v4143
  %v4146 = vmul.f32 %v4144, 1.5707964
  %v4147 = vmul.f32 %v4145, 1.5707964
  %v4148 = vand.u32 2147483647, %v4146
  %vm4149 = vcmp.le.f32.partialorder %v4148, 0.7853982
  %vm4150 = vcmp.lt.s32.totalorder %v4146, 0
  %v4151 = vand.u32 %v4146, 2139095040
  %v4152 = vshrl.u32 %v4151, 23
  %v4153 = vsub.s32 %v4152, 127
  %v4154 = vand.u32 2147483647, %v4146
  %v4155 = vand.u32 %v4154, 8388607
  %v4156 = vor.u32 %v4155, 8388608
  %v4157 = vsub.s32 0, %v4156
  %v4158 = vadd.s32 %v4153, 1
  %vm4159 = vcmp.gt.s32.totalorder %v4158, 0
  %v4160 = vsel %vm4159, %v4158, 0
  %v4161 = vshrl.u32 %v4160, 5
  %v4162 = vand.u32 %v4160, 31
  %v4163 = vsub.s32 32, %v4162
  %v4164 = vshrl.u32 683565275, %v4163
  %v4165 = vshll.u32 683565275, %v4162
  %v4166 = vshrl.u32 2475754826, %v4163
  %v4167 = vor.u32 %v4165, %v4166
  %v4168 = vshll.u32 2475754826, %v4162
  %v4169 = vshrl.u32 2131351028, %v4163
  %v4170 = vor.u32 %v4168, %v4169
  %v4171 = vshll.u32 2131351028, %v4162
  %v4172 = vshrl.u32 2102212464, %v4163
  %v4173 = vor.u32 %v4171, %v4172
  %v4174 = vshll.u32 2102212464, %v4162
  %v4175 = vshrl.u32 920167782, %v4163
  %v4176 = vor.u32 %v4174, %v4175
  %v4177 = vshll.u32 920167782, %v4162
  %v4178 = vshrl.u32 1326507024, %v4163
  %v4179 = vor.u32 %v4177, %v4178
  %vm4180 = vcmp.lt.s32.totalorder %v4161, 1
  %vm4181 = vcmp.lt.s32.totalorder %v4161, 2
  %vm4182 = vcmp.lt.s32.totalorder %v4161, 3
  %vm4183 = vcmp.lt.s32.totalorder %v4161, 4
  %v4184 = vsel %vm4180, %v4164, %v4167
  %v4185 = vsel %vm4183, %v4173, 2102212464
  %v4186 = vsel %vm4182, %v4170, %v4185
  %v4187 = vsel %vm4181, %v4184, %v4186
  %v4188 = vsel %vm4180, %v4167, %v4170
  %v4189 = vsel %vm4183, %v4176, 920167782
  %v4190 = vsel %vm4182, %v4173, %v4189
  %v4191 = vsel %vm4181, %v4188, %v4190
  %v4192 = vsel %vm4180, %v4170, %v4173
  %v4193 = vsel %vm4183, %v4179, 1326507024
  %v4194 = vsel %vm4182, %v4176, %v4193
  %v4195 = vsel %vm4181, %v4192, %v4194
  %v4196 = vshll.u32 %v4156, 8
  %v4197 = vmul.u32.u64.compose %v4196, %v4195
  %v4198 = vextract.low.u32 %v4197
  %v4199 = vextract.high.u32 %v4197
  %v4200 = vmul.u32.u64.compose %v4196, %v4191
  %v4201 = vextract.low.u32 %v4200
  %v4202 = vextract.high.u32 %v4200
  %v4203 = vmul.u32 %v4196, %v4187
  %v4204 = vadd.s32 %v4199, %v4201
  %vm4205 = vc.u32 %v4199, %v4201
  %v4206 = vadd.s32 %v4202, 1
  %v4207 = vsel %vm4205, %v4206, %v4202
  %v4208 = vadd.s32 %v4203, %v4207
  %v4209 = vadd.s32 %v4208, 536870912
  %v4210 = vshrl.u32 %v4209, 30
  %v4211 = vshll.u32 %v4210, 30
  %v4212 = vsub.s32 %v4208, %v4211
  %vm4213 = vcmp.lt.s32.totalorder %v4212, 0
  %v4214 = vsub.s32 0, %v4212
  %v4215 = vsel %vm4213, %v4214, %v4212
  %v4216 = vclz %v4215
  %v4217 = vsub.s32 %v4216, 2
  %vm4218 = vcmp.gt.s32.totalorder 0, %v4217
  %v4219 = vsel %vm4218, 0, %v4217
  %v4220 = vsub.s32 32, %v4219
  %v4221 = vshll.u32 %v4212, %v4219
  %v4222 = vshrl.u32 %v4204, %v4220
  %v4223 = vor.u32 %v4221, %v4222
  %v4224 = vsub.s32 4294967266, %v4219
  %v4225 = vadd.s32 %v4224, 127
  %v4226 = vshll.u32 %v4225, 23
  %v4227 = vor.u32 4788187, %v4226
  %v4228 = vand.u32 2147483647, %v4227
  %v4230 = vcvt.s32.f32 %v4223
  %v4231 = vmul.f32 %v4230, %v4228
  %v4232 = vxor.u32 %v4231, 2147483648
  %v4233 = vsel %vm4150, %v4232, %v4231
  %v4234 = vsub.s32 4, %v4210
  %v4235 = vsel %vm4150, %v4234, %v4210
  %v4236 = vsel %vm4149, %v4146, %v4233
  %v4237 = vsel %vm4149, 0, %v4235
  %v4238 = vcosq.f32.pop %v4236
  %v4239 = vsinq.f32.pop %v4236
  %vm4240 = vweird.f32 %v4146
  %v4241 = vand.u32 %v4237, 3
  %vm4242 = vcmp.lt.s32.totalorder %v4241, 2
  %vm4243 = vcmp.eq.s32.totalorder %v4241, 0
  %v4244 = vxor.u32 %v4239, 2147483648
  %v4245 = vsel %vm4243, %v4238, %v4244
  %vm4246 = vcmp.eq.s32.totalorder %v4241, 2
  %v4247 = vxor.u32 %v4238, 2147483648
  %v4248 = vsel %vm4246, %v4247, %v4239
  %v4249 = vsel %vm4242, %v4245, %v4248
  %v4250 = vsel %vm4240, nan, %v4249
  %v4251 = vand.u32 2147483647, %v4147
  %vm4252 = vcmp.le.f32.partialorder %v4251, 0.7853982
  %vm4253 = vcmp.lt.s32.totalorder %v4147, 0
  %v4254 = vand.u32 %v4147, 2139095040
  %v4255 = vshrl.u32 %v4254, 23
  %v4256 = vsub.s32 %v4255, 127
  %v4257 = vand.u32 2147483647, %v4147
  %v4258 = vand.u32 %v4257, 8388607
  %v4259 = vor.u32 %v4258, 8388608
  %v4260 = vsub.s32 0, %v4259
  %v4261 = vadd.s32 %v4256, 1
  %vm4262 = vcmp.gt.s32.totalorder %v4261, 0
  %v4263 = vsel %vm4262, %v4261, 0
  %v4264 = vshrl.u32 %v4263, 5
  %v4265 = vand.u32 %v4263, 31
  %v4266 = vsub.s32 32, %v4265
  %v4267 = vshrl.u32 683565275, %v4266
  %v4268 = vshll.u32 683565275, %v4265
  %v4269 = vshrl.u32 2475754826, %v4266
  %v4270 = vor.u32 %v4268, %v4269
  %v4271 = vshll.u32 2475754826, %v4265
  %v4272 = vshrl.u32 2131351028, %v4266
  %v4273 = vor.u32 %v4271, %v4272
  %v4274 = vshll.u32 2131351028, %v4265
  %v4275 = vshrl.u32 2102212464, %v4266
  %v4276 = vor.u32 %v4274, %v4275
  %v4277 = vshll.u32 2102212464, %v4265
  %v4278 = vshrl.u32 920167782, %v4266
  %v4279 = vor.u32 %v4277, %v4278
  %v4280 = vshll.u32 920167782, %v4265
  %v4281 = vshrl.u32 1326507024, %v4266
  %v4282 = vor.u32 %v4280, %v4281
  %vm4283 = vcmp.lt.s32.totalorder %v4264, 1
  %vm4284 = vcmp.lt.s32.totalorder %v4264, 2
  %vm4285 = vcmp.lt.s32.totalorder %v4264, 3
  %vm4286 = vcmp.lt.s32.totalorder %v4264, 4
  %v4287 = vsel %vm4283, %v4267, %v4270
  %v4288 = vsel %vm4286, %v4276, 2102212464
  %v4289 = vsel %vm4285, %v4273, %v4288
  %v4290 = vsel %vm4284, %v4287, %v4289
  %v4291 = vsel %vm4283, %v4270, %v4273
  %v4292 = vsel %vm4286, %v4279, 920167782
  %v4293 = vsel %vm4285, %v4276, %v4292
  %v4294 = vsel %vm4284, %v4291, %v4293
  %v4295 = vsel %vm4283, %v4273, %v4276
  %v4296 = vsel %vm4286, %v4282, 1326507024
  %v4297 = vsel %vm4285, %v4279, %v4296
  %v4298 = vsel %vm4284, %v4295, %v4297
  %v4299 = vshll.u32 %v4259, 8
  %v4300 = vmul.u32.u64.compose %v4299, %v4298
  %v4301 = vextract.low.u32 %v4300
  %v4302 = vextract.high.u32 %v4300
  %v4303 = vmul.u32.u64.compose %v4299, %v4294
  %v4304 = vextract.low.u32 %v4303
  %v4305 = vextract.high.u32 %v4303
  %v4306 = vmul.u32 %v4299, %v4290
  %v4307 = vadd.s32 %v4302, %v4304
  %vm4308 = vc.u32 %v4302, %v4304
  %v4309 = vadd.s32 %v4305, 1
  %v4310 = vsel %vm4308, %v4309, %v4305
  %v4311 = vadd.s32 %v4306, %v4310
  %v4312 = vadd.s32 %v4311, 536870912
  %v4313 = vshrl.u32 %v4312, 30
  %v4314 = vshll.u32 %v4313, 30
  %v4315 = vsub.s32 %v4311, %v4314
  %vm4316 = vcmp.lt.s32.totalorder %v4315, 0
  %v4317 = vsub.s32 0, %v4315
  %v4318 = vsel %vm4316, %v4317, %v4315
  %v4319 = vclz %v4318
  %v4320 = vsub.s32 %v4319, 2
  %vm4321 = vcmp.gt.s32.totalorder 0, %v4320
  %v4322 = vsel %vm4321, 0, %v4320
  %v4323 = vsub.s32 32, %v4322
  %v4324 = vshll.u32 %v4315, %v4322
  %v4325 = vshrl.u32 %v4307, %v4323
  %v4326 = vor.u32 %v4324, %v4325
  %v4327 = vsub.s32 4294967266, %v4322
  %v4328 = vadd.s32 %v4327, 127
  %v4329 = vshll.u32 %v4328, 23
  %v4330 = vor.u32 4788187, %v4329
  %v4331 = vand.u32 2147483647, %v4330
  %v4333 = vcvt.s32.f32 %v4326
  %v4334 = vmul.f32 %v4333, %v4331
  %v4335 = vxor.u32 %v4334, 2147483648
  %v4336 = vsel %vm4253, %v4335, %v4334
  %v4337 = vsub.s32 4, %v4313
  %v4338 = vsel %vm4253, %v4337, %v4313
  %v4339 = vsel %vm4252, %v4147, %v4336
  %v4340 = vsel %vm4252, 0, %v4338
  %v4341 = vcosq.f32.pop %v4339
  %v4342 = vsinq.f32.pop %v4339
  %vm4343 = vweird.f32 %v4147
  %v4344 = vand.u32 %v4340, 3
  %vm4345 = vcmp.lt.s32.totalorder %v4344, 2
  %vm4346 = vcmp.eq.s32.totalorder %v4344, 0
  %v4347 = vxor.u32 %v4342, 2147483648
  %v4348 = vsel %vm4346, %v4341, %v4347
  %vm4349 = vcmp.eq.s32.totalorder %v4344, 2
  %v4350 = vxor.u32 %v4341, 2147483648
  %v4351 = vsel %vm4349, %v4350, %v4342
  %v4352 = vsel %vm4345, %v4348, %v4351
  %v4353 = vsel %vm4343, nan, %v4352
  %v4354 = vand.u32 2147483647, %v4146
  %vm4355 = vcmp.le.f32.partialorder %v4354, 0.7853982
  %vm4356 = vcmp.lt.s32.totalorder %v4146, 0
  %v4357 = vand.u32 %v4146, 2139095040
  %v4358 = vshrl.u32 %v4357, 23
  %v4359 = vsub.s32 %v4358, 127
  %v4360 = vand.u32 2147483647, %v4146
  %v4361 = vand.u32 %v4360, 8388607
  %v4362 = vor.u32 %v4361, 8388608
  %v4363 = vsub.s32 0, %v4362
  %v4364 = vadd.s32 %v4359, 1
  %vm4365 = vcmp.gt.s32.totalorder %v4364, 0
  %v4366 = vsel %vm4365, %v4364, 0
  %v4367 = vshrl.u32 %v4366, 5
  %v4368 = vand.u32 %v4366, 31
  %v4369 = vsub.s32 32, %v4368
  %v4370 = vshrl.u32 683565275, %v4369
  %v4371 = vshll.u32 683565275, %v4368
  %v4372 = vshrl.u32 2475754826, %v4369
  %v4373 = vor.u32 %v4371, %v4372
  %v4374 = vshll.u32 2475754826, %v4368
  %v4375 = vshrl.u32 2131351028, %v4369
  %v4376 = vor.u32 %v4374, %v4375
  %v4377 = vshll.u32 2131351028, %v4368
  %v4378 = vshrl.u32 2102212464, %v4369
  %v4379 = vor.u32 %v4377, %v4378
  %v4380 = vshll.u32 2102212464, %v4368
  %v4381 = vshrl.u32 920167782, %v4369
  %v4382 = vor.u32 %v4380, %v4381
  %v4383 = vshll.u32 920167782, %v4368
  %v4384 = vshrl.u32 1326507024, %v4369
  %v4385 = vor.u32 %v4383, %v4384
  %vm4386 = vcmp.lt.s32.totalorder %v4367, 1
  %vm4387 = vcmp.lt.s32.totalorder %v4367, 2
  %vm4388 = vcmp.lt.s32.totalorder %v4367, 3
  %vm4389 = vcmp.lt.s32.totalorder %v4367, 4
  %v4390 = vsel %vm4386, %v4370, %v4373
  %v4391 = vsel %vm4389, %v4379, 2102212464
  %v4392 = vsel %vm4388, %v4376, %v4391
  %v4393 = vsel %vm4387, %v4390, %v4392
  %v4394 = vsel %vm4386, %v4373, %v4376
  %v4395 = vsel %vm4389, %v4382, 920167782
  %v4396 = vsel %vm4388, %v4379, %v4395
  %v4397 = vsel %vm4387, %v4394, %v4396
  %v4398 = vsel %vm4386, %v4376, %v4379
  %v4399 = vsel %vm4389, %v4385, 1326507024
  %v4400 = vsel %vm4388, %v4382, %v4399
  %v4401 = vsel %vm4387, %v4398, %v4400
  %v4402 = vshll.u32 %v4362, 8
  %v4403 = vmul.u32.u64.compose %v4402, %v4401
  %v4404 = vextract.low.u32 %v4403
  %v4405 = vextract.high.u32 %v4403
  %v4406 = vmul.u32.u64.compose %v4402, %v4397
  %v4407 = vextract.low.u32 %v4406
  %v4408 = vextract.high.u32 %v4406
  %v4409 = vmul.u32 %v4402, %v4393
  %v4410 = vadd.s32 %v4405, %v4407
  %vm4411 = vc.u32 %v4405, %v4407
  %v4412 = vadd.s32 %v4408, 1
  %v4413 = vsel %vm4411, %v4412, %v4408
  %v4414 = vadd.s32 %v4409, %v4413
  %v4415 = vadd.s32 %v4414, 536870912
  %v4416 = vshrl.u32 %v4415, 30
  %v4417 = vshll.u32 %v4416, 30
  %v4418 = vsub.s32 %v4414, %v4417
  %vm4419 = vcmp.lt.s32.totalorder %v4418, 0
  %v4420 = vsub.s32 0, %v4418
  %v4421 = vsel %vm4419, %v4420, %v4418
  %v4422 = vclz %v4421
  %v4423 = vsub.s32 %v4422, 2
  %vm4424 = vcmp.gt.s32.totalorder 0, %v4423
  %v4425 = vsel %vm4424, 0, %v4423
  %v4426 = vsub.s32 32, %v4425
  %v4427 = vshll.u32 %v4418, %v4425
  %v4428 = vshrl.u32 %v4410, %v4426
  %v4429 = vor.u32 %v4427, %v4428
  %v4430 = vsub.s32 4294967266, %v4425
  %v4431 = vadd.s32 %v4430, 127
  %v4432 = vshll.u32 %v4431, 23
  %v4433 = vor.u32 4788187, %v4432
  %v4434 = vand.u32 2147483647, %v4433
  %v4436 = vcvt.s32.f32 %v4429
  %v4437 = vmul.f32 %v4436, %v4434
  %v4438 = vxor.u32 %v4437, 2147483648
  %v4439 = vsel %vm4356, %v4438, %v4437
  %v4440 = vsub.s32 4, %v4416
  %v4441 = vsel %vm4356, %v4440, %v4416
  %v4442 = vsel %vm4355, %v4146, %v4439
  %v4443 = vsel %vm4355, 0, %v4441
  %v4444 = vcosq.f32.pop %v4442
  %v4445 = vsinq.f32.pop %v4442
  %vm4446 = vweird.f32 %v4146
  %v4447 = vadd.s32 %v4443, 3
  %v4448 = vand.u32 %v4447, 3
  %vm4449 = vcmp.lt.s32.totalorder %v4448, 2
  %vm4450 = vcmp.eq.s32.totalorder %v4448, 0
  %v4451 = vxor.u32 %v4445, 2147483648
  %v4452 = vsel %vm4450, %v4444, %v4451
  %vm4453 = vcmp.eq.s32.totalorder %v4448, 2
  %v4454 = vxor.u32 %v4444, 2147483648
  %v4455 = vsel %vm4453, %v4454, %v4445
  %v4456 = vsel %vm4449, %v4452, %v4455
  %v4457 = vsel %vm4446, nan, %v4456
  %v4458 = vand.u32 2147483647, %v4147
  %vm4459 = vcmp.le.f32.partialorder %v4458, 0.7853982
  %vm4460 = vcmp.lt.s32.totalorder %v4147, 0
  %v4461 = vand.u32 %v4147, 2139095040
  %v4462 = vshrl.u32 %v4461, 23
  %v4463 = vsub.s32 %v4462, 127
  %v4464 = vand.u32 2147483647, %v4147
  %v4465 = vand.u32 %v4464, 8388607
  %v4466 = vor.u32 %v4465, 8388608
  %v4467 = vsub.s32 0, %v4466
  %v4468 = vadd.s32 %v4463, 1
  %vm4469 = vcmp.gt.s32.totalorder %v4468, 0
  %v4470 = vsel %vm4469, %v4468, 0
  %v4471 = vshrl.u32 %v4470, 5
  %v4472 = vand.u32 %v4470, 31
  %v4473 = vsub.s32 32, %v4472
  %v4474 = vshrl.u32 683565275, %v4473
  %v4475 = vshll.u32 683565275, %v4472
  %v4476 = vshrl.u32 2475754826, %v4473
  %v4477 = vor.u32 %v4475, %v4476
  %v4478 = vshll.u32 2475754826, %v4472
  %v4479 = vshrl.u32 2131351028, %v4473
  %v4480 = vor.u32 %v4478, %v4479
  %v4481 = vshll.u32 2131351028, %v4472
  %v4482 = vshrl.u32 2102212464, %v4473
  %v4483 = vor.u32 %v4481, %v4482
  %v4484 = vshll.u32 2102212464, %v4472
  %v4485 = vshrl.u32 920167782, %v4473
  %v4486 = vor.u32 %v4484, %v4485
  %v4487 = vshll.u32 920167782, %v4472
  %v4488 = vshrl.u32 1326507024, %v4473
  %v4489 = vor.u32 %v4487, %v4488
  %vm4490 = vcmp.lt.s32.totalorder %v4471, 1
  %vm4491 = vcmp.lt.s32.totalorder %v4471, 2
  %vm4492 = vcmp.lt.s32.totalorder %v4471, 3
  %vm4493 = vcmp.lt.s32.totalorder %v4471, 4
  %v4494 = vsel %vm4490, %v4474, %v4477
  %v4495 = vsel %vm4493, %v4483, 2102212464
  %v4496 = vsel %vm4492, %v4480, %v4495
  %v4497 = vsel %vm4491, %v4494, %v4496
  %v4498 = vsel %vm4490, %v4477, %v4480
  %v4499 = vsel %vm4493, %v4486, 920167782
  %v4500 = vsel %vm4492, %v4483, %v4499
  %v4501 = vsel %vm4491, %v4498, %v4500
  %v4502 = vsel %vm4490, %v4480, %v4483
  %v4503 = vsel %vm4493, %v4489, 1326507024
  %v4504 = vsel %vm4492, %v4486, %v4503
  %v4505 = vsel %vm4491, %v4502, %v4504
  %v4506 = vshll.u32 %v4466, 8
  %v4507 = vmul.u32.u64.compose %v4506, %v4505
  %v4508 = vextract.low.u32 %v4507
  %v4509 = vextract.high.u32 %v4507
  %v4510 = vmul.u32.u64.compose %v4506, %v4501
  %v4511 = vextract.low.u32 %v4510
  %v4512 = vextract.high.u32 %v4510
  %v4513 = vmul.u32 %v4506, %v4497
  %v4514 = vadd.s32 %v4509, %v4511
  %vm4515 = vc.u32 %v4509, %v4511
  %v4516 = vadd.s32 %v4512, 1
  %v4517 = vsel %vm4515, %v4516, %v4512
  %v4518 = vadd.s32 %v4513, %v4517
  %v4519 = vadd.s32 %v4518, 536870912
  %v4520 = vshrl.u32 %v4519, 30
  %v4521 = vshll.u32 %v4520, 30
  %v4522 = vsub.s32 %v4518, %v4521
  %vm4523 = vcmp.lt.s32.totalorder %v4522, 0
  %v4524 = vsub.s32 0, %v4522
  %v4525 = vsel %vm4523, %v4524, %v4522
  %v4526 = vclz %v4525
  %v4527 = vsub.s32 %v4526, 2
  %vm4528 = vcmp.gt.s32.totalorder 0, %v4527
  %v4529 = vsel %vm4528, 0, %v4527
  %v4530 = vsub.s32 32, %v4529
  %v4531 = vshll.u32 %v4522, %v4529
  %v4532 = vshrl.u32 %v4514, %v4530
  %v4533 = vor.u32 %v4531, %v4532
  %v4534 = vsub.s32 4294967266, %v4529
  %v4535 = vadd.s32 %v4534, 127
  %v4536 = vshll.u32 %v4535, 23
  %v4537 = vor.u32 4788187, %v4536
  %v4538 = vand.u32 2147483647, %v4537
  %v4540 = vcvt.s32.f32 %v4533
  %v4541 = vmul.f32 %v4540, %v4538
  %v4542 = vxor.u32 %v4541, 2147483648
  %v4543 = vsel %vm4460, %v4542, %v4541
  %v4544 = vsub.s32 4, %v4520
  %v4545 = vsel %vm4460, %v4544, %v4520
  %v4546 = vsel %vm4459, %v4147, %v4543
  %v4547 = vsel %vm4459, 0, %v4545
  %v4548 = vcosq.f32.pop %v4546
  %v4549 = vsinq.f32.pop %v4546
  %vm4550 = vweird.f32 %v4147
  %v4551 = vadd.s32 %v4547, 3
  %v4552 = vand.u32 %v4551, 3
  %vm4553 = vcmp.lt.s32.totalorder %v4552, 2
  %vm4554 = vcmp.eq.s32.totalorder %v4552, 0
  %v4555 = vxor.u32 %v4549, 2147483648
  %v4556 = vsel %vm4554, %v4548, %v4555
  %vm4557 = vcmp.eq.s32.totalorder %v4552, 2
  %v4558 = vxor.u32 %v4548, 2147483648
  %v4559 = vsel %vm4557, %v4558, %v4549
  %v4560 = vsel %vm4553, %v4556, %v4559
  %v4561 = vsel %vm4550, nan, %v4560
  %v4562 = vsub.f32 %v4457, %v4250
  %v4563 = vsub.f32 %v4561, %v4353
  %4565 = vset.pattern.permute.xlu0 0
  %4566 = vperm.xlu0 %4565, %v4562
  %v4567 = vpop.permute.xlu0 %4566
  %4570 = vset.pattern.permute.xlu0 0
  %4571 = vperm.xlu0 %4570, %v4563
  %v4572 = vpop.permute.xlu0 %4571
  %v4574 = vmul.f32 %v4567, %v159
  %v4575 = vmul.f32 %v4572, %v159
  %4577 = vset.pattern.permute.xlu0 0
  %4578 = vperm.xlu0 %4577, %v4250
  %v4579 = vpop.permute.xlu0 %4578
  %4582 = vset.pattern.permute.xlu0 0
  %4583 = vperm.xlu0 %4582, %v4353
  %v4584 = vpop.permute.xlu0 %4583
  %v4586 = vadd.f32 %v4579, %v4574
  %v4587 = vadd.f32 %v4584, %v4575
  %4588 = vset.pattern.permute.xlu0 1
  %4589 = vperm.xlu0 %4588, %v4562
  %v4590 = vpop.permute.xlu0 %4589
  %4592 = vset.pattern.permute.xlu0 1
  %4593 = vperm.xlu0 %4592, %v4563
  %v4594 = vpop.permute.xlu0 %4593
  %v4596 = vmul.f32 %v4590, %v162
  %v4597 = vmul.f32 %v4594, %v162
  %4598 = vset.pattern.permute.xlu0 1
  %4599 = vperm.xlu0 %4598, %v4250
  %v4600 = vpop.permute.xlu0 %4599
  %4602 = vset.pattern.permute.xlu0 1
  %4603 = vperm.xlu0 %4602, %v4353
  %v4604 = vpop.permute.xlu0 %4603
  %v4606 = vadd.f32 %v4600, %v4596
  %v4607 = vadd.f32 %v4604, %v4597
  %v4608 = vmul.f32 %v4586, %v4606
  %v4609 = vmul.f32 %v4587, %v4607
  %4610 = vset.pattern.permute.xlu0 2
  %4611 = vperm.xlu0 %4610, %v4562
  %v4612 = vpop.permute.xlu0 %4611
  %4614 = vset.pattern.permute.xlu0 2
  %4615 = vperm.xlu0 %4614, %v4563
  %v4616 = vpop.permute.xlu0 %4615
  %v4618 = vmul.f32 %v4612, %v165
  %v4619 = vmul.f32 %v4616, %v165
  %4620 = vset.pattern.permute.xlu0 2
  %4621 = vperm.xlu0 %4620, %v4250
  %v4622 = vpop.permute.xlu0 %4621
  %4624 = vset.pattern.permute.xlu0 2
  %4625 = vperm.xlu0 %4624, %v4353
  %v4626 = vpop.permute.xlu0 %4625
  %v4628 = vadd.f32 %v4622, %v4618
  %v4629 = vadd.f32 %v4626, %v4619
  %v4630 = vmul.f32 %v4608, %v4628
  %v4631 = vmul.f32 %v4609, %v4629
  %4632 = vset.pattern.permute.xlu0 3
  %4633 = vperm.xlu0 %4632, %v4562
  %v4634 = vpop.permute.xlu0 %4633
  %4636 = vset.pattern.permute.xlu0 3
  %4637 = vperm.xlu0 %4636, %v4563
  %v4638 = vpop.permute.xlu0 %4637
  %v4640 = vmul.f32 %v4634, %v167
  %v4641 = vmul.f32 %v4638, %v167
  %4642 = vset.pattern.permute.xlu0 3
  %4643 = vperm.xlu0 %4642, %v4250
  %v4644 = vpop.permute.xlu0 %4643
  %4646 = vset.pattern.permute.xlu0 3
  %4647 = vperm.xlu0 %4646, %v4353
  %v4648 = vpop.permute.xlu0 %4647
  %v4650 = vadd.f32 %v4644, %v4640
  %v4651 = vadd.f32 %v4648, %v4641
  %v4652 = vmul.f32 %v4630, %v4650
  %v4653 = vmul.f32 %v4631, %v4651
  %v4656 = vrot.slane %v4652, 6
  %v4657 = vrot.slane %v4653, 6
  %v4658 = vsel %vm61, %v4656, %v4657
  %v4659 = vsel %vm505, %v4658, 0
  %4661 = vmatprep.subr.mxu0 0.0
  %4662 = vmatpush1.msra.mxu0 %v169
  %4663 = vmatprep.subr.mxu0 0.0
  %4664 = vmatpush1.msra.mxu0 %v170
  %4665 = vmatprep.subr.mxu0 0.0
  %4666 = vmatpush1.msra.mxu0 0.0
  %4667 = vmatprep.subr.mxu0 0.0
  %4668 = vmatpush1.msra.mxu0 0.0
  %4669 = vmatprep.subr.mxu0 0.0
  %4670 = vmatpush1.msra.mxu0 0.0
  %4671 = vmatprep.subr.mxu0 0.0
  %4672 = vmatpush1.msra.mxu0 0.0
  %4673 = vmatprep.subr.mxu0 0.0
  %4674 = vmatpush1.msra.mxu0 0.0
  %4675 = vmatprep.subr.mxu0 0.0
  %4676 = vmatpush1.msra.mxu0 0.0
  %4677 = vmatprep.subr.mxu0 0.0
  %4678 = vmatpush1.msra.mxu0 0.0
  %4679 = vmatprep.subr.mxu0 0.0
  %4680 = vmatpush1.msra.mxu0 0.0
  %4681 = vmatprep.subr.mxu0 0.0
  %4682 = vmatpush1.msra.mxu0 0.0
  %4683 = vmatprep.subr.mxu0 0.0
  %4684 = vmatpush1.msra.mxu0 0.0
  %4685 = vmatprep.subr.mxu0 0.0
  %4686 = vmatpush1.msra.mxu0 0.0
  %4687 = vmatprep.subr.mxu0 0.0
  %4688 = vmatpush1.msra.mxu0 0.0
  %4689 = vmatprep.subr.mxu0 0.0
  %4690 = vmatpush1.msra.mxu0 0.0
  %4691 = vmatprep.subr.mxu0 0.0
  %4692 = vmatpush1.msra.mxu0 0.0
  %4693 = vmatprep.subr.mxu0 0.0
  %4694 = vmatpush1.msra.mxu0 0.0
  %4695 = vmatprep.subr.mxu0 0.0
  %4696 = vmatpush1.msra.mxu0 0.0
  %4697 = vmatprep.subr.mxu0 0.0
  %4698 = vmatpush1.msra.mxu0 0.0
  %4699 = vmatprep.subr.mxu0 0.0
  %4700 = vmatpush1.msra.mxu0 0.0
  %4701 = vmatprep.subr.mxu0 0.0
  %4702 = vmatpush1.msra.mxu0 0.0
  %4703 = vmatprep.subr.mxu0 0.0
  %4704 = vmatpush1.msra.mxu0 0.0
  %4705 = vmatprep.subr.mxu0 0.0
  %4706 = vmatpush1.msra.mxu0 0.0
  %4707 = vmatprep.subr.mxu0 0.0
  %4708 = vmatpush1.msra.mxu0 0.0
  %4709 = vmatprep.subr.mxu0 0.0
  %4710 = vmatpush1.msra.mxu0 0.0
  %4711 = vmatprep.subr.mxu0 0.0
  %4712 = vmatpush1.msra.mxu0 0.0
  %4713 = vmatprep.subr.mxu0 0.0
  %4714 = vmatpush1.msra.mxu0 0.0
  %4715 = vmatprep.subr.mxu0 0.0
  %4716 = vmatpush1.msra.mxu0 0.0
  %4717 = vmatprep.subr.mxu0 0.0
  %4718 = vmatpush1.msra.mxu0 0.0
  %4719 = vmatprep.subr.mxu0 0.0
  %4720 = vmatpush1.msra.mxu0 0.0
  %4721 = vmatprep.subr.mxu0 0.0
  %4722 = vmatpush1.msra.mxu0 0.0
  %4723 = vmatprep.subr.mxu0 0.0
  %4724 = vmatpush1.msra.mxu0 0.0
  %4725 = vmatprep.mubr.f32.mxu0 0.0
  %4726 = vmatmul.mubr.f32.gmra.mrb[0].mxu0 %v4659
  %v4727 = vpop.f32.mrb[0].mxu0
  %v4728 = vadd.f32 0.0, %v4727
  %v4729 = vpop.f32.mrb[0].mxu0
  %4730 = vdwg.mxu0
  %v4731 = vmul.f32 %v4728, %v4728
  %4733 = vrot.lane.b32.xlu0 %v4731, 112
  %v4734 = vpop.permute.xlu0 %4733
  %v4736 = vadd.f32 %v4731, %v4734
  %v4738 = vsel %vm505, %v4736, 0
  %4740 = vmatprep.subr.mxu0 0.0
  %4741 = vmatpush1.msra.mxu0 %v171
  %4742 = vmatprep.subr.mxu0 0.0
  %4743 = vmatpush1.msra.mxu0 %v172
  %4744 = vmatprep.subr.mxu0 0.0
  %4745 = vmatpush1.msra.mxu0 0.0
  %4746 = vmatprep.subr.mxu0 0.0
  %4747 = vmatpush1.msra.mxu0 0.0
  %4748 = vmatprep.subr.mxu0 0.0
  %4749 = vmatpush1.msra.mxu0 0.0
  %4750 = vmatprep.subr.mxu0 0.0
  %4751 = vmatpush1.msra.mxu0 0.0
  %4752 = vmatprep.subr.mxu0 0.0
  %4753 = vmatpush1.msra.mxu0 0.0
  %4754 = vmatprep.subr.mxu0 0.0
  %4755 = vmatpush1.msra.mxu0 0.0
  %4756 = vmatprep.subr.mxu0 0.0
  %4757 = vmatpush1.msra.mxu0 0.0
  %4758 = vmatprep.subr.mxu0 0.0
  %4759 = vmatpush1.msra.mxu0 0.0
  %4760 = vmatprep.subr.mxu0 0.0
  %4761 = vmatpush1.msra.mxu0 0.0
  %4762 = vmatprep.subr.mxu0 0.0
  %4763 = vmatpush1.msra.mxu0 0.0
  %4764 = vmatprep.subr.mxu0 0.0
  %4765 = vmatpush1.msra.mxu0 0.0
  %4766 = vmatprep.subr.mxu0 0.0
  %4767 = vmatpush1.msra.mxu0 0.0
  %4768 = vmatprep.subr.mxu0 0.0
  %4769 = vmatpush1.msra.mxu0 0.0
  %4770 = vmatprep.subr.mxu0 0.0
  %4771 = vmatpush1.msra.mxu0 0.0
  %4772 = vmatprep.subr.mxu0 0.0
  %4773 = vmatpush1.msra.mxu0 0.0
  %4774 = vmatprep.subr.mxu0 0.0
  %4775 = vmatpush1.msra.mxu0 0.0
  %4776 = vmatprep.subr.mxu0 0.0
  %4777 = vmatpush1.msra.mxu0 0.0
  %4778 = vmatprep.subr.mxu0 0.0
  %4779 = vmatpush1.msra.mxu0 0.0
  %4780 = vmatprep.subr.mxu0 0.0
  %4781 = vmatpush1.msra.mxu0 0.0
  %4782 = vmatprep.subr.mxu0 0.0
  %4783 = vmatpush1.msra.mxu0 0.0
  %4784 = vmatprep.subr.mxu0 0.0
  %4785 = vmatpush1.msra.mxu0 0.0
  %4786 = vmatprep.subr.mxu0 0.0
  %4787 = vmatpush1.msra.mxu0 0.0
  %4788 = vmatprep.subr.mxu0 0.0
  %4789 = vmatpush1.msra.mxu0 0.0
  %4790 = vmatprep.subr.mxu0 0.0
  %4791 = vmatpush1.msra.mxu0 0.0
  %4792 = vmatprep.subr.mxu0 0.0
  %4793 = vmatpush1.msra.mxu0 0.0
  %4794 = vmatprep.subr.mxu0 0.0
  %4795 = vmatpush1.msra.mxu0 0.0
  %4796 = vmatprep.subr.mxu0 0.0
  %4797 = vmatpush1.msra.mxu0 0.0
  %4798 = vmatprep.subr.mxu0 0.0
  %4799 = vmatpush1.msra.mxu0 0.0
  %4800 = vmatprep.subr.mxu0 0.0
  %4801 = vmatpush1.msra.mxu0 0.0
  %4802 = vmatprep.subr.mxu0 0.0
  %4803 = vmatpush1.msra.mxu0 0.0
  %4804 = vmatprep.mubr.f32.mxu0 0.0
  %4805 = vmatmul.mubr.f32.gmra.mrb[0].mxu0 %v4738
  %v4806 = vpop.f32.mrb[0].mxu0
  %v4807 = vadd.f32 0.0, %v4806
  %v4808 = vpop.f32.mrb[0].mxu0
  %4809 = vdwg.mxu0
  %v4810 = vxor.u32 %v4807, 2147483648
  %v4811 = vmul.f32 %v4810, 1.442695
  %v4812 = vpow.pop %v4811
  %v4813 = vadd.f32 %v4812, 1.0
  %v4814 = vrcp.pop %v4813
  %v4815 = vmul.f32 1.0, %v4814
  %v4816 = vtanh.pop %v4807
  %4818 = vset.pattern.permute.xlu0 1
  %4819 = vperm.xlu0 %4818, %v4815
  %v4820 = vpop.permute.xlu0 %4819
  %v4822 = vmul.f32 %v4820, %v4055
  %4824 = vrot.lane.b32.xlu0 %v4816, 125
  %v4825 = vpop.permute.xlu0 %4824
  %v4827 = vmul.f32 %v4815, %v4825
  %4829 = vset.pattern.permute.xlu0 0
  %4830 = vperm.xlu0 %4829, %v4827
  %v4831 = vpop.permute.xlu0 %4830
  %v4833 = vadd.f32 %v4822, %v4831
  %v4834 = vtanh.pop %v4833
  %4835 = vset.pattern.permute.xlu0 2
  %4836 = vperm.xlu0 %4835, %v4815
  %v4837 = vpop.permute.xlu0 %4836
  %v4839 = vmul.f32 %v4837, %v4834
  %s4840 = scalar_lea.vmem %s8, 48
  %4841 = vst.msk [vmem:[%s4840] sm:$0x1f] %vm688, %v4839
  %s4842 = scalar_lea.vmem %s9, 48
  %4843 = vst.msk [vmem:[%s4842] sm:$0x1f] %vm688, %v4833
  // Predicated region
  $region34: #{qlstm_forward_seq.1} parent=0 // pred_check
    _
  $region35: #{qlstm_forward_seq.1} parent=0 // pred_check_branch
    %4845 = sbr.rel (0) target = $region37
  $region36: #{qlstm_forward_seq.1} parent=0 // pred_region
    _
  $region37: #{qlstm_forward_seq.1} parent=0 // pred_fallthru
    _
  // Predicated region
  $region38: #{qlstm_forward_seq.1} parent=0 // pred_check
    _
  $region39: #{qlstm_forward_seq.1} parent=0 // pred_check_branch
    %4847 = sbr.rel (0) target = $region41
  $region40: #{qlstm_forward_seq.1} parent=0 // pred_region
    _
  $region41: #{qlstm_forward_seq.1} parent=0 // pred_fallthru
    _
  // Predicated region
  $region42: #{qlstm_forward_seq.1} parent=0 // pred_check
    _
  $region43: #{qlstm_forward_seq.1} parent=0 // pred_check_branch
    %4849 = sbr.rel (0) target = $region45
  $region44: #{qlstm_forward_seq.1} parent=0 // pred_region
    _
  $region45: #{qlstm_forward_seq.1} parent=0 // pred_fallthru
    _
  // Predicated region
  $region46: #{qlstm_forward_seq.1} parent=0 // pred_check
    _
  $region47: #{qlstm_forward_seq.1} parent=0 // pred_check_branch
    %4851 = sbr.rel (0) target = $region49
  $region48: #{qlstm_forward_seq.1} parent=0 // pred_region
    _
  $region49: #{qlstm_forward_seq.1} parent=0 // pred_fallthru
    _

</llo_original>
